<compile_context>
chip_gen: v6e
topology: v6e:2x2x1
jax: 0.10.0
libtpu: 0.0.40
codegen_flags: <defaults>
</compile_context>

<pallas_src>
import functools

import jax
import jax.numpy as jnp
from jax.experimental import pallas as pl
from jax.experimental.pallas import tpu as pltpu


def _round_up(x, m):
    return ((x + m - 1) // m) * m


def _cdiv(a, b):
    return -(-a // b)


def _lsr_stats_kernel(x_ref, y_ref,
                      xx_ref, xy_ref, sx_ref, yy_ref, sy_ref,
                      a_xx, a_xy, a_sx, a_yy, a_sy,
                      *, n_pixels, tile_n, nk_per, mask_tail):
    # grid = (B, splits, nk_per): batch & split are parallel, pixel tiles reduce.
    k = pl.program_id(2)

    @pl.when(k == 0)
    def _():
        a_xx[...] = jnp.zeros_like(a_xx)
        a_xy[...] = jnp.zeros_like(a_xy)
        a_sx[...] = jnp.zeros_like(a_sx)
        a_yy[...] = jnp.zeros_like(a_yy)
        a_sy[...] = jnp.zeros_like(a_sy)

    x = x_ref[0]   # (C, tile_n): channels on sublanes, pixels on lanes.
    y = y_ref[0]   # (1, tile_n)

    if mask_tail:
        # Only the boundary tile carries out-of-range lanes; zero them so they
        # contribute nothing to any accumulated statistic.
        s = pl.program_id(1)
        start = (s * nk_per + k) * tile_n
        idx = start + jax.lax.broadcasted_iota(jnp.int32, (1, tile_n), 1)
        m = (idx < n_pixels).astype(x.dtype)
        x = x * m
        y = y * m

    xf = x.astype(jnp.float32)
    yf = y.astype(jnp.float32)

    # X Xᵀ on the MXU (contraction over the pixel/lane axis), f32 accumulation.
    a_xx[...] += jax.lax.dot_general(
        x, x, (((1,), (1,)), ((), ())), preferred_element_type=jnp.float32)
    # Remaining sufficient statistics: cheap VPU multiplies + XLU lane reductions.
    a_xy[...] += jnp.sum(xf * yf, axis=1, keepdims=True)
    a_sx[...] += jnp.sum(xf, axis=1, keepdims=True)
    a_yy[...] += jnp.sum(yf * yf, axis=1, keepdims=True)
    a_sy[...] += jnp.sum(yf, axis=1, keepdims=True)

    @pl.when(k == pl.num_programs(2) - 1)
    def _():
        xx_ref[0, 0] = a_xx[...]
        xy_ref[0, 0] = a_xy[...]
        sx_ref[0, 0] = a_sx[...]
        yy_ref[0, 0] = a_yy[...]
        sy_ref[0, 0] = a_sy[...]


def lsr_stats(x, y, *, tile_n, splits, vmem_limit_bytes):
    """x: (B, C, N), y: (B, 1, N) -> per-(batch, split) partial statistics."""
    B, C, N = x.shape
    nk = _cdiv(N, tile_n)
    assert nk % splits == 0
    nk_per = nk // splits
    mask_tail = (nk * tile_n != N)

    kernel = functools.partial(
        _lsr_stats_kernel, n_pixels=N, tile_n=tile_n,
        nk_per=nk_per, mask_tail=mask_tail)

    def _out_spec(shape):
        return pl.BlockSpec((1, 1) + tuple(shape), lambda b, s, k: (b, s, 0, 0))

    out_shapes = (
        jax.ShapeDtypeStruct((B, splits, C, C), jnp.float32),   # X Xᵀ
        jax.ShapeDtypeStruct((B, splits, C, 1), jnp.float32),   # X y
        jax.ShapeDtypeStruct((B, splits, C, 1), jnp.float32),   # sum X
        jax.ShapeDtypeStruct((B, splits, 1, 1), jnp.float32),   # yᵀ y
        jax.ShapeDtypeStruct((B, splits, 1, 1), jnp.float32),   # sum y
    )

    itemsize = jnp.dtype(x.dtype).itemsize
    cost = pl.CostEstimate(
        flops=2 * B * (C + 1) * (C + 1) * N,
        transcendentals=0,
        bytes_accessed=B * (C + 1) * N * itemsize)

    return pl.pallas_call(
        kernel,
        out_shape=out_shapes,
        grid_spec=pltpu.PrefetchScalarGridSpec(
            num_scalar_prefetch=0,
            grid=(B, splits, nk_per),
            in_specs=[
                pl.BlockSpec((1, C, tile_n),
                             lambda b, s, k: (b, 0, s * nk_per + k)),
                pl.BlockSpec((1, 1, tile_n),
                             lambda b, s, k: (b, 0, s * nk_per + k)),
            ],
            out_specs=[
                _out_spec((C, C)), _out_spec((C, 1)), _out_spec((C, 1)),
                _out_spec((1, 1)), _out_spec((1, 1)),
            ],
            scratch_shapes=[
                pltpu.VMEM((C, C), jnp.float32),
                pltpu.VMEM((C, 1), jnp.float32),
                pltpu.VMEM((C, 1), jnp.float32),
                pltpu.VMEM((1, 1), jnp.float32),
                pltpu.VMEM((1, 1), jnp.float32),
            ],
        ),
        compiler_params=pltpu.CompilerParams(
            dimension_semantics=("parallel", "parallel", "arbitrary"),
            vmem_limit_bytes=vmem_limit_bytes),
        cost_estimate=cost,
    )(x, y)


def dsr_forward(outputs, pan, *, max_tile_n=None):
    """Equivalent of DsR().forward(outputs, pan): 1 - mean_b(1 - var(err)/var(pan))."""
    # TODO(synk): the PyTorch reference runs in float64; here stats accumulate in
    # float32 (sufficient-statistic variances can cancel for very large N or
    # non-centered data), and pinv of the normal equations squares X's condition
    # number vs torch.pinverse(X).
    B, C, H, W = outputs.shape
    N = H * W

    # Keep bf16 inputs in bf16 (halves HBM reads); everything else -> f32.
    kdt = jnp.bfloat16 if outputs.dtype == jnp.bfloat16 else jnp.float32
    x = outputs.reshape(B, C, N).astype(kdt)   # NCHW flattens in place: no transpose
    y = pan.reshape(B, 1, N).astype(kdt)
    itemsize = jnp.dtype(kdt).itemsize

    # ---- Pixel-tile sizing: as large as the per-generation VMEM allows
    # (double-buffer aware); tail handled by in-kernel masking, not HBM padding.
    try:
        vmem_cap = int(pltpu.get_tpu_info().vmem_capacity_bytes)
    except Exception:
        vmem_cap = 64 * 1024 * 1024          # conservative fallback (v7x per-core)
    in_budget = max(vmem_cap // 4, 4 << 20)              # for double-buffered inputs
    bytes_per_pixel = 2 * (C + 1) * itemsize              # 2x for double buffering
    tile_cap = max(128, (in_budget // bytes_per_pixel) // 128 * 128)
    if max_tile_n is not None:
        tile_cap = max(128, min(tile_cap, (max_tile_n // 128) * 128))

    nk = max(1, _cdiv(N, tile_cap))
    tile_n = _round_up(_cdiv(N, nk), 128)     # balanced, lane-aligned tiles
    nk = _cdiv(N, tile_n)

    # ---- Split the pixel reduction in two when B is odd so both v7x TensorCores
    # stay loaded (cost elsewhere: one extra tiny partial-stat sum in JAX).
    splits = 1
    if B % 2 == 1 and N > 128:
        nk_try = nk + (nk % 2)
        t_try = _round_up(_cdiv(N, nk_try), 128)
        nk_new = _cdiv(N, t_try)
        if nk_new % 2 == 0:
            tile_n, nk = t_try, nk_new
            splits = 2

    vmem_limit = int(min(vmem_cap, 2 * (C + 1) * tile_n * itemsize + (8 << 20)))

    xx, xy, sx, yy, sy = lsr_stats(
        x, y, tile_n=tile_n, splits=splits, vmem_limit_bytes=vmem_limit)

    G    = xx.sum(axis=1)                 # (B, C, C)   XᵀX
    b_xy = xy.sum(axis=1)[..., 0]         # (B, C)      Xᵀy
    s_x  = sx.sum(axis=1)[..., 0]         # (B, C)      sum_n X
    s_yy = yy.sum(axis=1)[:, 0, 0]        # (B,)        sum y²
    s_y  = sy.sum(axis=1)[:, 0, 0]        # (B,)        sum y

    # alpha = pinverse(X) @ y == pinv(XᵀX) @ (Xᵀy)  (tiny CxC solve, JAX glue).
    alpha = jnp.einsum('bij,bj->bi', jnp.linalg.pinv(G), b_xy)       # (B, C)

    n = jnp.float32(N)
    # Residual r = y - X @ alpha; variances from the accumulated statistics.
    sum_r = s_y - jnp.einsum('bc,bc->b', s_x, alpha)
    sum_rr = (s_yy
              - 2.0 * jnp.einsum('bc,bc->b', b_xy, alpha)
              + jnp.einsum('bi,bij,bj->b', alpha, G, alpha))
    # torch.var uses correction=1; the (n-1) factor cancels in the ratio but keep it exact.
    var_r = (sum_rr - sum_r * sum_r / n) / (n - 1.0)
    var_y = (s_yy - s_y * s_y / n) / (n - 1.0)   # NOTE: constant pan -> inf/nan, same as torch

    cd = 1.0 - var_r / var_y        # LSR output, (B,)
    return 1.0 - jnp.mean(cd)       # DsR output, scalar


if __name__ == "__main__":
    key = jax.random.PRNGKey(0)
    k1, k2 = jax.random.split(key)
    B, C, H, W = 2, 4, 16, 16
    outputs = jax.random.uniform(k1, (B, C, H, W), dtype=jnp.float32)
    pan = jax.random.uniform(k2, (B, 1, H, W), dtype=jnp.float32)

    result = jax.jit(dsr_forward)(outputs, pan)
    jax.block_until_ready(result)
    print("KERNEL_OK")
</pallas_src>

<mosaic_0001>
module attributes {stable_mosaic.version = 11 : i64} {
  func.func @_lsr_stats_kernel(%arg0: i32, %arg1: i32, %arg2: i32, %arg3: memref<1x4x256xf32, #tpu.memory_space<vmem>>, %arg4: memref<1x1x256xf32, #tpu.memory_space<vmem>>, %arg5: memref<1x1x4x4xf32, #tpu.memory_space<vmem>>, %arg6: memref<1x1x4x1xf32, #tpu.memory_space<vmem>>, %arg7: memref<1x1x4x1xf32, #tpu.memory_space<vmem>>, %arg8: memref<1x1x1x1xf32, #tpu.memory_space<vmem>>, %arg9: memref<1x1x1x1xf32, #tpu.memory_space<vmem>>, %arg10: memref<4x4xf32, #tpu.memory_space<vmem>>, %arg11: memref<4x1xf32, #tpu.memory_space<vmem>>, %arg12: memref<4x1xf32, #tpu.memory_space<vmem>>, %arg13: memref<1x1xf32, #tpu.memory_space<vmem>>, %arg14: memref<1x1xf32, #tpu.memory_space<vmem>>) attributes {dimension_semantics = [#tpu.dimension_semantics<parallel>, #tpu.dimension_semantics<parallel>, #tpu.dimension_semantics<arbitrary>], iteration_bounds = array<i64: 2, 1, 1>, scalar_prefetch = 0 : i64, scratch_operands = 5 : i64, tpu.core_type = #tpu.core_type<tc>, window_params = [{transform_indices = @transform_0, window_bounds = array<i64: 1, 4, 256>}, {transform_indices = @transform_1, window_bounds = array<i64: 1, 1, 256>}, {transform_indices = @transform_2, window_bounds = array<i64: 1, 1, 4, 4>}, {transform_indices = @transform_3, window_bounds = array<i64: 1, 1, 4, 1>}, {transform_indices = @transform_4, window_bounds = array<i64: 1, 1, 4, 1>}, {transform_indices = @transform_5, window_bounds = array<i64: 1, 1, 1, 1>}, {transform_indices = @transform_6, window_bounds = array<i64: 1, 1, 1, 1>}]} {
    %c0_i32 = arith.constant 0 : i32
    %0 = arith.cmpi eq, %arg2, %c0_i32 : i32
    %1 = arith.extui %0 : i1 to i32
    %c0_i32_0 = arith.constant 0 : i32
    %2 = arith.cmpi ne, %1, %c0_i32_0 : i32
    scf.if %2 {
      %cst_32 = arith.constant 0.000000e+00 : f32
      %37 = vector.broadcast %cst_32 : f32 to vector<4x4xf32>
      %c0_33 = arith.constant 0 : index
      %c0_34 = arith.constant 0 : index
      %38 = vector.load %arg10[%c0_33, %c0_34] : memref<4x4xf32, #tpu.memory_space<vmem>>, vector<4x4xf32>
      tpu.vector_store %arg10[%c0_33, %c0_34], %37 {strides = array<i32>} : memref<4x4xf32, #tpu.memory_space<vmem>>, vector<4x4xf32>,
      %cst_35 = arith.constant 0.000000e+00 : f32
      %39 = vector.broadcast %cst_35 : f32 to vector<4x1xf32>
      %c0_36 = arith.constant 0 : index
      %c0_37 = arith.constant 0 : index
      %40 = vector.load %arg11[%c0_36, %c0_37] : memref<4x1xf32, #tpu.memory_space<vmem>>, vector<4x1xf32>
      tpu.vector_store %arg11[%c0_36, %c0_37], %39 {strides = array<i32>} : memref<4x1xf32, #tpu.memory_space<vmem>>, vector<4x1xf32>,
      %cst_38 = arith.constant 0.000000e+00 : f32
      %41 = vector.broadcast %cst_38 : f32 to vector<4x1xf32>
      %c0_39 = arith.constant 0 : index
      %c0_40 = arith.constant 0 : index
      %42 = vector.load %arg12[%c0_39, %c0_40] : memref<4x1xf32, #tpu.memory_space<vmem>>, vector<4x1xf32>
      tpu.vector_store %arg12[%c0_39, %c0_40], %41 {strides = array<i32>} : memref<4x1xf32, #tpu.memory_space<vmem>>, vector<4x1xf32>,
      %cst_41 = arith.constant 0.000000e+00 : f32
      %43 = vector.broadcast %cst_41 : f32 to vector<1x1xf32>
      %c0_42 = arith.constant 0 : index
      %c0_43 = arith.constant 0 : index
      %44 = vector.load %arg13[%c0_42, %c0_43] : memref<1x1xf32, #tpu.memory_space<vmem>>, vector<1x1xf32>
      tpu.vector_store %arg13[%c0_42, %c0_43], %43 {strides = array<i32>} : memref<1x1xf32, #tpu.memory_space<vmem>>, vector<1x1xf32>,
      %cst_44 = arith.constant 0.000000e+00 : f32
      %45 = vector.broadcast %cst_44 : f32 to vector<1x1xf32>
      %c0_45 = arith.constant 0 : index
      %c0_46 = arith.constant 0 : index
      %46 = vector.load %arg14[%c0_45, %c0_46] : memref<1x1xf32, #tpu.memory_space<vmem>>, vector<1x1xf32>
      tpu.vector_store %arg14[%c0_45, %c0_46], %45 {strides = array<i32>} : memref<1x1xf32, #tpu.memory_space<vmem>>, vector<1x1xf32>,
    } else {
    }
    %c0 = arith.constant 0 : index
    %c0_1 = arith.constant 0 : index
    %c0_2 = arith.constant 0 : index
    %3 = vector.load %arg3[%c0, %c0_1, %c0_2] : memref<1x4x256xf32, #tpu.memory_space<vmem>>, vector<1x4x256xf32>
    %4 = vector.shape_cast %3 : vector<1x4x256xf32> to vector<4x256xf32>
    %c0_3 = arith.constant 0 : index
    %c0_4 = arith.constant 0 : index
    %c0_5 = arith.constant 0 : index
    %5 = vector.load %arg4[%c0_3, %c0_4, %c0_5] : memref<1x1x256xf32, #tpu.memory_space<vmem>>, vector<1x1x256xf32>
    %6 = vector.shape_cast %5 : vector<1x1x256xf32> to vector<1x256xf32>
    %c0_6 = arith.constant 0 : index
    %c0_7 = arith.constant 0 : index
    %7 = vector.load %arg10[%c0_6, %c0_7] : memref<4x4xf32, #tpu.memory_space<vmem>>, vector<4x4xf32>
    %cst = arith.constant dense<0.000000e+00> : vector<4x4xf32>
    %8 = tpu.matmul %4, %4, %cst {dimension_numbers = #tpu.dot_dimension_numbers<[1], [1], [0], [0], [0, 0, 1, 0], [], []>} : vector<4x256xf32>, vector<4x256xf32>, vector<4x4xf32> -> vector<4x4xf32>
    %9 = arith.addf %7, %8 : vector<4x4xf32>
    %c0_8 = arith.constant 0 : index
    %c0_9 = arith.constant 0 : index
    %10 = vector.load %arg10[%c0_8, %c0_9] : memref<4x4xf32, #tpu.memory_space<vmem>>, vector<4x4xf32>
    tpu.vector_store %arg10[%c0_8, %c0_9], %9 {strides = array<i32>} : memref<4x4xf32, #tpu.memory_space<vmem>>, vector<4x4xf32>,
    %c0_10 = arith.constant 0 : index
    %c0_11 = arith.constant 0 : index
    %11 = vector.load %arg11[%c0_10, %c0_11] : memref<4x1xf32, #tpu.memory_space<vmem>>, vector<4x1xf32>
    %12 = vector.broadcast %6 : vector<1x256xf32> to vector<4x256xf32>
    %13 = arith.mulf %4, %12 : vector<4x256xf32>
    %cst_12 = arith.constant dense<0.000000e+00> : vector<4xf32>
    %14 = vector.multi_reduction <add>, %13, %cst_12 [1] : vector<4x256xf32> to vector<4xf32>
    %15 = vector.shape_cast %14 : vector<4xf32> to vector<4x1xf32>
    %16 = arith.addf %11, %15 : vector<4x1xf32>
    %c0_13 = arith.constant 0 : index
    %c0_14 = arith.constant 0 : index
    %17 = vector.load %arg11[%c0_13, %c0_14] : memref<4x1xf32, #tpu.memory_space<vmem>>, vector<4x1xf32>
    tpu.vector_store %arg11[%c0_13, %c0_14], %16 {strides = array<i32>} : memref<4x1xf32, #tpu.memory_space<vmem>>, vector<4x1xf32>,
    %c0_15 = arith.constant 0 : index
    %c0_16 = arith.constant 0 : index
    %18 = vector.load %arg12[%c0_15, %c0_16] : memref<4x1xf32, #tpu.memory_space<vmem>>, vector<4x1xf32>
    %cst_17 = arith.constant dense<0.000000e+00> : vector<4xf32>
    %19 = vector.multi_reduction <add>, %4, %cst_17 [1] : vector<4x256xf32> to vector<4xf32>
    %20 = vector.shape_cast %19 : vector<4xf32> to vector<4x1xf32>
    %21 = arith.addf %18, %20 : vector<4x1xf32>
    %c0_18 = arith.constant 0 : index
    %c0_19 = arith.constant 0 : index
    %22 = vector.load %arg12[%c0_18, %c0_19] : memref<4x1xf32, #tpu.memory_space<vmem>>, vector<4x1xf32>
    tpu.vector_store %arg12[%c0_18, %c0_19], %21 {strides = array<i32>} : memref<4x1xf32, #tpu.memory_space<vmem>>, vector<4x1xf32>,
    %c0_20 = arith.constant 0 : index
    %c0_21 = arith.constant 0 : index
    %23 = vector.load %arg13[%c0_20, %c0_21] : memref<1x1xf32, #tpu.memory_space<vmem>>, vector<1x1xf32>
    %24 = arith.mulf %6, %6 : vector<1x256xf32>
    %cst_22 = arith.constant dense<0.000000e+00> : vector<1xf32>
    %25 = vector.multi_reduction <add>, %24, %cst_22 [1] : vector<1x256xf32> to vector<1xf32>
    %26 = vector.shape_cast %25 : vector<1xf32> to vector<1x1xf32>
    %27 = arith.addf %23, %26 : vector<1x1xf32>
    %c0_23 = arith.constant 0 : index
    %c0_24 = arith.constant 0 : index
    %28 = vector.load %arg13[%c0_23, %c0_24] : memref<1x1xf32, #tpu.memory_space<vmem>>, vector<1x1xf32>
    tpu.vector_store %arg13[%c0_23, %c0_24], %27 {strides = array<i32>} : memref<1x1xf32, #tpu.memory_space<vmem>>, vector<1x1xf32>,
    %c0_25 = arith.constant 0 : index
    %c0_26 = arith.constant 0 : index
    %29 = vector.load %arg14[%c0_25, %c0_26] : memref<1x1xf32, #tpu.memory_space<vmem>>, vector<1x1xf32>
    %cst_27 = arith.constant dense<0.000000e+00> : vector<1xf32>
    %30 = vector.multi_reduction <add>, %6, %cst_27 [1] : vector<1x256xf32> to vector<1xf32>
    %31 = vector.shape_cast %30 : vector<1xf32> to vector<1x1xf32>
    %32 = arith.addf %29, %31 : vector<1x1xf32>
    %c0_28 = arith.constant 0 : index
    %c0_29 = arith.constant 0 : index
    %33 = vector.load %arg14[%c0_28, %c0_29] : memref<1x1xf32, #tpu.memory_space<vmem>>, vector<1x1xf32>
    tpu.vector_store %arg14[%c0_28, %c0_29], %32 {strides = array<i32>} : memref<1x1xf32, #tpu.memory_space<vmem>>, vector<1x1xf32>,
    %c0_i32_30 = arith.constant 0 : i32
    %34 = arith.cmpi eq, %arg2, %c0_i32_30 : i32
    %35 = arith.extui %34 : i1 to i32
    %c0_i32_31 = arith.constant 0 : i32
    %36 = arith.cmpi ne, %35, %c0_i32_31 : i32
    scf.if %36 {
      %c0_32 = arith.constant 0 : index
      %c0_33 = arith.constant 0 : index
      %37 = vector.load %arg10[%c0_32, %c0_33] : memref<4x4xf32, #tpu.memory_space<vmem>>, vector<4x4xf32>
      %c0_34 = arith.constant 0 : index
      %c0_35 = arith.constant 0 : index
      %c0_36 = arith.constant 0 : index
      %c0_37 = arith.constant 0 : index
      %38 = vector.load %arg5[%c0_34, %c0_35, %c0_36, %c0_37] : memref<1x1x4x4xf32, #tpu.memory_space<vmem>>, vector<1x1x4x4xf32>
      %39 = vector.shape_cast %38 : vector<1x1x4x4xf32> to vector<4x4xf32>
      %40 = vector.shape_cast %37 : vector<4x4xf32> to vector<1x1x4x4xf32>
      tpu.vector_store %arg5[%c0_34, %c0_35, %c0_36, %c0_37], %40 {strides = array<i32>} : memref<1x1x4x4xf32, #tpu.memory_space<vmem>>, vector<1x1x4x4xf32>,
      %c0_38 = arith.constant 0 : index
      %c0_39 = arith.constant 0 : index
      %41 = vector.load %arg11[%c0_38, %c0_39] : memref<4x1xf32, #tpu.memory_space<vmem>>, vector<4x1xf32>
      %c0_40 = arith.constant 0 : index
      %c0_41 = arith.constant 0 : index
      %c0_42 = arith.constant 0 : index
      %c0_43 = arith.constant 0 : index
      %42 = vector.load %arg6[%c0_40, %c0_41, %c0_42, %c0_43] : memref<1x1x4x1xf32, #tpu.memory_space<vmem>>, vector<1x1x4x1xf32>
      %43 = vector.shape_cast %42 : vector<1x1x4x1xf32> to vector<4x1xf32>
      %44 = vector.shape_cast %41 : vector<4x1xf32> to vector<1x1x4x1xf32>
      tpu.vector_store %arg6[%c0_40, %c0_41, %c0_42, %c0_43], %44 {strides = array<i32>} : memref<1x1x4x1xf32, #tpu.memory_space<vmem>>, vector<1x1x4x1xf32>,
      %c0_44 = arith.constant 0 : index
      %c0_45 = arith.constant 0 : index
      %45 = vector.load %arg12[%c0_44, %c0_45] : memref<4x1xf32, #tpu.memory_space<vmem>>, vector<4x1xf32>
      %c0_46 = arith.constant 0 : index
      %c0_47 = arith.constant 0 : index
      %c0_48 = arith.constant 0 : index
      %c0_49 = arith.constant 0 : index
      %46 = vector.load %arg7[%c0_46, %c0_47, %c0_48, %c0_49] : memref<1x1x4x1xf32, #tpu.memory_space<vmem>>, vector<1x1x4x1xf32>
      %47 = vector.shape_cast %46 : vector<1x1x4x1xf32> to vector<4x1xf32>
      %48 = vector.shape_cast %45 : vector<4x1xf32> to vector<1x1x4x1xf32>
      tpu.vector_store %arg7[%c0_46, %c0_47, %c0_48, %c0_49], %48 {strides = array<i32>} : memref<1x1x4x1xf32, #tpu.memory_space<vmem>>, vector<1x1x4x1xf32>,
      %c0_50 = arith.constant 0 : index
      %c0_51 = arith.constant 0 : index
      %49 = vector.load %arg13[%c0_50, %c0_51] : memref<1x1xf32, #tpu.memory_space<vmem>>, vector<1x1xf32>
      %c0_52 = arith.constant 0 : index
      %c0_53 = arith.constant 0 : index
      %c0_54 = arith.constant 0 : index
      %c0_55 = arith.constant 0 : index
      %50 = vector.load %arg8[%c0_52, %c0_53, %c0_54, %c0_55] : memref<1x1x1x1xf32, #tpu.memory_space<vmem>>, vector<1x1x1x1xf32>
      %51 = vector.shape_cast %50 : vector<1x1x1x1xf32> to vector<1x1xf32>
      %52 = vector.shape_cast %49 : vector<1x1xf32> to vector<1x1x1x1xf32>
      tpu.vector_store %arg8[%c0_52, %c0_53, %c0_54, %c0_55], %52 {strides = array<i32>} : memref<1x1x1x1xf32, #tpu.memory_space<vmem>>, vector<1x1x1x1xf32>,
      %c0_56 = arith.constant 0 : index
      %c0_57 = arith.constant 0 : index
      %53 = vector.load %arg14[%c0_56, %c0_57] : memref<1x1xf32, #tpu.memory_space<vmem>>, vector<1x1xf32>
      %c0_58 = arith.constant 0 : index
      %c0_59 = arith.constant 0 : index
      %c0_60 = arith.constant 0 : index
      %c0_61 = arith.constant 0 : index
      %54 = vector.load %arg9[%c0_58, %c0_59, %c0_60, %c0_61] : memref<1x1x1x1xf32, #tpu.memory_space<vmem>>, vector<1x1x1x1xf32>
      %55 = vector.shape_cast %54 : vector<1x1x1x1xf32> to vector<1x1xf32>
      %56 = vector.shape_cast %53 : vector<1x1xf32> to vector<1x1x1x1xf32>
      tpu.vector_store %arg9[%c0_58, %c0_59, %c0_60, %c0_61], %56 {strides = array<i32>} : memref<1x1x1x1xf32, #tpu.memory_space<vmem>>, vector<1x1x1x1xf32>,
    } else {
    }
    return
  }
  func.func @transform_0(%arg0: i32, %arg1: i32, %arg2: i32) -> (i32, i32, i32) {
    %c1_i32 = arith.constant 1 : i32
    %0 = arith.muli %arg1, %c1_i32 : i32
    %1 = arith.addi %0, %arg2 : i32
    %c0_i32 = arith.constant 0 : i32
    %c0_i32_0 = arith.constant 0 : i32
    return %arg0, %c0_i32, %1 : i32, i32, i32
  }
  func.func @transform_1(%arg0: i32, %arg1: i32, %arg2: i32) -> (i32, i32, i32) {
    %c1_i32 = arith.constant 1 : i32
    %0 = arith.muli %arg1, %c1_i32 : i32
    %1 = arith.addi %0, %arg2 : i32
    %c0_i32 = arith.constant 0 : i32
    %c0_i32_0 = arith.constant 0 : i32
    return %arg0, %c0_i32, %1 : i32, i32, i32
  }
  func.func @transform_2(%arg0: i32, %arg1: i32, %arg2: i32) -> (i32, i32, i32, i32) {
    %c0_i32 = arith.constant 0 : i32
    %c0_i32_0 = arith.constant 0 : i32
    %c0_i32_1 = arith.constant 0 : i32
    return %arg0, %arg1, %c0_i32, %c0_i32_0 : i32, i32, i32, i32
  }
  func.func @transform_3(%arg0: i32, %arg1: i32, %arg2: i32) -> (i32, i32, i32, i32) {
    %c0_i32 = arith.constant 0 : i32
    %c0_i32_0 = arith.constant 0 : i32
    %c0_i32_1 = arith.constant 0 : i32
    return %arg0, %arg1, %c0_i32, %c0_i32_0 : i32, i32, i32, i32
  }
  func.func @transform_4(%arg0: i32, %arg1: i32, %arg2: i32) -> (i32, i32, i32, i32) {
    %c0_i32 = arith.constant 0 : i32
    %c0_i32_0 = arith.constant 0 : i32
    %c0_i32_1 = arith.constant 0 : i32
    return %arg0, %arg1, %c0_i32, %c0_i32_0 : i32, i32, i32, i32
  }
  func.func @transform_5(%arg0: i32, %arg1: i32, %arg2: i32) -> (i32, i32, i32, i32) {
    %c0_i32 = arith.constant 0 : i32
    %c0_i32_0 = arith.constant 0 : i32
    %c0_i32_1 = arith.constant 0 : i32
    return %arg0, %arg1, %c0_i32, %c0_i32_0 : i32, i32, i32, i32
  }
  func.func @transform_6(%arg0: i32, %arg1: i32, %arg2: i32) -> (i32, i32, i32, i32) {
    %c0_i32 = arith.constant 0 : i32
    %c0_i32_0 = arith.constant 0 : i32
    %c0_i32_1 = arith.constant 0 : i32
    return %arg0, %arg1, %c0_i32, %c0_i32_0 : i32, i32, i32, i32
  }
}

</mosaic_0001>

<llo_original>
// kernel: custom-call.58
$region0: #{custom-call.58}
  %s0 = inlined_call_operand.vmem [shape: f32[2,8,4], index: 0, kind: input, shape index: {}]
  %s1 = inlined_call_operand.vmem [shape: f32[2,8,4], index: 1, kind: output, shape index: {0}]
  %s2 = inlined_call_operand.vmem [shape: f32[2,4], index: 2, kind: output, shape index: {1}]
  %3 = xla_tuple %s1, %s2
  $region1: #{custom-call.58} parent=0
    #allocation0 [shape = 'u8[8192]{0}', space=vmem, size = 0x2000, scoped, tag = 'operand span for operand 0']
    #allocation1 [shape = 'u8[8192]{0}', space=vmem, size = 0x2000, scoped, tag = 'operand span for operand 1']
    #allocation2 [shape = 'u8[4096]{0}', space=vmem, size = 0x1000, scoped, tag = 'operand span for operand 2']
    #allocation3 [shape = 'u8[2048]{0}', space=vmem, size = 0x800, scoped, tag = 'packed  for operand 2']
    loop: start=0, step=1, limit=4
    $region2: #{custom-call.58} parent=1 // loop_pre_header
      _
    $region3: #{custom-call.58} parent=1 // loop_header
      %s5 = sphi 0, %s9
      %p6 = scmp.ge.s32.totalorder %s5, 4
      %s12 = sphi 0, %s31
      %s13 = sphi 0, %s27
      %s14 = sphi 0, %s23
      %s15 = sphi 0, %s12
      %s16 = sphi 0, %s13
      %s17 = sphi 0, %s14
      %s18 = sphi 0, %s15
      %s19 = sphi 0, %s16
      %s20 = sphi 0, %s17
      %s46 = sphi 0, %s48
      %s49 = sphi 0, %s46
      %s50 = sphi 0, %s49
      %s66 = sphi 0, %s50
    $region4: #{custom-call.58} parent=1 // loop_header_branch
      %8 = sbr.rel (%p6) target = $region8
    $region5: #{custom-call.58} parent=1 // loop_body
      %s10 = ssub.s32 %s5, 1
      %s11 = ssub.s32 %s5, 2
      %s21 = sadd.s32 1, %s14
      %p22 = scmp.ge.s32.totalorder %s21, 1
      %s23 = scalar_select %p22, 0, %s21
      %s24 = sadd.s32 1, %s13
      %s25 = scalar_select %p22, %s24, %s13
      %p26 = scmp.ge.s32.totalorder %s25, 1
      %s27 = scalar_select %p26, 0, %s25
      %s28 = sadd.s32 1, %s12
      %s29 = scalar_select %p26, %s28, %s12
      %p30 = scmp.ge.s32.totalorder %s29, 2
      %s31 = scalar_select %p30, 0, %s29
      %p32 = scmp.lt.s32.totalorder %s12, 0
      %s33 = ssub.s32 0, %s12
      %s34 = scalar_select %p32, %s33, %s12
      %s35 = sshrl.u32 %s34, 3
      %s36 = ssub.s32 0, %s35
      %s37 = scalar_select %p32, %s36, %s35
      %p38 = scmp.lt.s32.totalorder %s31, 0
      %s39 = ssub.s32 0, %s31
      %s40 = scalar_select %p38, %s39, %s31
      %s41 = sshrl.u32 %s40, 3
      %s42 = ssub.s32 0, %s41
      %s43 = scalar_select %p38, %s42, %s41
      %s44 = ssub.s32 %s37, %s43
      %p45 = scmp.eq.s32.totalorder %s44, 0
      %s47 = sadd.s32 %s46, 1
      %s48 = scalar_select %p45, %s46, %s47
      %p51 = pneg %p45
      %p52 = scmp.eq.s32.totalorder %s5, 1
      %p53 = por %p51, %p52
      %p54 = scmp.ne.s32.totalorder %s46, %s49
      %p55 = scmp.eq.s32.totalorder %s5, 0
      %p56 = por %p54, %p55
      %p57 = scmp.ne.s32.totalorder %s46, %s49
      %p58 = scmp.eq.s32.totalorder %s10, 1
      %p59 = por %p57, %p58
      %p60 = scmp.ne.s32.totalorder %s49, %s50
      %p61 = scmp.eq.s32.totalorder %s10, 0
      %p62 = por %p60, %p61
      %p63 = scmp.ne.s32.totalorder %s49, %s50
      %p64 = scmp.eq.s32.totalorder %s11, 1
      %p65 = por %p63, %p64
      %p67 = scmp.ne.s32.totalorder %s50, %s66
      %p68 = scmp.eq.s32.totalorder %s11, 0
      %p69 = por %p67, %p68
      %p70 = scmp.le.s32.totalorder 1, %s5
      %p71 = scmp.lt.s32.totalorder %s5, 3
      %p72 = pnand %p70, %p71
      %p73 = pneg %p72
      // Predicated region
      $region9: #{custom-call.58} parent=5 // pred_check
        _
      $region10: #{custom-call.58} parent=5 // pred_check_branch
        %75 = sbr.rel (%p72) target = $region12
      $region11: #{custom-call.58} parent=5 // pred_region
        %s76 = ssub.s32 %s5, 1
      $region12: #{custom-call.58} parent=5 // pred_fallthru
        _
      %p77 = scmp.lt.s32.totalorder %s5, 2
      // Predicated region
      $region13: #{custom-call.58} parent=5 // pred_check
        %p78 = pneg %p77
      $region14: #{custom-call.58} parent=5 // pred_check_branch
        %80 = sbr.rel (%p78) target = $region16
      $region15: #{custom-call.58} parent=5 // pred_region
        %s81 = sand.u32 %s5, 1
        %s82 = sand.u32 %s5, 1
        %s83 = smul.addr %s82, 8
        %s84 = scalar_lea.vmem [#allocation0], %s83
        %s85 = sadd.s32 %s14, %s13
        %s86 = sadd.s32 %s85, %s12
        %s87 = smul.addr %s86, 8
        %s88 = scalar_lea.vmem %s0, %s87
        // Predicated region
        $region17: #{custom-call.58} parent=15 // pred_check
          _
        $region18: #{custom-call.58} parent=15 // pred_check_branch
          %90 = sbr.rel (0) target = $region20
        $region19: #{custom-call.58} parent=15 // pred_region
          // Predicated region
          $region21: #{custom-call.58} parent=19 // pred_check
            _
          $region22: #{custom-call.58} parent=19 // pred_check_branch
            %92 = sbr.rel (0) target = $region24
          $region23: #{custom-call.58} parent=19 // pred_region
            // Predicated region
            $region36: #{custom-call.58} parent=23 // pred_check
              _
            $region37: #{custom-call.58} parent=23 // pred_check_branch
              %108 = sbr.rel (0) target = $region39
            $region38: #{custom-call.58} parent=23 // pred_region
              loop: start=0, step=1, limit=1
              $region40: #{custom-call.58} parent=38 // loop_pre_header
                _
              $region41: #{custom-call.58} parent=38 // loop_header
                %s110 = sphi 0, %s114
                %p111 = scmp.ge.s32.totalorder %s110, 1
                %s115 = sphi %s88, %s88
                %s116 = sphi %s84, %s84
              $region42: #{custom-call.58} parent=38 // loop_header_branch
                %113 = sbr.rel (%p111) target = $region46
              $region43: #{custom-call.58} parent=38 // loop_body
                %v117 = vld [vmem:[%s115] sm:$0xff]
                %118 = vst [vmem:[%s116] sm:$0xff] %v117
              $region44: #{custom-call.58} parent=38 // loop_footer
                %s114 = sadd.s32 1, %s110
              $region45: #{custom-call.58} parent=38 // loop_footer_branch
                %109 = sbr.rel target = $region41
              $region46: #{custom-call.58} parent=38 // loop_exit
                _
            $region39: #{custom-call.58} parent=23 // pred_fallthru
              _
            // Predicated region
            $region47: #{custom-call.58} parent=23 // pred_check
              _
            $region48: #{custom-call.58} parent=23 // pred_check_branch
              %120 = sbr.rel target = $region50
            $region49: #{custom-call.58} parent=23 // pred_region
              _
            $region50: #{custom-call.58} parent=23 // pred_fallthru
              _
          $region24: #{custom-call.58} parent=19 // pred_fallthru
            _
          // Predicated region
          $region25: #{custom-call.58} parent=19 // pred_check
            _
          $region26: #{custom-call.58} parent=19 // pred_check_branch
            %94 = sbr.rel target = $region28
          $region27: #{custom-call.58} parent=19 // pred_region
            %s96 = ssub.s32 256, 1
            loop: start=0, step=1, limit=1
            $region29: #{custom-call.58} parent=27 // loop_pre_header
              _
            $region30: #{custom-call.58} parent=27 // loop_header
              %s98 = sphi 0, %s102
              %p99 = scmp.ge.s32.totalorder %s98, 1
              %s103 = sphi %s88, %s88
              %s104 = sphi %s84, %s84
            $region31: #{custom-call.58} parent=27 // loop_header_branch
              %101 = sbr.rel (%p99) target = $region35
            $region32: #{custom-call.58} parent=27 // loop_body
              %v105 = vld [vmem:[%s103] sm:%s96]
              %106 = vst [vmem:[%s104] sm:%s96] %v105
            $region33: #{custom-call.58} parent=27 // loop_footer
              %s102 = sadd.s32 1, %s98
            $region34: #{custom-call.58} parent=27 // loop_footer_branch
              %97 = sbr.rel target = $region30
            $region35: #{custom-call.58} parent=27 // loop_exit
              _
          $region28: #{custom-call.58} parent=19 // pred_fallthru
            _
        $region20: #{custom-call.58} parent=15 // pred_fallthru
          _
        %121 = vnop
      $region16: #{custom-call.58} parent=5 // pred_fallthru
        _
      %p122 = scmp.le.s32.totalorder 1, %s5
      %p123 = scmp.lt.s32.totalorder %s5, 3
      %p124 = pnand %p122, %p123
      %p125 = pneg %p124
      // Predicated region
      $region51: #{custom-call.58} parent=5 // pred_check
        _
      $region52: #{custom-call.58} parent=5 // pred_check_branch
        %127 = sbr.rel (%p124) target = $region54
      $region53: #{custom-call.58} parent=5 // pred_region
        #allocation4 [shape = 'f32[8,128]{1,0}', space=vmem, size = 0x1000, scoped, tag = 'scratch for Householder reflectors']
        %s128 = ssub.s32 %s5, 1
        %s129 = sand.u32 %s10, 1
        %s130 = sand.u32 %s10, 1
        %s131 = smul.addr %s130, 8
        %s132 = scalar_lea.vmem [#allocation0], %s131
        %s133 = sand.u32 %s10, 1
        %s134 = sand.u32 %s10, 1
        %s135 = smul.addr %s134, 8
        %s136 = scalar_lea.vmem [#allocation0], %s135
        %s137 = sand.u32 %s10, 1
        %s138 = sand.u32 %s10, 1
        %s139 = smul.addr %s138, 8
        %s140 = scalar_lea.vmem [#allocation1], %s139
        %p141 = pneg %p62
        %p142 = pneg %p59
        %s143 = sand.u32 %s49, 1
        %s144 = sand.u32 %s49, 1
        %s145 = smul.addr %s144, 2
        %s146 = scalar_lea.vmem [#allocation3], %s145
        %p147 = scmp.lt.s32.totalorder %s15, 0
        %s148 = ssub.s32 0, %s15
        %s149 = scalar_select %p147, %s148, %s15
        %s150 = sshrl.u32 %s149, 3
        %s151 = ssub.s32 0, %s150
        %s152 = scalar_select %p147, %s151, %s150
        %s153 = sand.u32 %s15, 7
        %s154 = scalar_lea.vmem [#allocation2], %s153
        %v155 = vld [vmem:[%s132] sm:$0xff]
        %156 = vst [vmem:[%s140] sm:$0xff] %v155
        %157 = vst [vmem:[%s154] sm:$0x1] 0.0
        loop: start=0, step=1, limit=4
        $region55: #{custom-call.58} parent=53 // loop_pre_header
          _
        $region56: #{custom-call.58} parent=53 // loop_header
          %s159 = sphi 0, %s163
          %p160 = scmp.ge.s32.totalorder %s159, 4
        $region57: #{custom-call.58} parent=53 // loop_header_branch
          %162 = sbr.rel (%p160) target = $region61
        $region58: #{custom-call.58} parent=53 // loop_body
          %v164 = vld [vmem:[%s140] sm:$0xff]
          %v165 = vlaneseq
          %v166 = vshrl.u32 %v165, 7
          %v168 = vstv %s159
          %vm169 = vcmp.gt.s32.totalorder %v166, %v168
          %vm170 = vcmp.lt.s32.totalorder %v166, 8
          %vm171 = vmand %vm169, %vm170
          %v172 = vsel %vm171, %v164, 0.0
          %v173 = vmul.f32 %v172, %v172
          %v174 = vrot.slane %v173, 4
          %v175 = vadd.f32 %v173, %v174
          %v176 = vrot.slane %v175, 2
          %v177 = vadd.f32 %v175, %v176
          %v178 = vrot.slane %v177, 1
          %v179 = vadd.f32 %v177, %v178
          %v180 = vrsqrt.pop %v179
          %v181 = vmul.f32 %v179, %v180
          %vm182 = vcmp.eq.f32.partialorder %v179, inf
          %v183 = vsel %vm182, %v179, %v181
          %vm184 = vcmp.eq.f32.partialorder %v179, 0.0
          %v185 = vand.u32 %v179, 2147483648
          %v186 = vsel %vm184, %v185, %v183
          %vm187 = vcmp.eq.f32.partialorder %v179, 0.0
          %s188 = sshrl.u32 %s159, 3
          %s189 = sand.u32 %s159, 7
          %s190 = smul.addr %s188, 8
          %s191 = sadd.s32 %s189, %s190
          %s192 = scalar_lea.vmem %s140, %s191 [#allocation1]
          %v193 = vld [vmem:[%s192] ss:$0 sm:$0xff]
          %v194 = vand.u32 2147483647, %v193
          %v195 = vmax.f32 %v194, 0.0
          %v196 = vand.u32 2147483647, %v186
          %v197 = vmax.f32 %v195, %v196
          %v198 = vrcp.pop %v197
          %v199 = vmul.f32 %v194, %v198
          %v200 = vmul.f32 %v199, %v199
          %v201 = vrcp.pop %v197
          %v202 = vmul.f32 0.0, %v201
          %v203 = vmul.f32 %v202, %v202
          %v204 = vadd.f32 %v200, %v203
          %v205 = vrcp.pop %v197
          %v206 = vmul.f32 %v196, %v205
          %v207 = vmul.f32 %v206, %v206
          %v208 = vadd.f32 %v204, %v207
          %vm209 = vcmp.eq.f32.partialorder %v197, 0.0
          %v210 = vrsqrt.pop %v208
          %v211 = vmul.f32 %v208, %v210
          %vm212 = vcmp.eq.f32.partialorder %v208, inf
          %v213 = vsel %vm212, %v208, %v211
          %vm214 = vcmp.eq.f32.partialorder %v208, 0.0
          %v215 = vand.u32 %v208, 2147483648
          %v216 = vsel %vm214, %v215, %v213
          %v217 = vmul.f32 %v197, %v216
          %v218 = vsel %vm209, 0.0, %v217
          %vm219 = vcmp.lt.f32.partialorder %v193, 0.0
          %v220 = vxor.u32 %v218, 2147483648
          %v221 = vsel %vm219, %v218, %v220
          %v222 = vsub.f32 %v221, %v193
          %v223 = vrcp.pop %v221
          %v224 = vmul.f32 %v222, %v223
          %v225 = vsel %vm187, %v193, %v221
          %v226 = vsel %vm187, 0.0, %v224
          %v227 = vsub.f32 %v193, %v225
          %s228 = smov %s140
          %v229 = vlaneseq
          %v230 = vshrl.u32 %v229, 7
          %v231 = vmov %v230
          %v232 = vld [vmem:[%s228] sm:$0xff]
          %v234 = vstv %s159
          %vm235 = vcmp.gt.s32.totalorder %v231, %v234
          %vm236 = vcmp.lt.s32.totalorder %v231, 8
          %vm237 = vmand %vm235, %vm236
          %v238 = vsel %vm237, %v232, 0.0
          %v239 = vrcp.pop %v227
          %v240 = vmul.f32 %v238, %v239
          %v241 = vsel %vm187, 0.0, %v240
          %v242 = vstv %s159
          %v243 = vlaneseq
          %v244 = vand.u32 %v243, 127
          %vm245 = vcmp.eq.s32.totalorder %v244, %v242
          %v246 = vsel %vm245, %v241, 0.0
          %247 = vadd.xlane.f32.xlu0 %v246
          %v248 = vpop.xlane.xlu0 %247
          %249 = vst [vmem:[#allocation4] sm:$0xff] %v248
          %s250 = scalar_lea.vmem [#allocation4], %s159
          %251 = vst [vmem:[%s250] sm:$0x1] 1.0
          %v252 = vstv %s159
          %v253 = vlaneseq
          %v254 = vand.u32 %v253, 127
          %vm255 = vcmp.eq.s32.totalorder %v254, %v252
          %v256 = vsel %vm255, %v226, 0.0
          %257 = vadd.xlane.f32.xlu0 %v256
          %v258 = vpop.xlane.xlu0 %257
          %v259 = vstv %s159
          %v260 = vlaneseq
          %v261 = vand.u32 %v260, 127
          %vm262 = vcmp.eq.s32.totalorder %v261, %v259
          %v263 = vld [vmem:[%s154] ss:$0 sm:$0xff]
          %v264 = vsel %vm262, %v258, %v263
          %265 = vst [vmem:[%s154] sm:$0x1] %v264
          %s266 = smov %s140
          %s267 = smov [#allocation4]
          %v268 = vlaneseq
          %v269 = vshrl.u32 %v268, 7
          %v270 = vmov %v269
          %v272 = vld [vmem:[%s267] sm:$0xff]
          %v273 = vld [vmem:[%s266] sm:$0xff]
          %v274 = vmul.f32 %v272, %v273
          %vm275 = vcmp.lt.s32.totalorder %v270, 8
          %v276 = vsel %vm275, %v274, 0.0
          %v277 = vrot.slane %v276, 4
          %v278 = vadd.f32 %v276, %v277
          %v279 = vrot.slane %v278, 2
          %v280 = vadd.f32 %v278, %v279
          %v281 = vrot.slane %v280, 1
          %v282 = vadd.f32 %v280, %v281
          %s283 = smov %s266
          %s284 = smov %s267
          %v285 = vlaneseq
          %v286 = vshrl.u32 %v285, 7
          %v287 = vmov %v286
          %v288 = vmul.f32 %v282, %v258
          %v290 = vlaneseq
          %v291 = vand.u32 %v290, 127
          %v292 = vld [vmem:[%s284] sm:$0xff]
          %v293 = vmul.f32 %v292, %v288
          %v294 = vld [vmem:[%s283] sm:$0xff]
          %v295 = vstv %s159
          %vm296 = vcmp.gt.s32.totalorder %v291, %v295
          %v297 = vsub.f32 %v294, %v293
          %v298 = vsel %vm296, %v297, %v294
          %v299 = vstv %s159
          %v300 = vlaneseq
          %v301 = vand.u32 %v300, 127
          %vm302 = vcmp.eq.s32.totalorder %v301, %v299
          %v303 = vstv %s159
          %vm304 = vcmp.ge.s32.totalorder %v287, %v303
          %vm305 = vmand %vm302, %vm304
          %v306 = vsel %vm305, %v292, %v298
          %307 = vst [vmem:[%s283] sm:$0xff] %v306
          %s308 = scalar_lea.vmem %s283, %s159
          %v309 = vld [vmem:[%s308] ss:$0 sm:$0xff]
          %v310 = vstv %s159
          %v311 = vlaneseq
          %v312 = vand.u32 %v311, 127
          %vm313 = vcmp.eq.s32.totalorder %v312, %v310
          %v314 = vsel %vm313, %v225, %v309
          %315 = vst [vmem:[%s308] sm:$0x1] %v314
        $region59: #{custom-call.58} parent=53 // loop_footer
          %s163 = sadd.s32 1, %s159
        $region60: #{custom-call.58} parent=53 // loop_footer_branch
          %158 = sbr.rel target = $region56
        $region61: #{custom-call.58} parent=53 // loop_exit
          _
        %s317 = sshll.u32 1, 2
        %s318 = ssub.s32 %s317, 1
        %v320 = vld [vmem:[#allocation2] sm:%s318]
        %s321 = sshll.u32 1, 2
        %s322 = ssub.s32 %s321, 1
        %323 = vst [vmem:[%s146] sm:%s322] %v320
        %s324 = sand.u32 %s10, 1
        %s325 = sand.u32 %s10, 1
        %s326 = smul.addr %s325, 8
        %s327 = scalar_lea.vmem [#allocation1], %s326
        %s328 = sand.u32 %s49, 1
        %s329 = sand.u32 %s49, 1
        %s330 = smul.addr %s329, 2
        %s331 = scalar_lea.vmem [#allocation3], %s330
        %s332 = sadd.s32 %s17, %s16
        %s333 = sadd.s32 %s332, %s15
        %s334 = smul.addr %s333, 8
        %s335 = scalar_lea.vmem %s1, %s334
        // Predicated region
        $region62: #{custom-call.58} parent=53 // pred_check
          _
        $region63: #{custom-call.58} parent=53 // pred_check_branch
          %337 = sbr.rel (0) target = $region65
        $region64: #{custom-call.58} parent=53 // pred_region
          // Predicated region
          $region66: #{custom-call.58} parent=64 // pred_check
            _
          $region67: #{custom-call.58} parent=64 // pred_check_branch
            %339 = sbr.rel (0) target = $region69
          $region68: #{custom-call.58} parent=64 // pred_region
            // Predicated region
            $region81: #{custom-call.58} parent=68 // pred_check
              _
            $region82: #{custom-call.58} parent=68 // pred_check_branch
              %355 = sbr.rel (0) target = $region84
            $region83: #{custom-call.58} parent=68 // pred_region
              loop: start=0, step=1, limit=1
              $region85: #{custom-call.58} parent=83 // loop_pre_header
                _
              $region86: #{custom-call.58} parent=83 // loop_header
                %s357 = sphi 0, %s361
                %p358 = scmp.ge.s32.totalorder %s357, 1
                %s362 = sphi %s327, %s327
                %s363 = sphi %s335, %s335
              $region87: #{custom-call.58} parent=83 // loop_header_branch
                %360 = sbr.rel (%p358) target = $region91
              $region88: #{custom-call.58} parent=83 // loop_body
                %v364 = vld [vmem:[%s362] sm:$0xff]
                %365 = vst [vmem:[%s363] sm:$0xff] %v364
              $region89: #{custom-call.58} parent=83 // loop_footer
                %s361 = sadd.s32 1, %s357
              $region90: #{custom-call.58} parent=83 // loop_footer_branch
                %356 = sbr.rel target = $region86
              $region91: #{custom-call.58} parent=83 // loop_exit
                _
            $region84: #{custom-call.58} parent=68 // pred_fallthru
              _
            // Predicated region
            $region92: #{custom-call.58} parent=68 // pred_check
              _
            $region93: #{custom-call.58} parent=68 // pred_check_branch
              %367 = sbr.rel target = $region95
            $region94: #{custom-call.58} parent=68 // pred_region
              _
            $region95: #{custom-call.58} parent=68 // pred_fallthru
              _
          $region69: #{custom-call.58} parent=64 // pred_fallthru
            _
          // Predicated region
          $region70: #{custom-call.58} parent=64 // pred_check
            _
          $region71: #{custom-call.58} parent=64 // pred_check_branch
            %341 = sbr.rel target = $region73
          $region72: #{custom-call.58} parent=64 // pred_region
            %s343 = ssub.s32 256, 1
            loop: start=0, step=1, limit=1
            $region74: #{custom-call.58} parent=72 // loop_pre_header
              _
            $region75: #{custom-call.58} parent=72 // loop_header
              %s345 = sphi 0, %s349
              %p346 = scmp.ge.s32.totalorder %s345, 1
              %s350 = sphi %s327, %s327
              %s351 = sphi %s335, %s335
            $region76: #{custom-call.58} parent=72 // loop_header_branch
              %348 = sbr.rel (%p346) target = $region80
            $region77: #{custom-call.58} parent=72 // loop_body
              %v352 = vld [vmem:[%s350] sm:%s343]
              %353 = vst [vmem:[%s351] sm:%s343] %v352
            $region78: #{custom-call.58} parent=72 // loop_footer
              %s349 = sadd.s32 1, %s345
            $region79: #{custom-call.58} parent=72 // loop_footer_branch
              %344 = sbr.rel target = $region75
            $region80: #{custom-call.58} parent=72 // loop_exit
              _
          $region73: #{custom-call.58} parent=64 // pred_fallthru
            _
        $region65: #{custom-call.58} parent=53 // pred_fallthru
          _
        %368 = vnop
        // Predicated region
        $region96: #{custom-call.58} parent=53 // pred_check
          %p369 = pneg %p59
        $region97: #{custom-call.58} parent=53 // pred_check_branch
          %371 = sbr.rel (%p369) target = $region99
        $region98: #{custom-call.58} parent=53 // pred_region
          %p372 = scmp.lt.s32.totalorder %s15, 0
          %s373 = ssub.s32 0, %s15
          %s374 = scalar_select %p372, %s373, %s15
          %s375 = sshrl.u32 %s374, 3
          %s376 = ssub.s32 0, %s375
          %s377 = scalar_select %p372, %s376, %s375
          %s378 = smul.addr %s377, 2
          %s379 = scalar_lea.vmem %s2, %s378
          // Predicated region
          $region100: #{custom-call.58} parent=98 // pred_check
            _
          $region101: #{custom-call.58} parent=98 // pred_check_branch
            %381 = sbr.rel (0) target = $region103
          $region102: #{custom-call.58} parent=98 // pred_region
            // Predicated region
            $region104: #{custom-call.58} parent=102 // pred_check
              _
            $region105: #{custom-call.58} parent=102 // pred_check_branch
              %383 = sbr.rel target = $region107
            $region106: #{custom-call.58} parent=102 // pred_region
              // Predicated region
              $region119: #{custom-call.58} parent=106 // pred_check
                _
              $region120: #{custom-call.58} parent=106 // pred_check_branch
                %399 = sbr.rel (0) target = $region122
              $region121: #{custom-call.58} parent=106 // pred_region
                %s401 = ssub.s32 4, 1
                loop: start=0, step=1, limit=1
                $region123: #{custom-call.58} parent=121 // loop_pre_header
                  _
                $region124: #{custom-call.58} parent=121 // loop_header
                  %s403 = sphi 0, %s407
                  %p404 = scmp.ge.s32.totalorder %s403, 1
                  %s408 = sphi %s331, %s331
                  %s409 = sphi %s379, %s379
                $region125: #{custom-call.58} parent=121 // loop_header_branch
                  %406 = sbr.rel (%p404) target = $region129
                $region126: #{custom-call.58} parent=121 // loop_body
                  %v410 = vld [vmem:[%s408] sm:%s401]
                  %411 = vst [vmem:[%s409] sm:%s401] %v410
                $region127: #{custom-call.58} parent=121 // loop_footer
                  %s407 = sadd.s32 1, %s403
                $region128: #{custom-call.58} parent=121 // loop_footer_branch
                  %402 = sbr.rel target = $region124
                $region129: #{custom-call.58} parent=121 // loop_exit
                  _
              $region122: #{custom-call.58} parent=106 // pred_fallthru
                _
            $region107: #{custom-call.58} parent=102 // pred_fallthru
              _
            // Predicated region
            $region108: #{custom-call.58} parent=102 // pred_check
              _
            $region109: #{custom-call.58} parent=102 // pred_check_branch
              %385 = sbr.rel (0) target = $region111
            $region110: #{custom-call.58} parent=102 // pred_region
              %s387 = ssub.s32 4, 1
              loop: start=0, step=1, limit=1
              $region112: #{custom-call.58} parent=110 // loop_pre_header
                _
              $region113: #{custom-call.58} parent=110 // loop_header
                %s389 = sphi 0, %s393
                %p390 = scmp.ge.s32.totalorder %s389, 1
                %s394 = sphi %s331, %s331
                %s395 = sphi %s379, %s379
              $region114: #{custom-call.58} parent=110 // loop_header_branch
                %392 = sbr.rel (%p390) target = $region118
              $region115: #{custom-call.58} parent=110 // loop_body
                %v396 = vld [vmem:[%s394] sm:%s387]
                %397 = vst [vmem:[%s395] sm:%s387] %v396
              $region116: #{custom-call.58} parent=110 // loop_footer
                %s393 = sadd.s32 1, %s389
              $region117: #{custom-call.58} parent=110 // loop_footer_branch
                %388 = sbr.rel target = $region113
              $region118: #{custom-call.58} parent=110 // loop_exit
                _
            $region111: #{custom-call.58} parent=102 // pred_fallthru
              _
          $region103: #{custom-call.58} parent=98 // pred_fallthru
            _
          %412 = vnop
        $region99: #{custom-call.58} parent=53 // pred_fallthru
          _
      $region54: #{custom-call.58} parent=5 // pred_fallthru
        _
      %p413 = scmp.le.s32.totalorder 2, %s5
      // Predicated region
      $region130: #{custom-call.58} parent=5 // pred_check
        %p414 = pneg %p413
      $region131: #{custom-call.58} parent=5 // pred_check_branch
        %416 = sbr.rel (%p414) target = $region133
      $region132: #{custom-call.58} parent=5 // pred_region
        %s417 = ssub.s32 %s5, 2
        %s418 = sand.u32 %s11, 1
        %s419 = sand.u32 %s11, 1
        %s420 = smul.addr %s419, 8
        %s421 = scalar_lea.vmem [#allocation1], %s420
        // Predicated region
        $region134: #{custom-call.58} parent=132 // pred_check
          %p422 = pneg %p65
        $region135: #{custom-call.58} parent=132 // pred_check_branch
          %424 = sbr.rel (%p422) target = $region137
        $region136: #{custom-call.58} parent=132 // pred_region
          %s425 = sand.u32 %s50, 1
          %s426 = sand.u32 %s50, 1
          %s427 = smul.addr %s426, 2
          %s428 = scalar_lea.vmem [#allocation3], %s427
        $region137: #{custom-call.58} parent=132 // pred_fallthru
          _
      $region133: #{custom-call.58} parent=5 // pred_fallthru
        _
    $region6: #{custom-call.58} parent=1 // loop_footer
      %s9 = sadd.s32 1, %s5
    $region7: #{custom-call.58} parent=1 // loop_footer_branch
      %4 = sbr.rel target = $region3
    $region8: #{custom-call.58} parent=1 // loop_exit
      _

// kernel: custom-call.59
$region0: #{custom-call.59}
  %s0 = inlined_call_operand.vmem [shape: f32[2,4,4], index: 0, kind: input, shape index: {}]
  %s1 = inlined_call_operand.vmem [shape: f32[2,4,4], index: 1, kind: output, shape index: {}]
  $region1: #{custom-call.59} parent=0
    #allocation0 [shape = 'u8[4096]{0}', space=vmem, size = 0x1000, scoped, tag = 'operand span for operand 0']
    #allocation1 [shape = 'u8[4096]{0}', space=vmem, size = 0x1000, scoped, tag = 'packed  for operand 0']
    #allocation2 [shape = 'u8[4096]{0}', space=vmem, size = 0x1000, scoped, tag = 'operand span for operand 1']
    #allocation3 [shape = 'u8[4096]{0}', space=vmem, size = 0x1000, scoped, tag = 'packed  for operand 1']
    loop: start=0, step=1, limit=4
    $region2: #{custom-call.59} parent=1 // loop_pre_header
      _
    $region3: #{custom-call.59} parent=1 // loop_header
      %s3 = sphi 0, %s7
      %p4 = scmp.ge.s32.totalorder %s3, 4
    $region4: #{custom-call.59} parent=1 // loop_header_branch
      %6 = sbr.rel (%p4) target = $region8
    $region5: #{custom-call.59} parent=1 // loop_body
      %s8 = ssub.s32 %s3, 1
      %s9 = ssub.s32 %s3, 2
      %s10 = sadd.s32 %s3, 1
      %p11 = scmp.le.s32.totalorder 1, %s3
      %p12 = scmp.lt.s32.totalorder %s3, 3
      %p13 = pnand %p11, %p12
      %p14 = pneg %p13
      // Predicated region
      $region9: #{custom-call.59} parent=5 // pred_check
        _
      $region10: #{custom-call.59} parent=5 // pred_check_branch
        %16 = sbr.rel (%p13) target = $region12
      $region11: #{custom-call.59} parent=5 // pred_region
        %s17 = ssub.s32 %s3, 1
      $region12: #{custom-call.59} parent=5 // pred_fallthru
        _
      %p18 = scmp.lt.s32.totalorder %s3, 2
      // Predicated region
      $region13: #{custom-call.59} parent=5 // pred_check
        %p19 = pneg %p18
      $region14: #{custom-call.59} parent=5 // pred_check_branch
        %21 = sbr.rel (%p19) target = $region16
      $region15: #{custom-call.59} parent=5 // pred_region
        %s22 = sand.u32 %s3, 1
        %s23 = sand.u32 %s3, 1
        %s24 = smul.addr %s23, 4
        %s25 = scalar_lea.vmem [#allocation1], %s24
        %s26 = smul.addr %s3, 4
        %s27 = scalar_lea.vmem %s0, %s26
        // Predicated region
        $region17: #{custom-call.59} parent=15 // pred_check
          _
        $region18: #{custom-call.59} parent=15 // pred_check_branch
          %29 = sbr.rel (0) target = $region20
        $region19: #{custom-call.59} parent=15 // pred_region
          // Predicated region
          $region21: #{custom-call.59} parent=19 // pred_check
            _
          $region22: #{custom-call.59} parent=19 // pred_check_branch
            %31 = sbr.rel target = $region24
          $region23: #{custom-call.59} parent=19 // pred_region
            // Predicated region
            $region36: #{custom-call.59} parent=23 // pred_check
              _
            $region37: #{custom-call.59} parent=23 // pred_check_branch
              %47 = sbr.rel (0) target = $region39
            $region38: #{custom-call.59} parent=23 // pred_region
              %s49 = ssub.s32 16, 1
              loop: start=0, step=1, limit=1
              $region40: #{custom-call.59} parent=38 // loop_pre_header
                _
              $region41: #{custom-call.59} parent=38 // loop_header
                %s51 = sphi 0, %s55
                %p52 = scmp.ge.s32.totalorder %s51, 1
                %s56 = sphi %s27, %s27
                %s57 = sphi %s25, %s25
              $region42: #{custom-call.59} parent=38 // loop_header_branch
                %54 = sbr.rel (%p52) target = $region46
              $region43: #{custom-call.59} parent=38 // loop_body
                %v58 = vld [vmem:[%s56] sm:%s49]
                %59 = vst [vmem:[%s57] sm:%s49] %v58
              $region44: #{custom-call.59} parent=38 // loop_footer
                %s55 = sadd.s32 1, %s51
              $region45: #{custom-call.59} parent=38 // loop_footer_branch
                %50 = sbr.rel target = $region41
              $region46: #{custom-call.59} parent=38 // loop_exit
                _
            $region39: #{custom-call.59} parent=23 // pred_fallthru
              _
          $region24: #{custom-call.59} parent=19 // pred_fallthru
            _
          // Predicated region
          $region25: #{custom-call.59} parent=19 // pred_check
            _
          $region26: #{custom-call.59} parent=19 // pred_check_branch
            %33 = sbr.rel (0) target = $region28
          $region27: #{custom-call.59} parent=19 // pred_region
            %s35 = ssub.s32 16, 1
            loop: start=0, step=1, limit=1
            $region29: #{custom-call.59} parent=27 // loop_pre_header
              _
            $region30: #{custom-call.59} parent=27 // loop_header
              %s37 = sphi 0, %s41
              %p38 = scmp.ge.s32.totalorder %s37, 1
              %s42 = sphi %s27, %s27
              %s43 = sphi %s25, %s25
            $region31: #{custom-call.59} parent=27 // loop_header_branch
              %40 = sbr.rel (%p38) target = $region35
            $region32: #{custom-call.59} parent=27 // loop_body
              %v44 = vld [vmem:[%s42] sm:%s35]
              %45 = vst [vmem:[%s43] sm:%s35] %v44
            $region33: #{custom-call.59} parent=27 // loop_footer
              %s41 = sadd.s32 1, %s37
            $region34: #{custom-call.59} parent=27 // loop_footer_branch
              %36 = sbr.rel target = $region30
            $region35: #{custom-call.59} parent=27 // loop_exit
              _
          $region28: #{custom-call.59} parent=19 // pred_fallthru
            _
        $region20: #{custom-call.59} parent=15 // pred_fallthru
          _
        %60 = vnop
      $region16: #{custom-call.59} parent=5 // pred_fallthru
        _
      %p61 = scmp.le.s32.totalorder 1, %s3
      %p62 = scmp.lt.s32.totalorder %s3, 3
      %p63 = pnand %p61, %p62
      %p64 = pneg %p63
      // Predicated region
      $region47: #{custom-call.59} parent=5 // pred_check
        _
      $region48: #{custom-call.59} parent=5 // pred_check_branch
        %66 = sbr.rel (%p63) target = $region50
      $region49: #{custom-call.59} parent=5 // pred_region
        %s67 = ssub.s32 %s3, 1
        %s68 = sand.u32 %s8, 1
        %s69 = sand.u32 %s8, 1
        %s70 = smul.addr %s69, 4
        %s71 = scalar_lea.vmem [#allocation1], %s70
        %s72 = sand.u32 %s8, 1
        %s73 = sand.u32 %s8, 1
        %s74 = smul.addr %s73, 4
        %s75 = scalar_lea.vmem [#allocation1], %s74
        %s76 = sand.u32 %s8, 1
        %s77 = sand.u32 %s8, 1
        %s78 = smul.addr %s77, 4
        %s79 = scalar_lea.vmem [#allocation3], %s78
        %s81 = sshll.u32 1, 4
        %s82 = ssub.s32 %s81, 1
        %v83 = vld [vmem:[%s75] sm:%s82]
        %84 = vst [vmem:[#allocation0] sm:%s82] %v83
        %v85 = vlaneseq
        %v86 = vand.u32 %v85, 127
        %v87 = vlaneseq
        %v88 = vshrl.u32 %v87, 7
        %vm90 = vcmp.eq.s32.totalorder %v86, %v88
        %v91 = vld [vmem:[#allocation0] sm:$0xff]
        %v92 = vlaneseq
        %v93 = vand.u32 %v92, 127
        %vm94 = vcmp.eq.s32.totalorder %v93, 0
        %v95 = vsel %vm94, %v91, 1.0
        %v96 = vsel %vm90, %v95, 0.0
        %s97 = scalar_lea.vmem [#allocation0], 1
        %v98 = vld [vmem:[%s97] ss:$0 sm:$0xff]
        %vm99 = vcmask 31744
        %v100 = vsel %vm99, %v98, 0.0
        %v101 = vlaneseq
        %v102 = vand.u32 %v101, 127
        %vm103 = vcmp.eq.s32.totalorder %v102, 1
        %v104 = vmul.f32 %v100, %v96
        %105 = vadd.xlane.f32.xlu0 %v104
        %v106 = vpop.xlane.xlu0 %105
        %v107 = vsel %vm103, %v106, %v96
        %s108 = scalar_lea.vmem [#allocation0], 2
        %v109 = vld [vmem:[%s108] ss:$0 sm:$0xff]
        %vm110 = vcmask 31744
        %v111 = vsel %vm110, %v109, 0.0
        %v112 = vlaneseq
        %v113 = vand.u32 %v112, 127
        %vm114 = vcmp.eq.s32.totalorder %v113, 2
        %v115 = vmul.f32 %v111, %v107
        %116 = vadd.xlane.f32.xlu0 %v115
        %v117 = vpop.xlane.xlu0 %116
        %v118 = vsel %vm114, %v117, %v107
        %s119 = scalar_lea.vmem [#allocation0], 3
        %v120 = vld [vmem:[%s119] ss:$0 sm:$0xff]
        %vm121 = vcmask 31744
        %v122 = vsel %vm121, %v120, 0.0
        %v123 = vlaneseq
        %v124 = vand.u32 %v123, 127
        %vm125 = vcmp.eq.s32.totalorder %v124, 3
        %v126 = vmul.f32 %v122, %v118
        %127 = vadd.xlane.f32.xlu0 %v126
        %v128 = vpop.xlane.xlu0 %127
        %v129 = vsel %vm125, %v128, %v118
        %130 = vst [vmem:[#allocation2] sm:$0xff] %v129
        %s132 = sshll.u32 1, 4
        %s133 = ssub.s32 %s132, 1
        %v135 = vld [vmem:[#allocation2] sm:%s133]
        %s136 = sshll.u32 1, 4
        %s137 = ssub.s32 %s136, 1
        %138 = vst [vmem:[%s79] sm:%s137] %v135
        %s139 = sand.u32 %s8, 1
        %s140 = sand.u32 %s8, 1
        %s141 = smul.addr %s140, 4
        %s142 = scalar_lea.vmem [#allocation3], %s141
        %s143 = smul.addr %s8, 4
        %s144 = scalar_lea.vmem %s1, %s143
        // Predicated region
        $region51: #{custom-call.59} parent=49 // pred_check
          _
        $region52: #{custom-call.59} parent=49 // pred_check_branch
          %146 = sbr.rel (0) target = $region54
        $region53: #{custom-call.59} parent=49 // pred_region
          // Predicated region
          $region55: #{custom-call.59} parent=53 // pred_check
            _
          $region56: #{custom-call.59} parent=53 // pred_check_branch
            %148 = sbr.rel target = $region58
          $region57: #{custom-call.59} parent=53 // pred_region
            // Predicated region
            $region70: #{custom-call.59} parent=57 // pred_check
              _
            $region71: #{custom-call.59} parent=57 // pred_check_branch
              %164 = sbr.rel (0) target = $region73
            $region72: #{custom-call.59} parent=57 // pred_region
              %s166 = ssub.s32 16, 1
              loop: start=0, step=1, limit=1
              $region74: #{custom-call.59} parent=72 // loop_pre_header
                _
              $region75: #{custom-call.59} parent=72 // loop_header
                %s168 = sphi 0, %s172
                %p169 = scmp.ge.s32.totalorder %s168, 1
                %s173 = sphi %s142, %s142
                %s174 = sphi %s144, %s144
              $region76: #{custom-call.59} parent=72 // loop_header_branch
                %171 = sbr.rel (%p169) target = $region80
              $region77: #{custom-call.59} parent=72 // loop_body
                %v175 = vld [vmem:[%s173] sm:%s166]
                %176 = vst [vmem:[%s174] sm:%s166] %v175
              $region78: #{custom-call.59} parent=72 // loop_footer
                %s172 = sadd.s32 1, %s168
              $region79: #{custom-call.59} parent=72 // loop_footer_branch
                %167 = sbr.rel target = $region75
              $region80: #{custom-call.59} parent=72 // loop_exit
                _
            $region73: #{custom-call.59} parent=57 // pred_fallthru
              _
          $region58: #{custom-call.59} parent=53 // pred_fallthru
            _
          // Predicated region
          $region59: #{custom-call.59} parent=53 // pred_check
            _
          $region60: #{custom-call.59} parent=53 // pred_check_branch
            %150 = sbr.rel (0) target = $region62
          $region61: #{custom-call.59} parent=53 // pred_region
            %s152 = ssub.s32 16, 1
            loop: start=0, step=1, limit=1
            $region63: #{custom-call.59} parent=61 // loop_pre_header
              _
            $region64: #{custom-call.59} parent=61 // loop_header
              %s154 = sphi 0, %s158
              %p155 = scmp.ge.s32.totalorder %s154, 1
              %s159 = sphi %s142, %s142
              %s160 = sphi %s144, %s144
            $region65: #{custom-call.59} parent=61 // loop_header_branch
              %157 = sbr.rel (%p155) target = $region69
            $region66: #{custom-call.59} parent=61 // loop_body
              %v161 = vld [vmem:[%s159] sm:%s152]
              %162 = vst [vmem:[%s160] sm:%s152] %v161
            $region67: #{custom-call.59} parent=61 // loop_footer
              %s158 = sadd.s32 1, %s154
            $region68: #{custom-call.59} parent=61 // loop_footer_branch
              %153 = sbr.rel target = $region64
            $region69: #{custom-call.59} parent=61 // loop_exit
              _
          $region62: #{custom-call.59} parent=53 // pred_fallthru
            _
        $region54: #{custom-call.59} parent=49 // pred_fallthru
          _
        %177 = vnop
      $region50: #{custom-call.59} parent=5 // pred_fallthru
        _
      %p178 = scmp.le.s32.totalorder 2, %s3
      // Predicated region
      $region81: #{custom-call.59} parent=5 // pred_check
        %p179 = pneg %p178
      $region82: #{custom-call.59} parent=5 // pred_check_branch
        %181 = sbr.rel (%p179) target = $region84
      $region83: #{custom-call.59} parent=5 // pred_region
        %s182 = ssub.s32 %s3, 2
        %s183 = sand.u32 %s9, 1
        %s184 = sand.u32 %s9, 1
        %s185 = smul.addr %s184, 4
        %s186 = scalar_lea.vmem [#allocation3], %s185
      $region84: #{custom-call.59} parent=5 // pred_fallthru
        _
    $region6: #{custom-call.59} parent=1 // loop_footer
      %s7 = sadd.s32 1, %s3
    $region7: #{custom-call.59} parent=1 // loop_footer_branch
      %2 = sbr.rel target = $region3
    $region8: #{custom-call.59} parent=1 // loop_exit
      _

// kernel: custom-call.51
$region0: #{custom-call.51}
  %s0 = inlined_call_operand.hbm [shape: pred[2], index: 0, kind: output, shape index: {}]

// kernel: custom-call.56
$region0: #{custom-call.56}
  %s0 = inlined_call_operand.vmem [shape: f32[2,4,4], index: 0, kind: input, shape index: {}]
  %s1 = inlined_call_operand.vmem [shape: f32[2,4,4], index: 1, kind: output, shape index: {}]
  $region1: #{custom-call.56} parent=0
    #allocation0 [shape = 'u8[4096]{0}', space=vmem, size = 0x1000, scoped, tag = 'operand span for operand 0']
    #allocation1 [shape = 'u8[4096]{0}', space=vmem, size = 0x1000, scoped, tag = 'packed  for operand 0']
    #allocation2 [shape = 'u8[4096]{0}', space=vmem, size = 0x1000, scoped, tag = 'operand span for operand 1']
    #allocation3 [shape = 'u8[4096]{0}', space=vmem, size = 0x1000, scoped, tag = 'packed  for operand 1']
    loop: start=0, step=1, limit=4
    $region2: #{custom-call.56} parent=1 // loop_pre_header
      _
    $region3: #{custom-call.56} parent=1 // loop_header
      %s3 = sphi 0, %s7
      %p4 = scmp.ge.s32.totalorder %s3, 4
      %s10 = sphi 0, %s29
      %s11 = sphi 0, %s25
      %s12 = sphi 0, %s21
      %s13 = sphi 0, %s10
      %s14 = sphi 0, %s11
      %s15 = sphi 0, %s12
      %s16 = sphi 0, %s13
      %s17 = sphi 0, %s14
      %s18 = sphi 0, %s15
    $region4: #{custom-call.56} parent=1 // loop_header_branch
      %6 = sbr.rel (%p4) target = $region8
    $region5: #{custom-call.56} parent=1 // loop_body
      %s8 = ssub.s32 %s3, 1
      %s9 = ssub.s32 %s3, 2
      %s19 = sadd.s32 1, %s12
      %p20 = scmp.ge.s32.totalorder %s19, 1
      %s21 = scalar_select %p20, 0, %s19
      %s22 = sadd.s32 1, %s11
      %s23 = scalar_select %p20, %s22, %s11
      %p24 = scmp.ge.s32.totalorder %s23, 1
      %s25 = scalar_select %p24, 0, %s23
      %s26 = sadd.s32 1, %s10
      %s27 = scalar_select %p24, %s26, %s10
      %p28 = scmp.ge.s32.totalorder %s27, 2
      %s29 = scalar_select %p28, 0, %s27
      %p30 = scmp.le.s32.totalorder 1, %s3
      %p31 = scmp.lt.s32.totalorder %s3, 3
      %p32 = pnand %p30, %p31
      %p33 = pneg %p32
      // Predicated region
      $region9: #{custom-call.56} parent=5 // pred_check
        _
      $region10: #{custom-call.56} parent=5 // pred_check_branch
        %35 = sbr.rel (%p32) target = $region12
      $region11: #{custom-call.56} parent=5 // pred_region
        %s36 = ssub.s32 %s3, 1
      $region12: #{custom-call.56} parent=5 // pred_fallthru
        _
      %p37 = scmp.lt.s32.totalorder %s3, 2
      // Predicated region
      $region13: #{custom-call.56} parent=5 // pred_check
        %p38 = pneg %p37
      $region14: #{custom-call.56} parent=5 // pred_check_branch
        %40 = sbr.rel (%p38) target = $region16
      $region15: #{custom-call.56} parent=5 // pred_region
        %s41 = sand.u32 %s3, 1
        %s42 = sand.u32 %s3, 1
        %s43 = smul.addr %s42, 4
        %s44 = scalar_lea.vmem [#allocation1], %s43
        %s45 = sadd.s32 %s12, %s11
        %s46 = sadd.s32 %s45, %s10
        %s47 = smul.addr %s46, 4
        %s48 = scalar_lea.vmem %s0, %s47
        // Predicated region
        $region17: #{custom-call.56} parent=15 // pred_check
          _
        $region18: #{custom-call.56} parent=15 // pred_check_branch
          %50 = sbr.rel (0) target = $region20
        $region19: #{custom-call.56} parent=15 // pred_region
          // Predicated region
          $region21: #{custom-call.56} parent=19 // pred_check
            _
          $region22: #{custom-call.56} parent=19 // pred_check_branch
            %52 = sbr.rel target = $region24
          $region23: #{custom-call.56} parent=19 // pred_region
            // Predicated region
            $region36: #{custom-call.56} parent=23 // pred_check
              _
            $region37: #{custom-call.56} parent=23 // pred_check_branch
              %68 = sbr.rel (0) target = $region39
            $region38: #{custom-call.56} parent=23 // pred_region
              %s70 = ssub.s32 16, 1
              loop: start=0, step=1, limit=1
              $region40: #{custom-call.56} parent=38 // loop_pre_header
                _
              $region41: #{custom-call.56} parent=38 // loop_header
                %s72 = sphi 0, %s76
                %p73 = scmp.ge.s32.totalorder %s72, 1
                %s77 = sphi %s48, %s48
                %s78 = sphi %s44, %s44
              $region42: #{custom-call.56} parent=38 // loop_header_branch
                %75 = sbr.rel (%p73) target = $region46
              $region43: #{custom-call.56} parent=38 // loop_body
                %v79 = vld [vmem:[%s77] sm:%s70]
                %80 = vst [vmem:[%s78] sm:%s70] %v79
              $region44: #{custom-call.56} parent=38 // loop_footer
                %s76 = sadd.s32 1, %s72
              $region45: #{custom-call.56} parent=38 // loop_footer_branch
                %71 = sbr.rel target = $region41
              $region46: #{custom-call.56} parent=38 // loop_exit
                _
            $region39: #{custom-call.56} parent=23 // pred_fallthru
              _
          $region24: #{custom-call.56} parent=19 // pred_fallthru
            _
          // Predicated region
          $region25: #{custom-call.56} parent=19 // pred_check
            _
          $region26: #{custom-call.56} parent=19 // pred_check_branch
            %54 = sbr.rel (0) target = $region28
          $region27: #{custom-call.56} parent=19 // pred_region
            %s56 = ssub.s32 16, 1
            loop: start=0, step=1, limit=1
            $region29: #{custom-call.56} parent=27 // loop_pre_header
              _
            $region30: #{custom-call.56} parent=27 // loop_header
              %s58 = sphi 0, %s62
              %p59 = scmp.ge.s32.totalorder %s58, 1
              %s63 = sphi %s48, %s48
              %s64 = sphi %s44, %s44
            $region31: #{custom-call.56} parent=27 // loop_header_branch
              %61 = sbr.rel (%p59) target = $region35
            $region32: #{custom-call.56} parent=27 // loop_body
              %v65 = vld [vmem:[%s63] sm:%s56]
              %66 = vst [vmem:[%s64] sm:%s56] %v65
            $region33: #{custom-call.56} parent=27 // loop_footer
              %s62 = sadd.s32 1, %s58
            $region34: #{custom-call.56} parent=27 // loop_footer_branch
              %57 = sbr.rel target = $region30
            $region35: #{custom-call.56} parent=27 // loop_exit
              _
          $region28: #{custom-call.56} parent=19 // pred_fallthru
            _
        $region20: #{custom-call.56} parent=15 // pred_fallthru
          _
        %81 = vnop
      $region16: #{custom-call.56} parent=5 // pred_fallthru
        _
      %p82 = scmp.le.s32.totalorder 1, %s3
      %p83 = scmp.lt.s32.totalorder %s3, 3
      %p84 = pnand %p82, %p83
      %p85 = pneg %p84
      // Predicated region
      $region47: #{custom-call.56} parent=5 // pred_check
        _
      $region48: #{custom-call.56} parent=5 // pred_check_branch
        %87 = sbr.rel (%p84) target = $region50
      $region49: #{custom-call.56} parent=5 // pred_region
        %s88 = ssub.s32 %s3, 1
        %s89 = sand.u32 %s8, 1
        %s90 = sand.u32 %s8, 1
        %s91 = smul.addr %s90, 4
        %s92 = scalar_lea.vmem [#allocation1], %s91
        %s93 = sand.u32 %s8, 1
        %s94 = sand.u32 %s8, 1
        %s95 = smul.addr %s94, 4
        %s96 = scalar_lea.vmem [#allocation1], %s95
        %s97 = sand.u32 %s8, 1
        %s98 = sand.u32 %s8, 1
        %s99 = smul.addr %s98, 4
        %s100 = scalar_lea.vmem [#allocation3], %s99
        %s102 = sshll.u32 1, 4
        %s103 = ssub.s32 %s102, 1
        %v104 = vld [vmem:[%s96] sm:%s103]
        %105 = vst [vmem:[#allocation0] sm:%s103] %v104
        %106 = vst [vmem:[#allocation2] sm:$0xff] 0.0
        %vm107 = vcmask 7168
        %v108 = vld [vmem:[#allocation2] ss:$0 sm:$0xff]
        %v109 = vld [vmem:[#allocation0] ss:$0 sm:$0xff]
        %v110 = vmul.f32 %v108, %v108
        %111 = vadd.xlane.f32.xlu0 %v110
        %v112 = vpop.xlane.xlu0 %111
        %v113 = vsub.f32 %v109, %v112
        %v114 = vrsqrt.pop %v113
        %v115 = vld [vmem:[#allocation0] sm:$0xff]
        %v116 = vld [vmem:[#allocation2] sm:$0xff]
        %v117 = vmul.f32 %v116, %v108
        %118 = vadd.xlane.f32.xlu0 %v117
        %v119 = vpop.xlane.xlu0 %118
        %v120 = vsub.f32 %v115, %v119
        %v121 = vmul.f32 %v120, %v114
        %v122 = vsel %vm107, %v121, 0.0
        %v123 = vadd.f32 %v116, %v122
        %124 = vst [vmem:[#allocation2] sm:$0xff] %v123
        %vm125 = vcmask 15368
        %s126 = scalar_lea.vmem [#allocation2], 1
        %v127 = vld [vmem:[%s126] ss:$0 sm:$0xff]
        %s128 = scalar_lea.vmem [#allocation0], 1
        %v129 = vld [vmem:[%s128] ss:$0 sm:$0xff]
        %v130 = vmul.f32 %v127, %v127
        %131 = vadd.xlane.f32.xlu0 %v130
        %v132 = vpop.xlane.xlu0 %131
        %v133 = vsub.f32 %v129, %v132
        %v134 = vrsqrt.pop %v133
        %v135 = vld [vmem:[#allocation0] sm:$0xff]
        %v136 = vld [vmem:[#allocation2] sm:$0xff]
        %v137 = vmul.f32 %v136, %v127
        %138 = vadd.xlane.f32.xlu0 %v137
        %v139 = vpop.xlane.xlu0 %138
        %v140 = vsub.f32 %v135, %v139
        %v141 = vmul.f32 %v140, %v134
        %vm142 = vcmask 1047553
        %vm143 = vmand %vm125, %vm142
        %v144 = vsel %vm143, %v141, 0.0
        %v145 = vadd.f32 %v136, %v144
        %146 = vst [vmem:[#allocation2] sm:$0xff] %v145
        %vm147 = vcmask 23568
        %s148 = scalar_lea.vmem [#allocation2], 2
        %v149 = vld [vmem:[%s148] ss:$0 sm:$0xff]
        %s150 = scalar_lea.vmem [#allocation0], 2
        %v151 = vld [vmem:[%s150] ss:$0 sm:$0xff]
        %v152 = vmul.f32 %v149, %v149
        %153 = vadd.xlane.f32.xlu0 %v152
        %v154 = vpop.xlane.xlu0 %153
        %v155 = vsub.f32 %v151, %v154
        %v156 = vrsqrt.pop %v155
        %v157 = vld [vmem:[#allocation0] sm:$0xff]
        %v158 = vld [vmem:[#allocation2] sm:$0xff]
        %v159 = vmul.f32 %v158, %v149
        %160 = vadd.xlane.f32.xlu0 %v159
        %v161 = vpop.xlane.xlu0 %160
        %v162 = vsub.f32 %v157, %v161
        %v163 = vmul.f32 %v162, %v156
        %vm164 = vcmask 1047554
        %vm165 = vmand %vm147, %vm164
        %v166 = vsel %vm165, %v163, 0.0
        %v167 = vadd.f32 %v158, %v166
        %168 = vst [vmem:[#allocation2] sm:$0xff] %v167
        %vm169 = vcmask 31768
        %s170 = scalar_lea.vmem [#allocation2], 3
        %v171 = vld [vmem:[%s170] ss:$0 sm:$0xff]
        %s172 = scalar_lea.vmem [#allocation0], 3
        %v173 = vld [vmem:[%s172] ss:$0 sm:$0xff]
        %v174 = vmul.f32 %v171, %v171
        %175 = vadd.xlane.f32.xlu0 %v174
        %v176 = vpop.xlane.xlu0 %175
        %v177 = vsub.f32 %v173, %v176
        %v178 = vrsqrt.pop %v177
        %v179 = vld [vmem:[#allocation0] sm:$0xff]
        %v180 = vld [vmem:[#allocation2] sm:$0xff]
        %v181 = vmul.f32 %v180, %v171
        %182 = vadd.xlane.f32.xlu0 %v181
        %v183 = vpop.xlane.xlu0 %182
        %v184 = vsub.f32 %v179, %v183
        %v185 = vmul.f32 %v184, %v178
        %vm186 = vcmask 1047555
        %vm187 = vmand %vm169, %vm186
        %v188 = vsel %vm187, %v185, 0.0
        %v189 = vadd.f32 %v180, %v188
        %190 = vst [vmem:[#allocation2] sm:$0xff] %v189
        %s192 = sshll.u32 1, 4
        %s193 = ssub.s32 %s192, 1
        %v195 = vld [vmem:[#allocation2] sm:%s193]
        %s196 = sshll.u32 1, 4
        %s197 = ssub.s32 %s196, 1
        %198 = vst [vmem:[%s100] sm:%s197] %v195
        %s199 = sand.u32 %s8, 1
        %s200 = sand.u32 %s8, 1
        %s201 = smul.addr %s200, 4
        %s202 = scalar_lea.vmem [#allocation3], %s201
        %s203 = sadd.s32 %s15, %s14
        %s204 = sadd.s32 %s203, %s13
        %s205 = smul.addr %s204, 4
        %s206 = scalar_lea.vmem %s1, %s205
        // Predicated region
        $region51: #{custom-call.56} parent=49 // pred_check
          _
        $region52: #{custom-call.56} parent=49 // pred_check_branch
          %208 = sbr.rel (0) target = $region54
        $region53: #{custom-call.56} parent=49 // pred_region
          // Predicated region
          $region55: #{custom-call.56} parent=53 // pred_check
            _
          $region56: #{custom-call.56} parent=53 // pred_check_branch
            %210 = sbr.rel target = $region58
          $region57: #{custom-call.56} parent=53 // pred_region
            // Predicated region
            $region70: #{custom-call.56} parent=57 // pred_check
              _
            $region71: #{custom-call.56} parent=57 // pred_check_branch
              %226 = sbr.rel (0) target = $region73
            $region72: #{custom-call.56} parent=57 // pred_region
              %s228 = ssub.s32 16, 1
              loop: start=0, step=1, limit=1
              $region74: #{custom-call.56} parent=72 // loop_pre_header
                _
              $region75: #{custom-call.56} parent=72 // loop_header
                %s230 = sphi 0, %s234
                %p231 = scmp.ge.s32.totalorder %s230, 1
                %s235 = sphi %s202, %s202
                %s236 = sphi %s206, %s206
              $region76: #{custom-call.56} parent=72 // loop_header_branch
                %233 = sbr.rel (%p231) target = $region80
              $region77: #{custom-call.56} parent=72 // loop_body
                %v237 = vld [vmem:[%s235] sm:%s228]
                %238 = vst [vmem:[%s236] sm:%s228] %v237
              $region78: #{custom-call.56} parent=72 // loop_footer
                %s234 = sadd.s32 1, %s230
              $region79: #{custom-call.56} parent=72 // loop_footer_branch
                %229 = sbr.rel target = $region75
              $region80: #{custom-call.56} parent=72 // loop_exit
                _
            $region73: #{custom-call.56} parent=57 // pred_fallthru
              _
          $region58: #{custom-call.56} parent=53 // pred_fallthru
            _
          // Predicated region
          $region59: #{custom-call.56} parent=53 // pred_check
            _
          $region60: #{custom-call.56} parent=53 // pred_check_branch
            %212 = sbr.rel (0) target = $region62
          $region61: #{custom-call.56} parent=53 // pred_region
            %s214 = ssub.s32 16, 1
            loop: start=0, step=1, limit=1
            $region63: #{custom-call.56} parent=61 // loop_pre_header
              _
            $region64: #{custom-call.56} parent=61 // loop_header
              %s216 = sphi 0, %s220
              %p217 = scmp.ge.s32.totalorder %s216, 1
              %s221 = sphi %s202, %s202
              %s222 = sphi %s206, %s206
            $region65: #{custom-call.56} parent=61 // loop_header_branch
              %219 = sbr.rel (%p217) target = $region69
            $region66: #{custom-call.56} parent=61 // loop_body
              %v223 = vld [vmem:[%s221] sm:%s214]
              %224 = vst [vmem:[%s222] sm:%s214] %v223
            $region67: #{custom-call.56} parent=61 // loop_footer
              %s220 = sadd.s32 1, %s216
            $region68: #{custom-call.56} parent=61 // loop_footer_branch
              %215 = sbr.rel target = $region64
            $region69: #{custom-call.56} parent=61 // loop_exit
              _
          $region62: #{custom-call.56} parent=53 // pred_fallthru
            _
        $region54: #{custom-call.56} parent=49 // pred_fallthru
          _
        %239 = vnop
      $region50: #{custom-call.56} parent=5 // pred_fallthru
        _
      %p240 = scmp.le.s32.totalorder 2, %s3
      // Predicated region
      $region81: #{custom-call.56} parent=5 // pred_check
        %p241 = pneg %p240
      $region82: #{custom-call.56} parent=5 // pred_check_branch
        %243 = sbr.rel (%p241) target = $region84
      $region83: #{custom-call.56} parent=5 // pred_region
        %s244 = ssub.s32 %s3, 2
        %s245 = sand.u32 %s9, 1
        %s246 = sand.u32 %s9, 1
        %s247 = smul.addr %s246, 4
        %s248 = scalar_lea.vmem [#allocation3], %s247
      $region84: #{custom-call.56} parent=5 // pred_fallthru
        _
    $region6: #{custom-call.56} parent=1 // loop_footer
      %s7 = sadd.s32 1, %s3
    $region7: #{custom-call.56} parent=1 // loop_footer_branch
      %2 = sbr.rel target = $region3
    $region8: #{custom-call.56} parent=1 // loop_exit
      _

// kernel: dsr_forward.1
$region0: #{dsr_forward.1}
  #allocation0 [shape = 'u32[]', space=smem, size = 0x4, offset = 0x4, fixed_abs, tag = 'smem constant byte address 0x4 - core index']
  #allocation1 [shape = 'u32[144,128]{1,0:T(1,128)}', space=vmem, size = 0x12000, scoped, tag = 'internal scratch']
  #allocation2 [shape = 'f32[4,4]{1,0:T(4,128)}', space=vmem, size = 0x800, scoped, tag = 'scratch operand']
  #allocation3 [shape = 'f32[4,1]{1,0:T(4,128)}', space=vmem, size = 0x800, scoped, tag = 'scratch operand']
  #allocation4 [shape = 'f32[4,1]{1,0:T(4,128)}', space=vmem, size = 0x800, scoped, tag = 'scratch operand']
  #allocation5 [shape = 'f32[1,1]{1,0:T(1,128)}', space=vmem, size = 0x200, scoped, tag = 'scratch operand']
  #allocation6 [shape = 'f32[1,1]{1,0:T(1,128)}', space=vmem, size = 0x200, scoped, tag = 'scratch operand']
  %s0 = inlined_call_operand.vmem [shape: f32[2,4,256], index: 0, kind: input, shape index: {}]
  %s1 = inlined_call_operand.vmem [shape: f32[2,1,256], index: 1, kind: input, shape index: {}]
  %s2 = inlined_call_operand.vmem [shape: f32[2,1,4,4], index: 2, kind: output, shape index: {0}]
  %s3 = inlined_call_operand.vmem [shape: f32[2,1,4,1], index: 3, kind: output, shape index: {1}]
  %s4 = inlined_call_operand.vmem [shape: f32[2,1,4,1], index: 4, kind: output, shape index: {2}]
  %s5 = inlined_call_operand.vmem [shape: f32[2,1,1,1], index: 5, kind: output, shape index: {3}]
  %s6 = inlined_call_operand.vmem [shape: f32[2,1,1,1], index: 6, kind: output, shape index: {4}]
  %7 = xla_tuple %s2, %s3, %s4, %s5, %s6
  %s8 = sld [smem:[#allocation0]]
  $region81: #{dsr_forward.1} parent=0
    _
  %s10 = ssub.s32 1, %s8
  %s11 = scalar_select 0, %s10, %s8
  loop: start=0, step=1, limit=4
  $region2: #{dsr_forward.1} parent=0 // loop_pre_header
    _
  $region3: #{dsr_forward.1} parent=0 // loop_header
    %s13 = sphi 0, %s17
    %p14 = scmp.ge.s32.totalorder %s13, 4
    %s20 = sphi 0, %s39
    %s21 = sphi 0, %s35
    %s22 = sphi 0, %s31
    %s23 = sphi 0, %s20
    %s24 = sphi 0, %s21
    %s25 = sphi 0, %s22
    %s26 = sphi 0, %s23
    %s27 = sphi 0, %s24
    %s28 = sphi 0, %s25
    %s46 = sphi 0, %s48
    %s49 = sphi 0, %s46
    %s50 = sphi 0, %s49
    %s66 = sphi 0, %s50
    %s76 = sphi 0, %s78
    %s79 = sphi 0, %s76
    %s80 = sphi 0, %s79
    %s96 = sphi 0, %s80
    %s104 = sphi 0, %s106
    %s107 = sphi 0, %s104
    %s108 = sphi 0, %s107
    %s124 = sphi 0, %s108
    %s132 = sphi 0, %s134
    %s135 = sphi 0, %s132
    %s136 = sphi 0, %s135
    %s152 = sphi 0, %s136
    %s160 = sphi 0, %s162
    %s163 = sphi 0, %s160
    %s164 = sphi 0, %s163
    %s180 = sphi 0, %s164
    %s188 = sphi 0, %s190
    %s191 = sphi 0, %s188
    %s192 = sphi 0, %s191
    %s208 = sphi 0, %s192
    %s216 = sphi 0, %s218
    %s219 = sphi 0, %s216
    %s220 = sphi 0, %s219
    %s236 = sphi 0, %s220
  $region4: #{dsr_forward.1} parent=0 // loop_header_branch
    %16 = sbr.rel (%p14) target = $region8
  $region5: #{dsr_forward.1} parent=0 // loop_body
    %s18 = ssub.s32 %s13, 1
    %s19 = ssub.s32 %s13, 2
    %s29 = sadd.s32 1, %s22
    %p30 = scmp.ge.s32.totalorder %s29, 1
    %s31 = scalar_select %p30, 0, %s29
    %s32 = sadd.s32 1, %s21
    %s33 = scalar_select %p30, %s32, %s21
    %p34 = scmp.ge.s32.totalorder %s33, 1
    %s35 = scalar_select %p34, 0, %s33
    %s36 = sadd.s32 1, %s20
    %s37 = scalar_select %p34, %s36, %s20
    %p38 = scmp.ge.s32.totalorder %s37, 2
    %s39 = scalar_select %p38, 0, %s37
    %s40 = sadd.s32 %s21, %s22
    %s41 = sadd.s32 %s35, %s31
    %s42 = ssub.s32 %s20, %s39
    %s43 = ssub.s32 %s40, %s41
    %s44 = sor.u32 %s42, %s43
    %p45 = scmp.eq.s32.totalorder %s44, 0
    %s47 = sadd.s32 %s46, 1
    %s48 = scalar_select %p45, %s46, %s47
    %p51 = pneg %p45
    %p52 = scmp.eq.s32.totalorder %s13, 1
    %p53 = por %p51, %p52
    %p54 = scmp.ne.s32.totalorder %s46, %s49
    %p55 = scmp.eq.s32.totalorder %s13, 0
    %p56 = por %p54, %p55
    %p57 = scmp.ne.s32.totalorder %s46, %s49
    %p58 = scmp.eq.s32.totalorder %s18, 1
    %p59 = por %p57, %p58
    %p60 = scmp.ne.s32.totalorder %s49, %s50
    %p61 = scmp.eq.s32.totalorder %s18, 0
    %p62 = por %p60, %p61
    %p63 = scmp.ne.s32.totalorder %s49, %s50
    %p64 = scmp.eq.s32.totalorder %s19, 1
    %p65 = por %p63, %p64
    %p67 = scmp.ne.s32.totalorder %s50, %s66
    %p68 = scmp.eq.s32.totalorder %s19, 0
    %p69 = por %p67, %p68
    %s70 = sadd.s32 %s21, %s22
    %s71 = sadd.s32 %s35, %s31
    %s72 = ssub.s32 %s20, %s39
    %s73 = ssub.s32 %s70, %s71
    %s74 = sor.u32 %s72, %s73
    %p75 = scmp.eq.s32.totalorder %s74, 0
    %s77 = sadd.s32 %s76, 1
    %s78 = scalar_select %p75, %s76, %s77
    %p81 = pneg %p75
    %p82 = scmp.eq.s32.totalorder %s13, 1
    %p83 = por %p81, %p82
    %p84 = scmp.ne.s32.totalorder %s76, %s79
    %p85 = scmp.eq.s32.totalorder %s13, 0
    %p86 = por %p84, %p85
    %p87 = scmp.ne.s32.totalorder %s76, %s79
    %p88 = scmp.eq.s32.totalorder %s18, 1
    %p89 = por %p87, %p88
    %p90 = scmp.ne.s32.totalorder %s79, %s80
    %p91 = scmp.eq.s32.totalorder %s18, 0
    %p92 = por %p90, %p91
    %p93 = scmp.ne.s32.totalorder %s79, %s80
    %p94 = scmp.eq.s32.totalorder %s19, 1
    %p95 = por %p93, %p94
    %p97 = scmp.ne.s32.totalorder %s80, %s96
    %p98 = scmp.eq.s32.totalorder %s19, 0
    %p99 = por %p97, %p98
    %s100 = ssub.s32 %s20, %s39
    %s101 = ssub.s32 %s21, %s35
    %s102 = sor.u32 %s100, %s101
    %p103 = scmp.eq.s32.totalorder %s102, 0
    %s105 = sadd.s32 %s104, 1
    %s106 = scalar_select %p103, %s104, %s105
    %p109 = pneg %p103
    %p110 = scmp.eq.s32.totalorder %s13, 1
    %p111 = por %p109, %p110
    %p112 = scmp.ne.s32.totalorder %s104, %s107
    %p113 = scmp.eq.s32.totalorder %s13, 0
    %p114 = por %p112, %p113
    %p115 = scmp.ne.s32.totalorder %s104, %s107
    %p116 = scmp.eq.s32.totalorder %s18, 1
    %p117 = por %p115, %p116
    %p118 = scmp.ne.s32.totalorder %s107, %s108
    %p119 = scmp.eq.s32.totalorder %s18, 0
    %p120 = por %p118, %p119
    %p121 = scmp.ne.s32.totalorder %s107, %s108
    %p122 = scmp.eq.s32.totalorder %s19, 1
    %p123 = por %p121, %p122
    %p125 = scmp.ne.s32.totalorder %s108, %s124
    %p126 = scmp.eq.s32.totalorder %s19, 0
    %p127 = por %p125, %p126
    %s128 = ssub.s32 %s20, %s39
    %s129 = ssub.s32 %s21, %s35
    %s130 = sor.u32 %s128, %s129
    %p131 = scmp.eq.s32.totalorder %s130, 0
    %s133 = sadd.s32 %s132, 1
    %s134 = scalar_select %p131, %s132, %s133
    %p137 = pneg %p131
    %p138 = scmp.eq.s32.totalorder %s13, 1
    %p139 = por %p137, %p138
    %p140 = scmp.ne.s32.totalorder %s132, %s135
    %p141 = scmp.eq.s32.totalorder %s13, 0
    %p142 = por %p140, %p141
    %p143 = scmp.ne.s32.totalorder %s132, %s135
    %p144 = scmp.eq.s32.totalorder %s18, 1
    %p145 = por %p143, %p144
    %p146 = scmp.ne.s32.totalorder %s135, %s136
    %p147 = scmp.eq.s32.totalorder %s18, 0
    %p148 = por %p146, %p147
    %p149 = scmp.ne.s32.totalorder %s135, %s136
    %p150 = scmp.eq.s32.totalorder %s19, 1
    %p151 = por %p149, %p150
    %p153 = scmp.ne.s32.totalorder %s136, %s152
    %p154 = scmp.eq.s32.totalorder %s19, 0
    %p155 = por %p153, %p154
    %s156 = ssub.s32 %s20, %s39
    %s157 = ssub.s32 %s21, %s35
    %s158 = sor.u32 %s156, %s157
    %p159 = scmp.eq.s32.totalorder %s158, 0
    %s161 = sadd.s32 %s160, 1
    %s162 = scalar_select %p159, %s160, %s161
    %p165 = pneg %p159
    %p166 = scmp.eq.s32.totalorder %s13, 1
    %p167 = por %p165, %p166
    %p168 = scmp.ne.s32.totalorder %s160, %s163
    %p169 = scmp.eq.s32.totalorder %s13, 0
    %p170 = por %p168, %p169
    %p171 = scmp.ne.s32.totalorder %s160, %s163
    %p172 = scmp.eq.s32.totalorder %s18, 1
    %p173 = por %p171, %p172
    %p174 = scmp.ne.s32.totalorder %s163, %s164
    %p175 = scmp.eq.s32.totalorder %s18, 0
    %p176 = por %p174, %p175
    %p177 = scmp.ne.s32.totalorder %s163, %s164
    %p178 = scmp.eq.s32.totalorder %s19, 1
    %p179 = por %p177, %p178
    %p181 = scmp.ne.s32.totalorder %s164, %s180
    %p182 = scmp.eq.s32.totalorder %s19, 0
    %p183 = por %p181, %p182
    %s184 = ssub.s32 %s20, %s39
    %s185 = ssub.s32 %s21, %s35
    %s186 = sor.u32 %s184, %s185
    %p187 = scmp.eq.s32.totalorder %s186, 0
    %s189 = sadd.s32 %s188, 1
    %s190 = scalar_select %p187, %s188, %s189
    %p193 = pneg %p187
    %p194 = scmp.eq.s32.totalorder %s13, 1
    %p195 = por %p193, %p194
    %p196 = scmp.ne.s32.totalorder %s188, %s191
    %p197 = scmp.eq.s32.totalorder %s13, 0
    %p198 = por %p196, %p197
    %p199 = scmp.ne.s32.totalorder %s188, %s191
    %p200 = scmp.eq.s32.totalorder %s18, 1
    %p201 = por %p199, %p200
    %p202 = scmp.ne.s32.totalorder %s191, %s192
    %p203 = scmp.eq.s32.totalorder %s18, 0
    %p204 = por %p202, %p203
    %p205 = scmp.ne.s32.totalorder %s191, %s192
    %p206 = scmp.eq.s32.totalorder %s19, 1
    %p207 = por %p205, %p206
    %p209 = scmp.ne.s32.totalorder %s192, %s208
    %p210 = scmp.eq.s32.totalorder %s19, 0
    %p211 = por %p209, %p210
    %s212 = ssub.s32 %s20, %s39
    %s213 = ssub.s32 %s21, %s35
    %s214 = sor.u32 %s212, %s213
    %p215 = scmp.eq.s32.totalorder %s214, 0
    %s217 = sadd.s32 %s216, 1
    %s218 = scalar_select %p215, %s216, %s217
    %p221 = pneg %p215
    %p222 = scmp.eq.s32.totalorder %s13, 1
    %p223 = por %p221, %p222
    %p224 = scmp.ne.s32.totalorder %s216, %s219
    %p225 = scmp.eq.s32.totalorder %s13, 0
    %p226 = por %p224, %p225
    %p227 = scmp.ne.s32.totalorder %s216, %s219
    %p228 = scmp.eq.s32.totalorder %s18, 1
    %p229 = por %p227, %p228
    %p230 = scmp.ne.s32.totalorder %s219, %s220
    %p231 = scmp.eq.s32.totalorder %s18, 0
    %p232 = por %p230, %p231
    %p233 = scmp.ne.s32.totalorder %s219, %s220
    %p234 = scmp.eq.s32.totalorder %s19, 1
    %p235 = por %p233, %p234
    %p237 = scmp.ne.s32.totalorder %s220, %s236
    %p238 = scmp.eq.s32.totalorder %s19, 0
    %p239 = por %p237, %p238
    %p240 = scmp.le.s32.totalorder 1, %s13
    %p241 = scmp.lt.s32.totalorder %s13, 3
    %p242 = pnand %p240, %p241
    %p243 = pneg %p242
    // Predicated region
    $region9: #{dsr_forward.1} parent=5 // pred_check
      _
    $region10: #{dsr_forward.1} parent=5 // pred_check_branch
      %245 = sbr.rel (%p242) target = $region12
    $region11: #{dsr_forward.1} parent=5 // pred_region
      %s246 = ssub.s32 %s13, 1
    $region12: #{dsr_forward.1} parent=5 // pred_fallthru
      _
    %p247 = scmp.lt.s32.totalorder %s13, 2
    // Predicated region
    $region13: #{dsr_forward.1} parent=5 // pred_check
      %p248 = pneg %p247
    $region14: #{dsr_forward.1} parent=5 // pred_check_branch
      %250 = sbr.rel (%p248) target = $region16
    $region15: #{dsr_forward.1} parent=5 // pred_region
      // Predicated region
      $region17: #{dsr_forward.1} parent=15 // pred_check
        %p251 = pneg %p56
      $region18: #{dsr_forward.1} parent=15 // pred_check_branch
        %253 = sbr.rel (%p251) target = $region20
      $region19: #{dsr_forward.1} parent=15 // pred_region
        %s254 = sadd.s32 %s21, %s22
        %s255 = smul.u32 2, %s254
        %p256 = scmp.lt.s32.totalorder %s20, 1
        %s257 = scalar_select %p256, %s20, 1
        %p258 = scmp.lt.s32.totalorder %s255, 1
        %s259 = scalar_select %p258, %s255, 1
        %s260 = smul.addr %s257, 2
        %s261 = sadd.s32 %s259, %s260
        %s262 = smul.addr %s261, 4
        %s263 = scalar_lea.vmem %s0, %s262
        %s264 = sadd.s32 %s21, %s22
        %s265 = smul.u32 2, %s264
      $region20: #{dsr_forward.1} parent=15 // pred_fallthru
        _
      // Predicated region
      $region21: #{dsr_forward.1} parent=15 // pred_check
        %p266 = pneg %p86
      $region22: #{dsr_forward.1} parent=15 // pred_check_branch
        %268 = sbr.rel (%p266) target = $region24
      $region23: #{dsr_forward.1} parent=15 // pred_region
        %s269 = sadd.s32 %s21, %s22
        %s270 = smul.u32 2, %s269
        %p271 = scmp.lt.s32.totalorder %s20, 1
        %s272 = scalar_select %p271, %s20, 1
        %p273 = scmp.lt.s32.totalorder %s270, 1
        %s274 = scalar_select %p273, %s270, 1
        %s275 = smul.addr %s272, 2
        %s276 = sadd.s32 %s274, %s275
        %s277 = scalar_lea.vmem %s1, %s276
        %s278 = sadd.s32 %s21, %s22
        %s279 = smul.u32 2, %s278
      $region24: #{dsr_forward.1} parent=15 // pred_fallthru
        _
    $region16: #{dsr_forward.1} parent=5 // pred_fallthru
      _
    %p280 = scmp.le.s32.totalorder 1, %s13
    %p281 = scmp.lt.s32.totalorder %s13, 3
    %p282 = pnand %p280, %p281
    %p283 = pneg %p282
    // Predicated region
    $region25: #{dsr_forward.1} parent=5 // pred_check
      _
    $region26: #{dsr_forward.1} parent=5 // pred_check_branch
      %285 = sbr.rel (%p282) target = $region28
    $region27: #{dsr_forward.1} parent=5 // pred_region
      %s286 = ssub.s32 %s13, 1
      %s287 = sadd.s32 %s24, %s25
      %s288 = smul.u32 2, %s287
      %p289 = scmp.lt.s32.totalorder %s23, 1
      %s290 = scalar_select %p289, %s23, 1
      %p291 = scmp.lt.s32.totalorder %s288, 1
      %s292 = scalar_select %p291, %s288, 1
      %s293 = smul.addr %s290, 2
      %s294 = sadd.s32 %s292, %s293
      %s295 = smul.addr %s294, 4
      %s296 = scalar_lea.vmem %s0, %s295
      %p297 = pneg %p62
      %p298 = pneg %p59
      %s299 = sadd.s32 %s24, %s25
      %s300 = smul.u32 2, %s299
      %p301 = scmp.lt.s32.totalorder %s23, 1
      %s302 = scalar_select %p301, %s23, 1
      %p303 = scmp.lt.s32.totalorder %s300, 1
      %s304 = scalar_select %p303, %s300, 1
      %s305 = smul.addr %s302, 2
      %s306 = sadd.s32 %s304, %s305
      %s307 = scalar_lea.vmem %s1, %s306
      %p308 = pneg %p92
      %p309 = pneg %p89
      %p310 = pneg %p120
      %p311 = pneg %p117
      %p312 = scmp.lt.s32.totalorder %s23, 1
      %s313 = scalar_select %p312, %s23, 1
      %p314 = scmp.lt.s32.totalorder %s24, 0
      %s315 = scalar_select %p314, %s24, 0
      %s316 = sadd.s32 %s315, %s313
      %s317 = smul.addr %s316, 4
      %s318 = scalar_lea.vmem %s2, %s317
      %p319 = pneg %p148
      %p320 = pneg %p145
      %p321 = scmp.lt.s32.totalorder %s23, 1
      %s322 = scalar_select %p321, %s23, 1
      %p323 = scmp.lt.s32.totalorder %s24, 0
      %s324 = scalar_select %p323, %s24, 0
      %s325 = sadd.s32 %s324, %s322
      %s326 = smul.addr %s325, 4
      %s327 = scalar_lea.vmem %s3, %s326
      %p328 = pneg %p176
      %p329 = pneg %p173
      %p330 = scmp.lt.s32.totalorder %s23, 1
      %s331 = scalar_select %p330, %s23, 1
      %p332 = scmp.lt.s32.totalorder %s24, 0
      %s333 = scalar_select %p332, %s24, 0
      %s334 = sadd.s32 %s333, %s331
      %s335 = smul.addr %s334, 4
      %s336 = scalar_lea.vmem %s4, %s335
      %p337 = pneg %p204
      %p338 = pneg %p201
      %p339 = scmp.lt.s32.totalorder %s23, 1
      %s340 = scalar_select %p339, %s23, 1
      %p341 = scmp.lt.s32.totalorder %s24, 0
      %s342 = scalar_select %p341, %s24, 0
      %s343 = sadd.s32 %s342, %s340
      %s344 = scalar_lea.vmem %s5, %s343
      %p345 = pneg %p232
      %p346 = pneg %p229
      %p347 = scmp.lt.s32.totalorder %s23, 1
      %s348 = scalar_select %p347, %s23, 1
      %p349 = scmp.lt.s32.totalorder %s24, 0
      %s350 = scalar_select %p349, %s24, 0
      %s351 = sadd.s32 %s350, %s348
      %s352 = scalar_lea.vmem %s6, %s351
      %s353 = sadd.s32 %s24, %s25
      %s354 = smul.u32 2, %s353
      %p355 = scmp.lt.s32.totalorder %s23, 1
      %s356 = scalar_select %p355, %s23, 1
      %p357 = scmp.lt.s32.totalorder %s354, 1
      %s358 = scalar_select %p357, %s354, 1
      %s359 = smul.addr %s356, 2
      %s360 = sadd.s32 %s358, %s359
      %s361 = smul.addr %s360, 4
      %s362 = scalar_lea.vmem %s0, %s361
      %s363 = sadd.s32 %s24, %s25
      %s364 = smul.u32 2, %s363
      %s365 = sadd.s32 %s24, %s25
      %s366 = smul.u32 2, %s365
      %p367 = scmp.lt.s32.totalorder %s23, 1
      %s368 = scalar_select %p367, %s23, 1
      %p369 = scmp.lt.s32.totalorder %s366, 1
      %s370 = scalar_select %p369, %s366, 1
      %s371 = smul.addr %s368, 2
      %s372 = sadd.s32 %s370, %s371
      %s373 = scalar_lea.vmem %s1, %s372
      %s374 = sadd.s32 %s24, %s25
      %s375 = smul.u32 2, %s374
      %p376 = scmp.lt.s32.totalorder %s23, 1
      %s377 = scalar_select %p376, %s23, 1
      %p378 = scmp.lt.s32.totalorder %s24, 0
      %s379 = scalar_select %p378, %s24, 0
      %s380 = sadd.s32 %s379, %s377
      %s381 = smul.addr %s380, 4
      %s382 = scalar_lea.vmem %s2, %s381
      %p383 = scmp.lt.s32.totalorder %s23, 1
      %s384 = scalar_select %p383, %s23, 1
      %p385 = scmp.lt.s32.totalorder %s24, 0
      %s386 = scalar_select %p385, %s24, 0
      %s387 = sadd.s32 %s386, %s384
      %s388 = smul.addr %s387, 4
      %s389 = scalar_lea.vmem %s3, %s388
      %p390 = scmp.lt.s32.totalorder %s23, 1
      %s391 = scalar_select %p390, %s23, 1
      %p392 = scmp.lt.s32.totalorder %s24, 0
      %s393 = scalar_select %p392, %s24, 0
      %s394 = sadd.s32 %s393, %s391
      %s395 = smul.addr %s394, 4
      %s396 = scalar_lea.vmem %s4, %s395
      %p397 = scmp.lt.s32.totalorder %s23, 1
      %s398 = scalar_select %p397, %s23, 1
      %p399 = scmp.lt.s32.totalorder %s24, 0
      %s400 = scalar_select %p399, %s24, 0
      %s401 = sadd.s32 %s400, %s398
      %s402 = scalar_lea.vmem %s5, %s401
      %p403 = scmp.lt.s32.totalorder %s23, 1
      %s404 = scalar_select %p403, %s23, 1
      %p405 = scmp.lt.s32.totalorder %s24, 0
      %s406 = scalar_select %p405, %s24, 0
      %s407 = sadd.s32 %s406, %s404
      %s408 = scalar_lea.vmem %s6, %s407
      %p409 = scmp.eq.s32.totalorder %s25, 0
      // Predicated region
      $region29: #{dsr_forward.1} parent=27 // pred_check
        %p410 = pneg %p409
      $region30: #{dsr_forward.1} parent=27 // pred_check_branch
        %412 = sbr.rel (%p410) target = $region32
      $region31: #{dsr_forward.1} parent=27 // pred_region
        %vm413 = vcmask 27648
        %414 = vst.msk [vmem:[#allocation2] sm:$0xf] %vm413, 0.0
        %vm415 = vcmask 3072
        %416 = vst.msk [vmem:[#allocation3] sm:$0xf] %vm415, 0.0
        %417 = vst.msk [vmem:[#allocation4] sm:$0xf] %vm415, 0.0
        %vm418 = vcmask 0
        %419 = vst.msk [vmem:[#allocation5] sm:$0x1] %vm418, 0.0
        %420 = vst.msk [vmem:[#allocation6] sm:$0x1] %vm418, 0.0
      $region32: #{dsr_forward.1} parent=27 // pred_fallthru
        _
      %v421 = vld [vmem:[%s362] sm:$0xff]
      %v422 = vld [vmem:[%s373] sm:$0x3]
      %v423 = vld [vmem:[#allocation2] sm:$0xf]
      %v425 = vcombine.high %v421, %v421
      %427 = vmatprep.subr.mxu0 0.0
      %428 = vmatpush1.xpose.msra.mxu0 0.0
      %429 = vmatprep.subr.mxu0 0.0
      %430 = vmatpush1.xpose.msra.mxu0 0.0
      %431 = vmatprep.subr.mxu0 0.0
      %432 = vmatpush1.xpose.msra.mxu0 0.0
      %433 = vmatprep.subr.mxu0 0.0
      %434 = vmatpush1.xpose.msra.mxu0 0.0
      %435 = vmatprep.subr.mxu0 0.0
      %436 = vmatpush1.xpose.msra.mxu0 0.0
      %437 = vmatprep.subr.mxu0 0.0
      %438 = vmatpush1.xpose.msra.mxu0 0.0
      %439 = vmatprep.subr.mxu0 0.0
      %440 = vmatpush1.xpose.msra.mxu0 0.0
      %441 = vmatprep.subr.mxu0 0.0
      %442 = vmatpush1.xpose.msra.mxu0 0.0
      %443 = vmatprep.subr.mxu0 0.0
      %444 = vmatpush1.xpose.msra.mxu0 0.0
      %445 = vmatprep.subr.mxu0 0.0
      %446 = vmatpush1.xpose.msra.mxu0 0.0
      %447 = vmatprep.subr.mxu0 0.0
      %448 = vmatpush1.xpose.msra.mxu0 0.0
      %449 = vmatprep.subr.mxu0 0.0
      %450 = vmatpush1.xpose.msra.mxu0 0.0
      %451 = vmatprep.subr.mxu0 0.0
      %452 = vmatpush1.xpose.msra.mxu0 0.0
      %453 = vmatprep.subr.mxu0 0.0
      %454 = vmatpush1.xpose.msra.mxu0 0.0
      %455 = vmatprep.subr.mxu0 0.0
      %456 = vmatpush1.xpose.msra.mxu0 0.0
      %457 = vmatprep.subr.mxu0 %v425
      %458 = vmatpush1.xpose.msra.mxu0 %v421
      %459 = vmatprep.subr.mxu0 0.0
      %460 = vmatpush2.xpose.msra.mxu0 0.0
      %461 = vmatprep.subr.mxu0 0.0
      %462 = vmatpush2.xpose.msra.mxu0 0.0
      %463 = vmatprep.subr.mxu0 0.0
      %464 = vmatpush2.xpose.msra.mxu0 0.0
      %465 = vmatprep.subr.mxu0 0.0
      %466 = vmatpush2.xpose.msra.mxu0 0.0
      %467 = vmatprep.subr.mxu0 0.0
      %468 = vmatpush2.xpose.msra.mxu0 0.0
      %469 = vmatprep.subr.mxu0 0.0
      %470 = vmatpush2.xpose.msra.mxu0 0.0
      %471 = vmatprep.subr.mxu0 0.0
      %472 = vmatpush2.xpose.msra.mxu0 0.0
      %473 = vmatprep.subr.mxu0 0.0
      %474 = vmatpush2.xpose.msra.mxu0 0.0
      %475 = vmatprep.subr.mxu0 0.0
      %476 = vmatpush2.xpose.msra.mxu0 0.0
      %477 = vmatprep.subr.mxu0 0.0
      %478 = vmatpush2.xpose.msra.mxu0 0.0
      %479 = vmatprep.subr.mxu0 0.0
      %480 = vmatpush2.xpose.msra.mxu0 0.0
      %481 = vmatprep.subr.mxu0 0.0
      %482 = vmatpush2.xpose.msra.mxu0 0.0
      %483 = vmatprep.subr.mxu0 0.0
      %484 = vmatpush2.xpose.msra.mxu0 0.0
      %485 = vmatprep.subr.mxu0 0.0
      %486 = vmatpush2.xpose.msra.mxu0 0.0
      %487 = vmatprep.subr.mxu0 0.0
      %488 = vmatpush2.xpose.msra.mxu0 0.0
      %489 = vmatprep.subr.mxu0 0.0
      %490 = vmatpush2.xpose.msra.mxu0 0.0
      %491 = vmatprep.mubr.f32.mxu0 %v425
      %492 = vmatmul.mubr.f32.gmra.mxu0 %v421
      %v493 = vpop.f32.mrf.mxu0
      %v494 = vadd.f32 0.0, %v493
      %v495 = vpop.f32.mrf.mxu0
      %496 = vdwg.mxu0
      %v497 = vadd.f32 %v423, %v494
      %vm498 = vcmask 27648
      %499 = vst.msk [vmem:[#allocation2] sm:$0xf] %vm498, %v497
      %v500 = vld [vmem:[#allocation3] sm:$0xf]
      %v502 = vlaneseq
      %v503 = vshrl.u32 %v502, 7
      %v504 = vsub.s32 0, %v503
      %v505 = vrot.slane %v422, %v504
      %v506 = vlaneseq
      %v507 = vshrl.u32 %v506, 7
      %v508 = vsub.s32 1, %v507
      %v509 = vrot.slane %v422, %v508
      %v510 = vcombine.low %v505, %v509
      %v512 = vmul.f32 %v421, %v510
      %v514 = vcombine.high %v512, %v512
      %vm516 = vcmask 1043456
      %v517 = vsel %vm516, %v512, 0.0
      %v518 = vsel %vm516, %v514, 0.0
      %v519 = vadd.f32 %v517, %v518
      %520 = vadd.xlane.f32.xlu0 %v519
      %v521 = vpop.xlane.xlu0 %520
      %v522 = vadd.f32 %v500, %v521
      %vm523 = vcmask 3072
      %524 = vst.msk [vmem:[#allocation3] sm:$0xf] %vm523, %v522
      %v525 = vld [vmem:[#allocation4] sm:$0xf]
      %v526 = vsel %vm516, %v421, 0.0
      %v527 = vsel %vm516, %v425, 0.0
      %v528 = vadd.f32 %v526, %v527
      %529 = vadd.xlane.f32.xlu0 %v528
      %v530 = vpop.xlane.xlu0 %529
      %v531 = vadd.f32 %v525, %v530
      %532 = vst.msk [vmem:[#allocation4] sm:$0xf] %vm523, %v531
      %v533 = vld [vmem:[#allocation5] sm:$0x1]
      %v534 = vmul.f32 %v422, %v422
      %v536 = vlaneseq
      %v537 = vshrl.u32 %v536, 7
      %v538 = vsub.s32 0, %v537
      %v539 = vrot.slane %v534, %v538
      %v540 = vlaneseq
      %v541 = vshrl.u32 %v540, 7
      %v542 = vsub.s32 1, %v541
      %v543 = vrot.slane %v534, %v542
      %vm546 = vcmask 1040384
      %v547 = vsel %vm546, %v539, 0.0
      %v548 = vsel %vm546, %v543, 0.0
      %v549 = vadd.f32 %v547, %v548
      %550 = vadd.xlane.f32.xlu0 %v549
      %v551 = vpop.xlane.xlu0 %550
      %v552 = vadd.f32 %v533, %v551
      %vm553 = vcmask 0
      %554 = vst.msk [vmem:[#allocation5] sm:$0x1] %vm553, %v552
      %v555 = vld [vmem:[#allocation6] sm:$0x1]
      %v558 = vsel %vm546, %v505, 0.0
      %v559 = vsel %vm546, %v509, 0.0
      %v560 = vadd.f32 %v558, %v559
      %561 = vadd.xlane.f32.xlu0 %v560
      %v562 = vpop.xlane.xlu0 %561
      %v563 = vadd.f32 %v555, %v562
      %564 = vst.msk [vmem:[#allocation6] sm:$0x1] %vm553, %v563
      // Predicated region
      $region33: #{dsr_forward.1} parent=27 // pred_check
        %p565 = pneg %p409
      $region34: #{dsr_forward.1} parent=27 // pred_check_branch
        %567 = sbr.rel (%p565) target = $region36
      $region35: #{dsr_forward.1} parent=27 // pred_region
        %v568 = vld [vmem:[#allocation2] sm:$0xf]
        %569 = vst.msk [vmem:[%s382] sm:$0xf] %vm498, %v568
        %v570 = vld [vmem:[#allocation3] sm:$0xf]
        %571 = vst.msk [vmem:[%s389] sm:$0xf] %vm523, %v570
        %v572 = vld [vmem:[#allocation4] sm:$0xf]
        %573 = vst.msk [vmem:[%s396] sm:$0xf] %vm523, %v572
        %v574 = vld [vmem:[#allocation5] sm:$0x1]
        %575 = vst.msk [vmem:[%s402] sm:$0x1] %vm553, %v574
        %v576 = vld [vmem:[#allocation6] sm:$0x1]
        %577 = vst.msk [vmem:[%s408] sm:$0x1] %vm553, %v576
      $region36: #{dsr_forward.1} parent=27 // pred_fallthru
        _
      %p578 = scmp.lt.s32.totalorder %s23, 1
      %s579 = scalar_select %p578, %s23, 1
      %p580 = scmp.lt.s32.totalorder %s24, 0
      %s581 = scalar_select %p580, %s24, 0
      %s582 = sadd.s32 %s581, %s579
      %s583 = smul.addr %s582, 4
      %s584 = scalar_lea.vmem %s2, %s583
      %p585 = scmp.lt.s32.totalorder %s23, 1
      %s586 = scalar_select %p585, %s23, 1
      %p587 = scmp.lt.s32.totalorder %s24, 0
      %s588 = scalar_select %p587, %s24, 0
      %s589 = sadd.s32 %s588, %s586
      %s590 = smul.addr %s589, 4
      %s591 = scalar_lea.vmem %s3, %s590
      %p592 = scmp.lt.s32.totalorder %s23, 1
      %s593 = scalar_select %p592, %s23, 1
      %p594 = scmp.lt.s32.totalorder %s24, 0
      %s595 = scalar_select %p594, %s24, 0
      %s596 = sadd.s32 %s595, %s593
      %s597 = smul.addr %s596, 4
      %s598 = scalar_lea.vmem %s4, %s597
      %p599 = scmp.lt.s32.totalorder %s23, 1
      %s600 = scalar_select %p599, %s23, 1
      %p601 = scmp.lt.s32.totalorder %s24, 0
      %s602 = scalar_select %p601, %s24, 0
      %s603 = sadd.s32 %s602, %s600
      %s604 = scalar_lea.vmem %s5, %s603
      %p605 = scmp.lt.s32.totalorder %s23, 1
      %s606 = scalar_select %p605, %s23, 1
      %p607 = scmp.lt.s32.totalorder %s24, 0
      %s608 = scalar_select %p607, %s24, 0
      %s609 = sadd.s32 %s608, %s606
      %s610 = scalar_lea.vmem %s6, %s609
      // Predicated region
      $region37: #{dsr_forward.1} parent=27 // pred_check
        %p611 = pneg %p117
      $region38: #{dsr_forward.1} parent=27 // pred_check_branch
        %613 = sbr.rel (%p611) target = $region40
      $region39: #{dsr_forward.1} parent=27 // pred_region
        _
      $region40: #{dsr_forward.1} parent=27 // pred_fallthru
        _
      // Predicated region
      $region41: #{dsr_forward.1} parent=27 // pred_check
        %p614 = pneg %p145
      $region42: #{dsr_forward.1} parent=27 // pred_check_branch
        %616 = sbr.rel (%p614) target = $region44
      $region43: #{dsr_forward.1} parent=27 // pred_region
        _
      $region44: #{dsr_forward.1} parent=27 // pred_fallthru
        _
      // Predicated region
      $region45: #{dsr_forward.1} parent=27 // pred_check
        %p617 = pneg %p173
      $region46: #{dsr_forward.1} parent=27 // pred_check_branch
        %619 = sbr.rel (%p617) target = $region48
      $region47: #{dsr_forward.1} parent=27 // pred_region
        _
      $region48: #{dsr_forward.1} parent=27 // pred_fallthru
        _
      // Predicated region
      $region49: #{dsr_forward.1} parent=27 // pred_check
        %p620 = pneg %p201
      $region50: #{dsr_forward.1} parent=27 // pred_check_branch
        %622 = sbr.rel (%p620) target = $region52
      $region51: #{dsr_forward.1} parent=27 // pred_region
        _
      $region52: #{dsr_forward.1} parent=27 // pred_fallthru
        _
      // Predicated region
      $region53: #{dsr_forward.1} parent=27 // pred_check
        %p623 = pneg %p229
      $region54: #{dsr_forward.1} parent=27 // pred_check_branch
        %625 = sbr.rel (%p623) target = $region56
      $region55: #{dsr_forward.1} parent=27 // pred_region
        _
      $region56: #{dsr_forward.1} parent=27 // pred_fallthru
        _
    $region28: #{dsr_forward.1} parent=5 // pred_fallthru
      _
    %p626 = scmp.le.s32.totalorder 2, %s13
    // Predicated region
    $region57: #{dsr_forward.1} parent=5 // pred_check
      %p627 = pneg %p626
    $region58: #{dsr_forward.1} parent=5 // pred_check_branch
      %629 = sbr.rel (%p627) target = $region60
    $region59: #{dsr_forward.1} parent=5 // pred_region
      %s630 = ssub.s32 %s13, 2
      // Predicated region
      $region61: #{dsr_forward.1} parent=59 // pred_check
        %p631 = pneg %p123
      $region62: #{dsr_forward.1} parent=59 // pred_check_branch
        %633 = sbr.rel (%p631) target = $region64
      $region63: #{dsr_forward.1} parent=59 // pred_region
        %p634 = scmp.lt.s32.totalorder %s26, 1
        %s635 = scalar_select %p634, %s26, 1
        %p636 = scmp.lt.s32.totalorder %s27, 0
        %s637 = scalar_select %p636, %s27, 0
        %s638 = sadd.s32 %s637, %s635
        %s639 = smul.addr %s638, 4
        %s640 = scalar_lea.vmem %s2, %s639
      $region64: #{dsr_forward.1} parent=59 // pred_fallthru
        _
      // Predicated region
      $region65: #{dsr_forward.1} parent=59 // pred_check
        %p641 = pneg %p151
      $region66: #{dsr_forward.1} parent=59 // pred_check_branch
        %643 = sbr.rel (%p641) target = $region68
      $region67: #{dsr_forward.1} parent=59 // pred_region
        %p644 = scmp.lt.s32.totalorder %s26, 1
        %s645 = scalar_select %p644, %s26, 1
        %p646 = scmp.lt.s32.totalorder %s27, 0
        %s647 = scalar_select %p646, %s27, 0
        %s648 = sadd.s32 %s647, %s645
        %s649 = smul.addr %s648, 4
        %s650 = scalar_lea.vmem %s3, %s649
      $region68: #{dsr_forward.1} parent=59 // pred_fallthru
        _
      // Predicated region
      $region69: #{dsr_forward.1} parent=59 // pred_check
        %p651 = pneg %p179
      $region70: #{dsr_forward.1} parent=59 // pred_check_branch
        %653 = sbr.rel (%p651) target = $region72
      $region71: #{dsr_forward.1} parent=59 // pred_region
        %p654 = scmp.lt.s32.totalorder %s26, 1
        %s655 = scalar_select %p654, %s26, 1
        %p656 = scmp.lt.s32.totalorder %s27, 0
        %s657 = scalar_select %p656, %s27, 0
        %s658 = sadd.s32 %s657, %s655
        %s659 = smul.addr %s658, 4
        %s660 = scalar_lea.vmem %s4, %s659
      $region72: #{dsr_forward.1} parent=59 // pred_fallthru
        _
      // Predicated region
      $region73: #{dsr_forward.1} parent=59 // pred_check
        %p661 = pneg %p207
      $region74: #{dsr_forward.1} parent=59 // pred_check_branch
        %663 = sbr.rel (%p661) target = $region76
      $region75: #{dsr_forward.1} parent=59 // pred_region
        %p664 = scmp.lt.s32.totalorder %s26, 1
        %s665 = scalar_select %p664, %s26, 1
        %p666 = scmp.lt.s32.totalorder %s27, 0
        %s667 = scalar_select %p666, %s27, 0
        %s668 = sadd.s32 %s667, %s665
        %s669 = scalar_lea.vmem %s5, %s668
      $region76: #{dsr_forward.1} parent=59 // pred_fallthru
        _
      // Predicated region
      $region77: #{dsr_forward.1} parent=59 // pred_check
        %p670 = pneg %p235
      $region78: #{dsr_forward.1} parent=59 // pred_check_branch
        %672 = sbr.rel (%p670) target = $region80
      $region79: #{dsr_forward.1} parent=59 // pred_region
        %p673 = scmp.lt.s32.totalorder %s26, 1
        %s674 = scalar_select %p673, %s26, 1
        %p675 = scmp.lt.s32.totalorder %s27, 0
        %s676 = scalar_select %p675, %s27, 0
        %s677 = sadd.s32 %s676, %s674
        %s678 = scalar_lea.vmem %s6, %s677
      $region80: #{dsr_forward.1} parent=59 // pred_fallthru
        _
    $region60: #{dsr_forward.1} parent=5 // pred_fallthru
      _
  $region6: #{dsr_forward.1} parent=0 // loop_footer
    %s17 = sadd.s32 1, %s13
  $region7: #{dsr_forward.1} parent=0 // loop_footer_branch
    %12 = sbr.rel target = $region3
  $region8: #{dsr_forward.1} parent=0 // loop_exit
    _

// kernel: custom-call.57
$region0: #{custom-call.57}
  %s0 = inlined_call_operand.vmem [shape: f32[2,1,4,4], index: 0, kind: input, shape index: {}]
  %s1 = inlined_call_operand.vmem [shape: f32[2,1,4,4], index: 1, kind: output, shape index: {}]
  $region1: #{custom-call.57} parent=0
    #allocation0 [shape = 'u8[4096]{0}', space=vmem, size = 0x1000, scoped, tag = 'operand span for operand 0']
    #allocation1 [shape = 'u8[4096]{0}', space=vmem, size = 0x1000, scoped, tag = 'packed  for operand 0']
    #allocation2 [shape = 'u8[4096]{0}', space=vmem, size = 0x1000, scoped, tag = 'operand span for operand 1']
    #allocation3 [shape = 'u8[4096]{0}', space=vmem, size = 0x1000, scoped, tag = 'packed  for operand 1']
    loop: start=0, step=1, limit=4
    $region2: #{custom-call.57} parent=1 // loop_pre_header
      _
    $region3: #{custom-call.57} parent=1 // loop_header
      %s3 = sphi 0, %s7
      %p4 = scmp.ge.s32.totalorder %s3, 4
      %s10 = sphi 0, %s36
      %s11 = sphi 0, %s32
      %s12 = sphi 0, %s28
      %s13 = sphi 0, %s24
      %s14 = sphi 0, %s10
      %s15 = sphi 0, %s11
      %s16 = sphi 0, %s12
      %s17 = sphi 0, %s13
      %s18 = sphi 0, %s14
      %s19 = sphi 0, %s15
      %s20 = sphi 0, %s16
      %s21 = sphi 0, %s17
    $region4: #{custom-call.57} parent=1 // loop_header_branch
      %6 = sbr.rel (%p4) target = $region8
    $region5: #{custom-call.57} parent=1 // loop_body
      %s8 = ssub.s32 %s3, 1
      %s9 = ssub.s32 %s3, 2
      %s22 = sadd.s32 1, %s13
      %p23 = scmp.ge.s32.totalorder %s22, 1
      %s24 = scalar_select %p23, 0, %s22
      %s25 = sadd.s32 1, %s12
      %s26 = scalar_select %p23, %s25, %s12
      %p27 = scmp.ge.s32.totalorder %s26, 1
      %s28 = scalar_select %p27, 0, %s26
      %s29 = sadd.s32 1, %s11
      %s30 = scalar_select %p27, %s29, %s11
      %p31 = scmp.ge.s32.totalorder %s30, 1
      %s32 = scalar_select %p31, 0, %s30
      %s33 = sadd.s32 1, %s10
      %s34 = scalar_select %p31, %s33, %s10
      %p35 = scmp.ge.s32.totalorder %s34, 2
      %s36 = scalar_select %p35, 0, %s34
      %p37 = scmp.le.s32.totalorder 1, %s3
      %p38 = scmp.lt.s32.totalorder %s3, 3
      %p39 = pnand %p37, %p38
      %p40 = pneg %p39
      // Predicated region
      $region9: #{custom-call.57} parent=5 // pred_check
        _
      $region10: #{custom-call.57} parent=5 // pred_check_branch
        %42 = sbr.rel (%p39) target = $region12
      $region11: #{custom-call.57} parent=5 // pred_region
        %s43 = ssub.s32 %s3, 1
      $region12: #{custom-call.57} parent=5 // pred_fallthru
        _
      %p44 = scmp.lt.s32.totalorder %s3, 2
      // Predicated region
      $region13: #{custom-call.57} parent=5 // pred_check
        %p45 = pneg %p44
      $region14: #{custom-call.57} parent=5 // pred_check_branch
        %47 = sbr.rel (%p45) target = $region16
      $region15: #{custom-call.57} parent=5 // pred_region
        %s48 = sand.u32 %s3, 1
        %s49 = sand.u32 %s3, 1
        %s50 = smul.addr %s49, 4
        %s51 = scalar_lea.vmem [#allocation1], %s50
        %s52 = sadd.s32 %s13, %s12
        %s53 = sadd.s32 %s52, %s11
        %s54 = sadd.s32 %s53, %s10
        %s55 = smul.addr %s54, 4
        %s56 = scalar_lea.vmem %s0, %s55
        // Predicated region
        $region17: #{custom-call.57} parent=15 // pred_check
          _
        $region18: #{custom-call.57} parent=15 // pred_check_branch
          %58 = sbr.rel (0) target = $region20
        $region19: #{custom-call.57} parent=15 // pred_region
          // Predicated region
          $region21: #{custom-call.57} parent=19 // pred_check
            _
          $region22: #{custom-call.57} parent=19 // pred_check_branch
            %60 = sbr.rel target = $region24
          $region23: #{custom-call.57} parent=19 // pred_region
            // Predicated region
            $region36: #{custom-call.57} parent=23 // pred_check
              _
            $region37: #{custom-call.57} parent=23 // pred_check_branch
              %76 = sbr.rel (0) target = $region39
            $region38: #{custom-call.57} parent=23 // pred_region
              %s78 = ssub.s32 16, 1
              loop: start=0, step=1, limit=1
              $region40: #{custom-call.57} parent=38 // loop_pre_header
                _
              $region41: #{custom-call.57} parent=38 // loop_header
                %s80 = sphi 0, %s84
                %p81 = scmp.ge.s32.totalorder %s80, 1
                %s85 = sphi %s56, %s56
                %s86 = sphi %s51, %s51
              $region42: #{custom-call.57} parent=38 // loop_header_branch
                %83 = sbr.rel (%p81) target = $region46
              $region43: #{custom-call.57} parent=38 // loop_body
                %v87 = vld [vmem:[%s85] sm:%s78]
                %88 = vst [vmem:[%s86] sm:%s78] %v87
              $region44: #{custom-call.57} parent=38 // loop_footer
                %s84 = sadd.s32 1, %s80
              $region45: #{custom-call.57} parent=38 // loop_footer_branch
                %79 = sbr.rel target = $region41
              $region46: #{custom-call.57} parent=38 // loop_exit
                _
            $region39: #{custom-call.57} parent=23 // pred_fallthru
              _
          $region24: #{custom-call.57} parent=19 // pred_fallthru
            _
          // Predicated region
          $region25: #{custom-call.57} parent=19 // pred_check
            _
          $region26: #{custom-call.57} parent=19 // pred_check_branch
            %62 = sbr.rel (0) target = $region28
          $region27: #{custom-call.57} parent=19 // pred_region
            %s64 = ssub.s32 16, 1
            loop: start=0, step=1, limit=1
            $region29: #{custom-call.57} parent=27 // loop_pre_header
              _
            $region30: #{custom-call.57} parent=27 // loop_header
              %s66 = sphi 0, %s70
              %p67 = scmp.ge.s32.totalorder %s66, 1
              %s71 = sphi %s56, %s56
              %s72 = sphi %s51, %s51
            $region31: #{custom-call.57} parent=27 // loop_header_branch
              %69 = sbr.rel (%p67) target = $region35
            $region32: #{custom-call.57} parent=27 // loop_body
              %v73 = vld [vmem:[%s71] sm:%s64]
              %74 = vst [vmem:[%s72] sm:%s64] %v73
            $region33: #{custom-call.57} parent=27 // loop_footer
              %s70 = sadd.s32 1, %s66
            $region34: #{custom-call.57} parent=27 // loop_footer_branch
              %65 = sbr.rel target = $region30
            $region35: #{custom-call.57} parent=27 // loop_exit
              _
          $region28: #{custom-call.57} parent=19 // pred_fallthru
            _
        $region20: #{custom-call.57} parent=15 // pred_fallthru
          _
        %89 = vnop
      $region16: #{custom-call.57} parent=5 // pred_fallthru
        _
      %p90 = scmp.le.s32.totalorder 1, %s3
      %p91 = scmp.lt.s32.totalorder %s3, 3
      %p92 = pnand %p90, %p91
      %p93 = pneg %p92
      // Predicated region
      $region47: #{custom-call.57} parent=5 // pred_check
        _
      $region48: #{custom-call.57} parent=5 // pred_check_branch
        %95 = sbr.rel (%p92) target = $region50
      $region49: #{custom-call.57} parent=5 // pred_region
        #allocation4 [shape = 'f32[4,4]{1,0}', space=vmem, size = 0x1000, scoped, tag = 'rescaled input a']
        %s96 = ssub.s32 %s3, 1
        %s97 = sand.u32 %s8, 1
        %s98 = sand.u32 %s8, 1
        %s99 = smul.addr %s98, 4
        %s100 = scalar_lea.vmem [#allocation1], %s99
        %s101 = sand.u32 %s8, 1
        %s102 = sand.u32 %s8, 1
        %s103 = smul.addr %s102, 4
        %s104 = scalar_lea.vmem [#allocation1], %s103
        %s105 = sand.u32 %s8, 1
        %s106 = sand.u32 %s8, 1
        %s107 = smul.addr %s106, 4
        %s108 = scalar_lea.vmem [#allocation3], %s107
        %s110 = sshll.u32 1, 4
        %s111 = ssub.s32 %s110, 1
        %v112 = vld [vmem:[%s104] sm:%s111]
        %113 = vst [vmem:[#allocation0] sm:%s111] %v112
        %v114 = vlaneseq
        %v115 = vand.u32 %v114, 127
        %vm116 = vcmp.lt.s32.totalorder %v115, 4
        %v117 = vlaneseq
        %v118 = vshrl.u32 %v117, 7
        %vm120 = vcmp.eq.s32.totalorder %v118, %v115
        %v121 = vld [vmem:[#allocation0] sm:$0xff]
        %v122 = vsel %vm120, %v121, 0.0
        %123 = vadd.xlane.f32.xlu0 %v122
        %v124 = vpop.xlane.xlu0 %123
        %vm125 = vcmp.ge.s32.totalorder %v118, %v115
        %vm126 = vmand %vm125, %vm116
        %v127 = vsel %vm126, %v121, 0.0
        %v128 = vrcp.pop %v124
        %v129 = vmul.f32 %v127, %v128
        %130 = vst [vmem:[#allocation4] sm:$0xff] %v129
        %v131 = vlaneseq
        %v132 = vand.u32 %v131, 127
        %v133 = vlaneseq
        %v134 = vshrl.u32 %v133, 7
        %vm136 = vcmp.eq.s32.totalorder %v132, %v134
        %v137 = vlaneseq
        %v138 = vand.u32 %v137, 127
        %vm139 = vcmp.eq.s32.totalorder %v138, 0
        %v140 = vsel %vm139, 1.0, -1.0
        %v141 = vsel %vm136, %v140, 0.0
        %s142 = scalar_lea.vmem [#allocation4], 1
        %v143 = vld [vmem:[%s142] ss:$0 sm:$0xff]
        %v144 = vxor.u32 %v143, 2147483648
        %v145 = vlaneseq
        %v146 = vand.u32 %v145, 127
        %vm147 = vcmp.eq.s32.totalorder %v146, 1
        %v148 = vmul.f32 %v144, %v141
        %149 = vadd.xlane.f32.xlu0 %v148
        %v150 = vpop.xlane.xlu0 %149
        %v151 = vsel %vm147, %v150, %v141
        %s152 = scalar_lea.vmem [#allocation4], 2
        %v153 = vld [vmem:[%s152] ss:$0 sm:$0xff]
        %v154 = vxor.u32 %v153, 2147483648
        %v155 = vlaneseq
        %v156 = vand.u32 %v155, 127
        %vm157 = vcmp.eq.s32.totalorder %v156, 2
        %v158 = vmul.f32 %v154, %v151
        %159 = vadd.xlane.f32.xlu0 %v158
        %v160 = vpop.xlane.xlu0 %159
        %v161 = vsel %vm157, %v160, %v151
        %s162 = scalar_lea.vmem [#allocation4], 3
        %v163 = vld [vmem:[%s162] ss:$0 sm:$0xff]
        %v164 = vxor.u32 %v163, 2147483648
        %v165 = vlaneseq
        %v166 = vand.u32 %v165, 127
        %vm167 = vcmp.eq.s32.totalorder %v166, 3
        %v168 = vmul.f32 %v164, %v161
        %169 = vadd.xlane.f32.xlu0 %v168
        %v170 = vpop.xlane.xlu0 %169
        %v171 = vsel %vm167, %v170, %v161
        %v172 = vrcp.pop %v124
        %v173 = vmul.f32 %v171, %v172
        %vm174 = vweird.f32 %v124
        %v175 = vsel %vm174, %v171, %v173
        %176 = vst [vmem:[#allocation2] sm:$0xff] %v175
        %s178 = sshll.u32 1, 4
        %s179 = ssub.s32 %s178, 1
        %v181 = vld [vmem:[#allocation2] sm:%s179]
        %s182 = sshll.u32 1, 4
        %s183 = ssub.s32 %s182, 1
        %184 = vst [vmem:[%s108] sm:%s183] %v181
        %s185 = sand.u32 %s8, 1
        %s186 = sand.u32 %s8, 1
        %s187 = smul.addr %s186, 4
        %s188 = scalar_lea.vmem [#allocation3], %s187
        %s189 = sadd.s32 %s17, %s16
        %s190 = sadd.s32 %s189, %s15
        %s191 = sadd.s32 %s190, %s14
        %s192 = smul.addr %s191, 4
        %s193 = scalar_lea.vmem %s1, %s192
        // Predicated region
        $region51: #{custom-call.57} parent=49 // pred_check
          _
        $region52: #{custom-call.57} parent=49 // pred_check_branch
          %195 = sbr.rel (0) target = $region54
        $region53: #{custom-call.57} parent=49 // pred_region
          // Predicated region
          $region55: #{custom-call.57} parent=53 // pred_check
            _
          $region56: #{custom-call.57} parent=53 // pred_check_branch
            %197 = sbr.rel target = $region58
          $region57: #{custom-call.57} parent=53 // pred_region
            // Predicated region
            $region70: #{custom-call.57} parent=57 // pred_check
              _
            $region71: #{custom-call.57} parent=57 // pred_check_branch
              %213 = sbr.rel (0) target = $region73
            $region72: #{custom-call.57} parent=57 // pred_region
              %s215 = ssub.s32 16, 1
              loop: start=0, step=1, limit=1
              $region74: #{custom-call.57} parent=72 // loop_pre_header
                _
              $region75: #{custom-call.57} parent=72 // loop_header
                %s217 = sphi 0, %s221
                %p218 = scmp.ge.s32.totalorder %s217, 1
                %s222 = sphi %s188, %s188
                %s223 = sphi %s193, %s193
              $region76: #{custom-call.57} parent=72 // loop_header_branch
                %220 = sbr.rel (%p218) target = $region80
              $region77: #{custom-call.57} parent=72 // loop_body
                %v224 = vld [vmem:[%s222] sm:%s215]
                %225 = vst [vmem:[%s223] sm:%s215] %v224
              $region78: #{custom-call.57} parent=72 // loop_footer
                %s221 = sadd.s32 1, %s217
              $region79: #{custom-call.57} parent=72 // loop_footer_branch
                %216 = sbr.rel target = $region75
              $region80: #{custom-call.57} parent=72 // loop_exit
                _
            $region73: #{custom-call.57} parent=57 // pred_fallthru
              _
          $region58: #{custom-call.57} parent=53 // pred_fallthru
            _
          // Predicated region
          $region59: #{custom-call.57} parent=53 // pred_check
            _
          $region60: #{custom-call.57} parent=53 // pred_check_branch
            %199 = sbr.rel (0) target = $region62
          $region61: #{custom-call.57} parent=53 // pred_region
            %s201 = ssub.s32 16, 1
            loop: start=0, step=1, limit=1
            $region63: #{custom-call.57} parent=61 // loop_pre_header
              _
            $region64: #{custom-call.57} parent=61 // loop_header
              %s203 = sphi 0, %s207
              %p204 = scmp.ge.s32.totalorder %s203, 1
              %s208 = sphi %s188, %s188
              %s209 = sphi %s193, %s193
            $region65: #{custom-call.57} parent=61 // loop_header_branch
              %206 = sbr.rel (%p204) target = $region69
            $region66: #{custom-call.57} parent=61 // loop_body
              %v210 = vld [vmem:[%s208] sm:%s201]
              %211 = vst [vmem:[%s209] sm:%s201] %v210
            $region67: #{custom-call.57} parent=61 // loop_footer
              %s207 = sadd.s32 1, %s203
            $region68: #{custom-call.57} parent=61 // loop_footer_branch
              %202 = sbr.rel target = $region64
            $region69: #{custom-call.57} parent=61 // loop_exit
              _
          $region62: #{custom-call.57} parent=53 // pred_fallthru
            _
        $region54: #{custom-call.57} parent=49 // pred_fallthru
          _
        %226 = vnop
      $region50: #{custom-call.57} parent=5 // pred_fallthru
        _
      %p227 = scmp.le.s32.totalorder 2, %s3
      // Predicated region
      $region81: #{custom-call.57} parent=5 // pred_check
        %p228 = pneg %p227
      $region82: #{custom-call.57} parent=5 // pred_check_branch
        %230 = sbr.rel (%p228) target = $region84
      $region83: #{custom-call.57} parent=5 // pred_region
        %s231 = ssub.s32 %s3, 2
        %s232 = sand.u32 %s9, 1
        %s233 = sand.u32 %s9, 1
        %s234 = smul.addr %s233, 4
        %s235 = scalar_lea.vmem [#allocation3], %s234
      $region84: #{custom-call.57} parent=5 // pred_fallthru
        _
    $region6: #{custom-call.57} parent=1 // loop_footer
      %s7 = sadd.s32 1, %s3
    $region7: #{custom-call.57} parent=1 // loop_footer_branch
      %2 = sbr.rel target = $region3
    $region8: #{custom-call.57} parent=1 // loop_exit
      _

// kernel: custom-call.23
$region0: #{custom-call.23}
  %s0 = inlined_call_operand.vmem [shape: f32[2,2,2], index: 0, kind: input, shape index: {}]
  %s1 = inlined_call_operand.vmem [shape: f32[2,2,2], index: 1, kind: input, shape index: {}]
  %s2 = inlined_call_operand.vmem [shape: f32[2,2,2], index: 2, kind: input, shape index: {}]
  %s3 = inlined_call_operand.vmem [shape: f32[2,2,2], index: 3, kind: input, shape index: {}]
  %s4 = inlined_call_operand.vmem [shape: f32[2,2], index: 4, kind: output, shape index: {0}]
  %s5 = inlined_call_operand.vmem [shape: f32[2,2], index: 5, kind: output, shape index: {1}]
  %s6 = inlined_call_operand.vmem [shape: f32[2,2,2], index: 6, kind: output, shape index: {2}]
  %s7 = inlined_call_operand.vmem [shape: f32[2,2,2], index: 7, kind: output, shape index: {3}]
  %s8 = inlined_call_operand.vmem [shape: f32[2,2,2], index: 8, kind: output, shape index: {4}]
  %s9 = inlined_call_operand.vmem [shape: f32[2,2,2], index: 9, kind: output, shape index: {5}]
  %10 = xla_tuple %s4, %s5, %s6, %s7, %s8, %s9
  $region1: #{custom-call.23} parent=0
    #allocation0 [shape = 'u8[4096]{0}', space=vmem, size = 0x1000, scoped, tag = 'operand span for operand 0']
    #allocation1 [shape = 'u8[2048]{0}', space=vmem, size = 0x800, scoped, tag = 'packed  for operand 0']
    #allocation2 [shape = 'u8[4096]{0}', space=vmem, size = 0x1000, scoped, tag = 'operand span for operand 1']
    #allocation3 [shape = 'u8[2048]{0}', space=vmem, size = 0x800, scoped, tag = 'packed  for operand 1']
    #allocation4 [shape = 'u8[4096]{0}', space=vmem, size = 0x1000, scoped, tag = 'operand span for operand 2']
    #allocation5 [shape = 'u8[2048]{0}', space=vmem, size = 0x800, scoped, tag = 'packed  for operand 2']
    #allocation6 [shape = 'u8[4096]{0}', space=vmem, size = 0x1000, scoped, tag = 'operand span for operand 3']
    #allocation7 [shape = 'u8[2048]{0}', space=vmem, size = 0x800, scoped, tag = 'packed  for operand 3']
    #allocation8 [shape = 'u8[4096]{0}', space=vmem, size = 0x1000, scoped, tag = 'operand span for operand 4']
    #allocation9 [shape = 'u8[2048]{0}', space=vmem, size = 0x800, scoped, tag = 'packed  for operand 4']
    #allocation10 [shape = 'u8[4096]{0}', space=vmem, size = 0x1000, scoped, tag = 'operand span for operand 5']
    #allocation11 [shape = 'u8[2048]{0}', space=vmem, size = 0x800, scoped, tag = 'packed  for operand 5']
    #allocation12 [shape = 'u8[4096]{0}', space=vmem, size = 0x1000, scoped, tag = 'operand span for operand 6']
    #allocation13 [shape = 'u8[2048]{0}', space=vmem, size = 0x800, scoped, tag = 'packed  for operand 6']
    #allocation14 [shape = 'u8[4096]{0}', space=vmem, size = 0x1000, scoped, tag = 'operand span for operand 7']
    #allocation15 [shape = 'u8[2048]{0}', space=vmem, size = 0x800, scoped, tag = 'packed  for operand 7']
    #allocation16 [shape = 'u8[4096]{0}', space=vmem, size = 0x1000, scoped, tag = 'operand span for operand 8']
    #allocation17 [shape = 'u8[2048]{0}', space=vmem, size = 0x800, scoped, tag = 'packed  for operand 8']
    #allocation18 [shape = 'u8[4096]{0}', space=vmem, size = 0x1000, scoped, tag = 'operand span for operand 9']
    #allocation19 [shape = 'u8[2048]{0}', space=vmem, size = 0x800, scoped, tag = 'packed  for operand 9']
    loop: start=0, step=1, limit=4
    $region2: #{custom-call.23} parent=1 // loop_pre_header
      _
    $region3: #{custom-call.23} parent=1 // loop_header
      %s12 = sphi 0, %s16
      %p13 = scmp.ge.s32.totalorder %s12, 4
      %s24 = sphi 0, %s26
      %s27 = sphi 0, %s24
      %s28 = sphi 0, %s27
      %s44 = sphi 0, %s28
      %s52 = sphi 0, %s54
      %s55 = sphi 0, %s52
      %s56 = sphi 0, %s55
      %s72 = sphi 0, %s56
    $region4: #{custom-call.23} parent=1 // loop_header_branch
      %15 = sbr.rel (%p13) target = $region8
    $region5: #{custom-call.23} parent=1 // loop_body
      %s17 = ssub.s32 %s12, 1
      %s18 = ssub.s32 %s12, 2
      %s19 = sadd.s32 %s12, 1
      %s20 = sshrl.u32 %s12, 3
      %s21 = sshrl.u32 %s19, 3
      %s22 = ssub.s32 %s20, %s21
      %p23 = scmp.eq.s32.totalorder %s22, 0
      %s25 = sadd.s32 %s24, 1
      %s26 = scalar_select %p23, %s24, %s25
      %p29 = pneg %p23
      %p30 = scmp.eq.s32.totalorder %s12, 1
      %p31 = por %p29, %p30
      %p32 = scmp.ne.s32.totalorder %s24, %s27
      %p33 = scmp.eq.s32.totalorder %s12, 0
      %p34 = por %p32, %p33
      %p35 = scmp.ne.s32.totalorder %s24, %s27
      %p36 = scmp.eq.s32.totalorder %s17, 1
      %p37 = por %p35, %p36
      %p38 = scmp.ne.s32.totalorder %s27, %s28
      %p39 = scmp.eq.s32.totalorder %s17, 0
      %p40 = por %p38, %p39
      %p41 = scmp.ne.s32.totalorder %s27, %s28
      %p42 = scmp.eq.s32.totalorder %s18, 1
      %p43 = por %p41, %p42
      %p45 = scmp.ne.s32.totalorder %s28, %s44
      %p46 = scmp.eq.s32.totalorder %s18, 0
      %p47 = por %p45, %p46
      %s48 = sshrl.u32 %s12, 3
      %s49 = sshrl.u32 %s19, 3
      %s50 = ssub.s32 %s48, %s49
      %p51 = scmp.eq.s32.totalorder %s50, 0
      %s53 = sadd.s32 %s52, 1
      %s54 = scalar_select %p51, %s52, %s53
      %p57 = pneg %p51
      %p58 = scmp.eq.s32.totalorder %s12, 1
      %p59 = por %p57, %p58
      %p60 = scmp.ne.s32.totalorder %s52, %s55
      %p61 = scmp.eq.s32.totalorder %s12, 0
      %p62 = por %p60, %p61
      %p63 = scmp.ne.s32.totalorder %s52, %s55
      %p64 = scmp.eq.s32.totalorder %s17, 1
      %p65 = por %p63, %p64
      %p66 = scmp.ne.s32.totalorder %s55, %s56
      %p67 = scmp.eq.s32.totalorder %s17, 0
      %p68 = por %p66, %p67
      %p69 = scmp.ne.s32.totalorder %s55, %s56
      %p70 = scmp.eq.s32.totalorder %s18, 1
      %p71 = por %p69, %p70
      %p73 = scmp.ne.s32.totalorder %s56, %s72
      %p74 = scmp.eq.s32.totalorder %s18, 0
      %p75 = por %p73, %p74
      %p76 = scmp.le.s32.totalorder 1, %s12
      %p77 = scmp.lt.s32.totalorder %s12, 3
      %p78 = pnand %p76, %p77
      %p79 = pneg %p78
      // Predicated region
      $region9: #{custom-call.23} parent=5 // pred_check
        _
      $region10: #{custom-call.23} parent=5 // pred_check_branch
        %81 = sbr.rel (%p78) target = $region12
      $region11: #{custom-call.23} parent=5 // pred_region
        %s82 = ssub.s32 %s12, 1
      $region12: #{custom-call.23} parent=5 // pred_fallthru
        _
      %p83 = scmp.lt.s32.totalorder %s12, 2
      // Predicated region
      $region13: #{custom-call.23} parent=5 // pred_check
        %p84 = pneg %p83
      $region14: #{custom-call.23} parent=5 // pred_check_branch
        %86 = sbr.rel (%p84) target = $region16
      $region15: #{custom-call.23} parent=5 // pred_region
        %s87 = sand.u32 %s12, 1
        %s88 = sand.u32 %s12, 1
        %s89 = smul.addr %s88, 2
        %s90 = scalar_lea.vmem [#allocation1], %s89
        %s91 = smul.addr %s12, 2
        %s92 = scalar_lea.vmem %s0, %s91
        // Predicated region
        $region17: #{custom-call.23} parent=15 // pred_check
          _
        $region18: #{custom-call.23} parent=15 // pred_check_branch
          %94 = sbr.rel (0) target = $region20
        $region19: #{custom-call.23} parent=15 // pred_region
          // Predicated region
          $region21: #{custom-call.23} parent=19 // pred_check
            _
          $region22: #{custom-call.23} parent=19 // pred_check_branch
            %96 = sbr.rel target = $region24
          $region23: #{custom-call.23} parent=19 // pred_region
            // Predicated region
            $region36: #{custom-call.23} parent=23 // pred_check
              _
            $region37: #{custom-call.23} parent=23 // pred_check_branch
              %112 = sbr.rel (0) target = $region39
            $region38: #{custom-call.23} parent=23 // pred_region
              %s114 = ssub.s32 4, 1
              loop: start=0, step=1, limit=1
              $region40: #{custom-call.23} parent=38 // loop_pre_header
                _
              $region41: #{custom-call.23} parent=38 // loop_header
                %s116 = sphi 0, %s120
                %p117 = scmp.ge.s32.totalorder %s116, 1
                %s121 = sphi %s92, %s92
                %s122 = sphi %s90, %s90
              $region42: #{custom-call.23} parent=38 // loop_header_branch
                %119 = sbr.rel (%p117) target = $region46
              $region43: #{custom-call.23} parent=38 // loop_body
                %v123 = vld [vmem:[%s121] sm:%s114]
                %124 = vst [vmem:[%s122] sm:%s114] %v123
              $region44: #{custom-call.23} parent=38 // loop_footer
                %s120 = sadd.s32 1, %s116
              $region45: #{custom-call.23} parent=38 // loop_footer_branch
                %115 = sbr.rel target = $region41
              $region46: #{custom-call.23} parent=38 // loop_exit
                _
            $region39: #{custom-call.23} parent=23 // pred_fallthru
              _
          $region24: #{custom-call.23} parent=19 // pred_fallthru
            _
          // Predicated region
          $region25: #{custom-call.23} parent=19 // pred_check
            _
          $region26: #{custom-call.23} parent=19 // pred_check_branch
            %98 = sbr.rel (0) target = $region28
          $region27: #{custom-call.23} parent=19 // pred_region
            %s100 = ssub.s32 4, 1
            loop: start=0, step=1, limit=1
            $region29: #{custom-call.23} parent=27 // loop_pre_header
              _
            $region30: #{custom-call.23} parent=27 // loop_header
              %s102 = sphi 0, %s106
              %p103 = scmp.ge.s32.totalorder %s102, 1
              %s107 = sphi %s92, %s92
              %s108 = sphi %s90, %s90
            $region31: #{custom-call.23} parent=27 // loop_header_branch
              %105 = sbr.rel (%p103) target = $region35
            $region32: #{custom-call.23} parent=27 // loop_body
              %v109 = vld [vmem:[%s107] sm:%s100]
              %110 = vst [vmem:[%s108] sm:%s100] %v109
            $region33: #{custom-call.23} parent=27 // loop_footer
              %s106 = sadd.s32 1, %s102
            $region34: #{custom-call.23} parent=27 // loop_footer_branch
              %101 = sbr.rel target = $region30
            $region35: #{custom-call.23} parent=27 // loop_exit
              _
          $region28: #{custom-call.23} parent=19 // pred_fallthru
            _
        $region20: #{custom-call.23} parent=15 // pred_fallthru
          _
        %125 = vnop
        %s126 = sand.u32 %s12, 1
        %s127 = sand.u32 %s12, 1
        %s128 = smul.addr %s127, 2
        %s129 = scalar_lea.vmem [#allocation3], %s128
        %s130 = smul.addr %s12, 2
        %s131 = scalar_lea.vmem %s1, %s130
        // Predicated region
        $region47: #{custom-call.23} parent=15 // pred_check
          _
        $region48: #{custom-call.23} parent=15 // pred_check_branch
          %133 = sbr.rel (0) target = $region50
        $region49: #{custom-call.23} parent=15 // pred_region
          // Predicated region
          $region51: #{custom-call.23} parent=49 // pred_check
            _
          $region52: #{custom-call.23} parent=49 // pred_check_branch
            %135 = sbr.rel target = $region54
          $region53: #{custom-call.23} parent=49 // pred_region
            // Predicated region
            $region66: #{custom-call.23} parent=53 // pred_check
              _
            $region67: #{custom-call.23} parent=53 // pred_check_branch
              %151 = sbr.rel (0) target = $region69
            $region68: #{custom-call.23} parent=53 // pred_region
              %s153 = ssub.s32 4, 1
              loop: start=0, step=1, limit=1
              $region70: #{custom-call.23} parent=68 // loop_pre_header
                _
              $region71: #{custom-call.23} parent=68 // loop_header
                %s155 = sphi 0, %s159
                %p156 = scmp.ge.s32.totalorder %s155, 1
                %s160 = sphi %s131, %s131
                %s161 = sphi %s129, %s129
              $region72: #{custom-call.23} parent=68 // loop_header_branch
                %158 = sbr.rel (%p156) target = $region76
              $region73: #{custom-call.23} parent=68 // loop_body
                %v162 = vld [vmem:[%s160] sm:%s153]
                %163 = vst [vmem:[%s161] sm:%s153] %v162
              $region74: #{custom-call.23} parent=68 // loop_footer
                %s159 = sadd.s32 1, %s155
              $region75: #{custom-call.23} parent=68 // loop_footer_branch
                %154 = sbr.rel target = $region71
              $region76: #{custom-call.23} parent=68 // loop_exit
                _
            $region69: #{custom-call.23} parent=53 // pred_fallthru
              _
          $region54: #{custom-call.23} parent=49 // pred_fallthru
            _
          // Predicated region
          $region55: #{custom-call.23} parent=49 // pred_check
            _
          $region56: #{custom-call.23} parent=49 // pred_check_branch
            %137 = sbr.rel (0) target = $region58
          $region57: #{custom-call.23} parent=49 // pred_region
            %s139 = ssub.s32 4, 1
            loop: start=0, step=1, limit=1
            $region59: #{custom-call.23} parent=57 // loop_pre_header
              _
            $region60: #{custom-call.23} parent=57 // loop_header
              %s141 = sphi 0, %s145
              %p142 = scmp.ge.s32.totalorder %s141, 1
              %s146 = sphi %s131, %s131
              %s147 = sphi %s129, %s129
            $region61: #{custom-call.23} parent=57 // loop_header_branch
              %144 = sbr.rel (%p142) target = $region65
            $region62: #{custom-call.23} parent=57 // loop_body
              %v148 = vld [vmem:[%s146] sm:%s139]
              %149 = vst [vmem:[%s147] sm:%s139] %v148
            $region63: #{custom-call.23} parent=57 // loop_footer
              %s145 = sadd.s32 1, %s141
            $region64: #{custom-call.23} parent=57 // loop_footer_branch
              %140 = sbr.rel target = $region60
            $region65: #{custom-call.23} parent=57 // loop_exit
              _
          $region58: #{custom-call.23} parent=49 // pred_fallthru
            _
        $region50: #{custom-call.23} parent=15 // pred_fallthru
          _
        %164 = vnop
        %s165 = sand.u32 %s12, 1
        %s166 = sand.u32 %s12, 1
        %s167 = smul.addr %s166, 2
        %s168 = scalar_lea.vmem [#allocation5], %s167
        %s169 = smul.addr %s12, 2
        %s170 = scalar_lea.vmem %s2, %s169
        // Predicated region
        $region77: #{custom-call.23} parent=15 // pred_check
          _
        $region78: #{custom-call.23} parent=15 // pred_check_branch
          %172 = sbr.rel (0) target = $region80
        $region79: #{custom-call.23} parent=15 // pred_region
          // Predicated region
          $region81: #{custom-call.23} parent=79 // pred_check
            _
          $region82: #{custom-call.23} parent=79 // pred_check_branch
            %174 = sbr.rel target = $region84
          $region83: #{custom-call.23} parent=79 // pred_region
            // Predicated region
            $region96: #{custom-call.23} parent=83 // pred_check
              _
            $region97: #{custom-call.23} parent=83 // pred_check_branch
              %190 = sbr.rel (0) target = $region99
            $region98: #{custom-call.23} parent=83 // pred_region
              %s192 = ssub.s32 4, 1
              loop: start=0, step=1, limit=1
              $region100: #{custom-call.23} parent=98 // loop_pre_header
                _
              $region101: #{custom-call.23} parent=98 // loop_header
                %s194 = sphi 0, %s198
                %p195 = scmp.ge.s32.totalorder %s194, 1
                %s199 = sphi %s170, %s170
                %s200 = sphi %s168, %s168
              $region102: #{custom-call.23} parent=98 // loop_header_branch
                %197 = sbr.rel (%p195) target = $region106
              $region103: #{custom-call.23} parent=98 // loop_body
                %v201 = vld [vmem:[%s199] sm:%s192]
                %202 = vst [vmem:[%s200] sm:%s192] %v201
              $region104: #{custom-call.23} parent=98 // loop_footer
                %s198 = sadd.s32 1, %s194
              $region105: #{custom-call.23} parent=98 // loop_footer_branch
                %193 = sbr.rel target = $region101
              $region106: #{custom-call.23} parent=98 // loop_exit
                _
            $region99: #{custom-call.23} parent=83 // pred_fallthru
              _
          $region84: #{custom-call.23} parent=79 // pred_fallthru
            _
          // Predicated region
          $region85: #{custom-call.23} parent=79 // pred_check
            _
          $region86: #{custom-call.23} parent=79 // pred_check_branch
            %176 = sbr.rel (0) target = $region88
          $region87: #{custom-call.23} parent=79 // pred_region
            %s178 = ssub.s32 4, 1
            loop: start=0, step=1, limit=1
            $region89: #{custom-call.23} parent=87 // loop_pre_header
              _
            $region90: #{custom-call.23} parent=87 // loop_header
              %s180 = sphi 0, %s184
              %p181 = scmp.ge.s32.totalorder %s180, 1
              %s185 = sphi %s170, %s170
              %s186 = sphi %s168, %s168
            $region91: #{custom-call.23} parent=87 // loop_header_branch
              %183 = sbr.rel (%p181) target = $region95
            $region92: #{custom-call.23} parent=87 // loop_body
              %v187 = vld [vmem:[%s185] sm:%s178]
              %188 = vst [vmem:[%s186] sm:%s178] %v187
            $region93: #{custom-call.23} parent=87 // loop_footer
              %s184 = sadd.s32 1, %s180
            $region94: #{custom-call.23} parent=87 // loop_footer_branch
              %179 = sbr.rel target = $region90
            $region95: #{custom-call.23} parent=87 // loop_exit
              _
          $region88: #{custom-call.23} parent=79 // pred_fallthru
            _
        $region80: #{custom-call.23} parent=15 // pred_fallthru
          _
        %203 = vnop
        %s204 = sand.u32 %s12, 1
        %s205 = sand.u32 %s12, 1
        %s206 = smul.addr %s205, 2
        %s207 = scalar_lea.vmem [#allocation7], %s206
        %s208 = smul.addr %s12, 2
        %s209 = scalar_lea.vmem %s3, %s208
        // Predicated region
        $region107: #{custom-call.23} parent=15 // pred_check
          _
        $region108: #{custom-call.23} parent=15 // pred_check_branch
          %211 = sbr.rel (0) target = $region110
        $region109: #{custom-call.23} parent=15 // pred_region
          // Predicated region
          $region111: #{custom-call.23} parent=109 // pred_check
            _
          $region112: #{custom-call.23} parent=109 // pred_check_branch
            %213 = sbr.rel target = $region114
          $region113: #{custom-call.23} parent=109 // pred_region
            // Predicated region
            $region126: #{custom-call.23} parent=113 // pred_check
              _
            $region127: #{custom-call.23} parent=113 // pred_check_branch
              %229 = sbr.rel (0) target = $region129
            $region128: #{custom-call.23} parent=113 // pred_region
              %s231 = ssub.s32 4, 1
              loop: start=0, step=1, limit=1
              $region130: #{custom-call.23} parent=128 // loop_pre_header
                _
              $region131: #{custom-call.23} parent=128 // loop_header
                %s233 = sphi 0, %s237
                %p234 = scmp.ge.s32.totalorder %s233, 1
                %s238 = sphi %s209, %s209
                %s239 = sphi %s207, %s207
              $region132: #{custom-call.23} parent=128 // loop_header_branch
                %236 = sbr.rel (%p234) target = $region136
              $region133: #{custom-call.23} parent=128 // loop_body
                %v240 = vld [vmem:[%s238] sm:%s231]
                %241 = vst [vmem:[%s239] sm:%s231] %v240
              $region134: #{custom-call.23} parent=128 // loop_footer
                %s237 = sadd.s32 1, %s233
              $region135: #{custom-call.23} parent=128 // loop_footer_branch
                %232 = sbr.rel target = $region131
              $region136: #{custom-call.23} parent=128 // loop_exit
                _
            $region129: #{custom-call.23} parent=113 // pred_fallthru
              _
          $region114: #{custom-call.23} parent=109 // pred_fallthru
            _
          // Predicated region
          $region115: #{custom-call.23} parent=109 // pred_check
            _
          $region116: #{custom-call.23} parent=109 // pred_check_branch
            %215 = sbr.rel (0) target = $region118
          $region117: #{custom-call.23} parent=109 // pred_region
            %s217 = ssub.s32 4, 1
            loop: start=0, step=1, limit=1
            $region119: #{custom-call.23} parent=117 // loop_pre_header
              _
            $region120: #{custom-call.23} parent=117 // loop_header
              %s219 = sphi 0, %s223
              %p220 = scmp.ge.s32.totalorder %s219, 1
              %s224 = sphi %s209, %s209
              %s225 = sphi %s207, %s207
            $region121: #{custom-call.23} parent=117 // loop_header_branch
              %222 = sbr.rel (%p220) target = $region125
            $region122: #{custom-call.23} parent=117 // loop_body
              %v226 = vld [vmem:[%s224] sm:%s217]
              %227 = vst [vmem:[%s225] sm:%s217] %v226
            $region123: #{custom-call.23} parent=117 // loop_footer
              %s223 = sadd.s32 1, %s219
            $region124: #{custom-call.23} parent=117 // loop_footer_branch
              %218 = sbr.rel target = $region120
            $region125: #{custom-call.23} parent=117 // loop_exit
              _
          $region118: #{custom-call.23} parent=109 // pred_fallthru
            _
        $region110: #{custom-call.23} parent=15 // pred_fallthru
          _
        %242 = vnop
      $region16: #{custom-call.23} parent=5 // pred_fallthru
        _
      %p243 = scmp.le.s32.totalorder 1, %s12
      %p244 = scmp.lt.s32.totalorder %s12, 3
      %p245 = pnand %p243, %p244
      %p246 = pneg %p245
      // Predicated region
      $region137: #{custom-call.23} parent=5 // pred_check
        _
      $region138: #{custom-call.23} parent=5 // pred_check_branch
        %248 = sbr.rel (%p245) target = $region140
      $region139: #{custom-call.23} parent=5 // pred_region
        #allocation20 [shape = 'f32[2,2]{1,0}', space=vmem, size = 0x1000, scoped, tag = 'a top-left matrix']
        #allocation21 [shape = 'f32[2,2]{1,0}', space=vmem, size = 0x1000, scoped, tag = 'a top-right matrix']
        #allocation22 [shape = 'f32[2,2]{1,0}', space=vmem, size = 0x1000, scoped, tag = 'a bottom-left matrix']
        #allocation23 [shape = 'f32[2,2]{1,0}', space=vmem, size = 0x1000, scoped, tag = 'a bottom-right matrix']
        %s249 = ssub.s32 %s12, 1
        %s250 = sand.u32 %s17, 1
        %s251 = sand.u32 %s17, 1
        %s252 = smul.addr %s251, 2
        %s253 = scalar_lea.vmem [#allocation1], %s252
        %s254 = sand.u32 %s17, 1
        %s255 = sand.u32 %s17, 1
        %s256 = smul.addr %s255, 2
        %s257 = scalar_lea.vmem [#allocation3], %s256
        %s258 = sand.u32 %s17, 1
        %s259 = sand.u32 %s17, 1
        %s260 = smul.addr %s259, 2
        %s261 = scalar_lea.vmem [#allocation5], %s260
        %s262 = sand.u32 %s17, 1
        %s263 = sand.u32 %s17, 1
        %s264 = smul.addr %s263, 2
        %s265 = scalar_lea.vmem [#allocation7], %s264
        %s266 = sand.u32 %s17, 1
        %s267 = sand.u32 %s17, 1
        %s268 = smul.addr %s267, 2
        %s269 = scalar_lea.vmem [#allocation1], %s268
        %s270 = sand.u32 %s17, 1
        %s271 = sand.u32 %s17, 1
        %s272 = smul.addr %s271, 2
        %s273 = scalar_lea.vmem [#allocation3], %s272
        %s274 = sand.u32 %s17, 1
        %s275 = sand.u32 %s17, 1
        %s276 = smul.addr %s275, 2
        %s277 = scalar_lea.vmem [#allocation5], %s276
        %s278 = sand.u32 %s17, 1
        %s279 = sand.u32 %s17, 1
        %s280 = smul.addr %s279, 2
        %s281 = scalar_lea.vmem [#allocation7], %s280
        %p282 = pneg %p40
        %p283 = pneg %p37
        %s284 = sand.u32 %s27, 1
        %s285 = sand.u32 %s27, 1
        %s286 = smul.addr %s285, 2
        %s287 = scalar_lea.vmem [#allocation9], %s286
        %p288 = pneg %p68
        %p289 = pneg %p65
        %s290 = sand.u32 %s55, 1
        %s291 = sand.u32 %s55, 1
        %s292 = smul.addr %s291, 2
        %s293 = scalar_lea.vmem [#allocation11], %s292
        %s294 = sand.u32 %s17, 1
        %s295 = sand.u32 %s17, 1
        %s296 = smul.addr %s295, 2
        %s297 = scalar_lea.vmem [#allocation13], %s296
        %s298 = sand.u32 %s17, 1
        %s299 = sand.u32 %s17, 1
        %s300 = smul.addr %s299, 2
        %s301 = scalar_lea.vmem [#allocation15], %s300
        %s302 = sand.u32 %s17, 1
        %s303 = sand.u32 %s17, 1
        %s304 = smul.addr %s303, 2
        %s305 = scalar_lea.vmem [#allocation17], %s304
        %s306 = sand.u32 %s17, 1
        %s307 = sand.u32 %s17, 1
        %s308 = smul.addr %s307, 2
        %s309 = scalar_lea.vmem [#allocation19], %s308
        %s311 = sshll.u32 1, 2
        %s312 = ssub.s32 %s311, 1
        %v313 = vld [vmem:[%s269] sm:%s312]
        %314 = vst [vmem:[#allocation0] sm:%s312] %v313
        %s316 = sshll.u32 1, 2
        %s317 = ssub.s32 %s316, 1
        %v318 = vld [vmem:[%s273] sm:%s317]
        %319 = vst [vmem:[#allocation2] sm:%s317] %v318
        %s321 = sshll.u32 1, 2
        %s322 = ssub.s32 %s321, 1
        %v323 = vld [vmem:[%s277] sm:%s322]
        %324 = vst [vmem:[#allocation4] sm:%s322] %v323
        %s326 = sshll.u32 1, 2
        %s327 = ssub.s32 %s326, 1
        %v328 = vld [vmem:[%s281] sm:%s327]
        %329 = vst [vmem:[#allocation6] sm:%s327] %v328
        %s330 = sshrl.u32 %s17, 3
        %s331 = sshrl.u32 %s17, 3
        %s332 = smov [#allocation20]
        %v333 = vld [vmem:[#allocation0] sm:$0xff]
        %334 = vst [vmem:[%s332] sm:$0xff] %v333
        %s335 = smov [#allocation21]
        %v336 = vld [vmem:[#allocation2] sm:$0xff]
        %337 = vst [vmem:[%s335] sm:$0xff] %v336
        %s338 = smov [#allocation22]
        %v339 = vld [vmem:[#allocation4] sm:$0xff]
        %340 = vst [vmem:[%s338] sm:$0xff] %v339
        %s341 = smov [#allocation23]
        %v342 = vld [vmem:[#allocation6] sm:$0xff]
        %343 = vst [vmem:[%s341] sm:$0xff] %v342
        %344 = vst [vmem:[#allocation12] sm:$0xff] 0.0
        %345 = vst [vmem:[#allocation14] sm:$0xff] 0.0
        %346 = vst [vmem:[#allocation16] sm:$0xff] 0.0
        %347 = vst [vmem:[#allocation18] sm:$0xff] 0.0
        %s348 = smov [#allocation12]
        %v349 = vlaneseq
        %v350 = vand.u32 %v349, 127
        %v351 = vmov %v350
        %v352 = vlaneseq
        %v353 = vshrl.u32 %v352, 7
        %v354 = vmov %v353
        %v355 = vld [vmem:[%s348] sm:$0x3]
        %vm358 = vcmp.eq.s32.totalorder %v354, %v351
        %v359 = vsel %vm358, 1.0, %v355
        %360 = vst [vmem:[%s348] sm:$0x3] %v359
        %s361 = smov [#allocation18]
        %v362 = vlaneseq
        %v363 = vand.u32 %v362, 127
        %v364 = vmov %v363
        %v365 = vlaneseq
        %v366 = vshrl.u32 %v365, 7
        %v367 = vmov %v366
        %v368 = vld [vmem:[%s361] sm:$0x3]
        %vm371 = vcmp.eq.s32.totalorder %v367, %v364
        %v372 = vsel %vm371, 1.0, %v368
        %373 = vst [vmem:[%s361] sm:$0x3] %v372
        // While loop
        $region141: #{custom-call.23} parent=139 // loop_pre_header
          _
        $region142: #{custom-call.23} parent=139 // loop_header
          %s375 = sphi 0, %s917
          %v376 = vlaneseq
          %v377 = vand.u32 %v376, 127
          %v378 = vmov %v377
          %v379 = vlaneseq
          %v380 = vshrl.u32 %v379, 7
          %v381 = vmov %v380
          %s382 = smov [#allocation20]
          %v383 = vlaneseq
          %v384 = vand.u32 %v383, 127
          %vm385 = vcmp.ge.s32.totalorder %v384, 0
          %vm386 = vcmp.lt.s32.totalorder %v384, 2
          %vm387 = vmand %vm385, %vm386
          %v388 = vld [vmem:[%s382] sm:$0x3]
          %v389 = vsel %vm387, %v388, 0.0
          %v390 = vmul.f32 %v389, %v389
          %vm393 = vcmp.eq.s32.totalorder %v381, %v378
          %v394 = vsel %vm393, 0.0, %v390
          %v395 = vlaneseq
          %v396 = vand.u32 %v395, 127
          %v397 = vmov %v396
          %v398 = vlaneseq
          %v399 = vshrl.u32 %v398, 7
          %v400 = vmov %v399
          %s401 = smov [#allocation21]
          %v402 = vlaneseq
          %v403 = vand.u32 %v402, 127
          %vm404 = vcmp.ge.s32.totalorder %v403, 0
          %vm405 = vcmp.lt.s32.totalorder %v403, 2
          %vm406 = vmand %vm404, %vm405
          %v407 = vld [vmem:[%s401] sm:$0x3]
          %v408 = vsel %vm406, %v407, 0.0
          %v409 = vmul.f32 %v408, %v408
          %v410 = vadd.f32 %v394, %v409
          %v411 = vadd.f32 %v390, %v409
          %v412 = vlaneseq
          %v413 = vand.u32 %v412, 127
          %v414 = vmov %v413
          %v415 = vlaneseq
          %v416 = vshrl.u32 %v415, 7
          %v417 = vmov %v416
          %s418 = smov [#allocation22]
          %v419 = vlaneseq
          %v420 = vand.u32 %v419, 127
          %vm421 = vcmp.ge.s32.totalorder %v420, 0
          %vm422 = vcmp.lt.s32.totalorder %v420, 2
          %vm423 = vmand %vm421, %vm422
          %v424 = vld [vmem:[%s418] sm:$0x3]
          %v425 = vsel %vm423, %v424, 0.0
          %v426 = vmul.f32 %v425, %v425
          %v427 = vadd.f32 %v410, %v426
          %v428 = vadd.f32 %v411, %v426
          %v429 = vlaneseq
          %v430 = vand.u32 %v429, 127
          %v431 = vmov %v430
          %v432 = vlaneseq
          %v433 = vshrl.u32 %v432, 7
          %v434 = vmov %v433
          %s435 = smov [#allocation23]
          %v436 = vlaneseq
          %v437 = vand.u32 %v436, 127
          %vm438 = vcmp.ge.s32.totalorder %v437, 0
          %vm439 = vcmp.lt.s32.totalorder %v437, 2
          %vm440 = vmand %vm438, %vm439
          %v441 = vld [vmem:[%s435] sm:$0x3]
          %v442 = vsel %vm440, %v441, 0.0
          %v443 = vmul.f32 %v442, %v442
          %vm446 = vcmp.eq.s32.totalorder %v434, %v431
          %v447 = vsel %vm446, 0.0, %v443
          %v448 = vadd.f32 %v427, %v447
          %v449 = vadd.f32 %v428, %v443
          %450 = vadd.xlane.f32.xlu0 %v449
          %v451 = vpop.xlane.xlu0 %450
          %v452 = vrot.slane %v451, 4
          %v453 = vadd.f32 %v451, %v452
          %v454 = vrot.slane %v453, 2
          %v455 = vadd.f32 %v453, %v454
          %v456 = vrot.slane %v455, 1
          %v457 = vadd.f32 %v455, %v456
          %458 = vadd.xlane.f32.xlu0 %v448
          %v459 = vpop.xlane.xlu0 %458
          %v460 = vrot.slane %v459, 4
          %v461 = vadd.f32 %v459, %v460
          %v462 = vrot.slane %v461, 2
          %v463 = vadd.f32 %v461, %v462
          %v464 = vrot.slane %v463, 1
          %v465 = vadd.f32 %v463, %v464
          %s466 = vtos %v465
          %s467 = vtos %v457
          %s468 = smul.f32 1e-10, %s467
          %p469 = scmp.le.f32.partialorder %s466, %s468
          %p470 = scmp.ge.s32.totalorder %s375, 15
          %p471 = por %p469, %p470
        $region143: #{custom-call.23} parent=139 // loop_header_branch
          %919 = sbr.rel (%p471) target = $region147
        $region144: #{custom-call.23} parent=139 // loop_body
          loop: start=0, step=1, limit=3
          $region148: #{custom-call.23} parent=144 // loop_pre_header
            _
          $region149: #{custom-call.23} parent=144 // loop_header
            %s473 = sphi 0, %s477
            %p474 = scmp.ge.s32.totalorder %s473, 3
          $region150: #{custom-call.23} parent=144 // loop_header_branch
            %476 = sbr.rel (%p474) target = $region154
          $region151: #{custom-call.23} parent=144 // loop_body
            #allocation24 [shape = 'f32[1024]{0}', space=vmem, size = 0x1000, scoped, tag = 'a_tl_diag vmem']
            #allocation25 [shape = 'f32[1024]{0}', space=vmem, size = 0x1000, scoped, tag = 'a_tr_diag vmem']
            #allocation26 [shape = 'f32[1024]{0}', space=vmem, size = 0x1000, scoped, tag = 'a_br_diag vmem']
            #allocation27 [shape = 'f32[1024]{0}', space=vmem, size = 0x1000, scoped, tag = 'rt1 vmem']
            #allocation28 [shape = 'f32[1024]{0}', space=vmem, size = 0x1000, scoped, tag = 'rt2 vmem']
            #allocation29 [shape = 'f32[1024]{0}', space=vmem, size = 0x1000, scoped, tag = 'c vmem']
            #allocation30 [shape = 'f32[1024]{0}', space=vmem, size = 0x1000, scoped, tag = 's vmem']
            #allocation31 [shape = 'f32[4096]{0}', space=vmem, size = 0x4000, scoped, tag = 'c broadcast']
            #allocation32 [shape = 'f32[4096]{0}', space=vmem, size = 0x4000, scoped, tag = 's broadcast']
            %s478 = smov [#allocation20]
            %s479 = smov [#allocation24]
            %v480 = vlaneseq
            %v481 = vand.u32 %v480, 127
            %v482 = vmov %v481
            %v483 = vlaneseq
            %v484 = vshrl.u32 %v483, 7
            %v485 = vmov %v484
            %v486 = vld [vmem:[%s478] sm:$0x3]
            %vm489 = vcmp.eq.s32.totalorder %v485, %v482
            %v490 = vsel %vm489, %v486, 0.0
            %v491 = vrot.slane %v490, 4
            %v492 = vadd.f32 %v490, %v491
            %v493 = vrot.slane %v492, 2
            %v494 = vadd.f32 %v492, %v493
            %v495 = vrot.slane %v494, 1
            %v496 = vadd.f32 %v494, %v495
            %497 = vst [vmem:[%s479] sm:$0x1] %v496
            %s498 = smov [#allocation21]
            %s499 = smov [#allocation25]
            %v500 = vlaneseq
            %v501 = vand.u32 %v500, 127
            %v502 = vmov %v501
            %v503 = vlaneseq
            %v504 = vshrl.u32 %v503, 7
            %v505 = vmov %v504
            %v506 = vld [vmem:[%s498] sm:$0x3]
            %vm509 = vcmp.eq.s32.totalorder %v505, %v502
            %v510 = vsel %vm509, %v506, 0.0
            %v511 = vrot.slane %v510, 4
            %v512 = vadd.f32 %v510, %v511
            %v513 = vrot.slane %v512, 2
            %v514 = vadd.f32 %v512, %v513
            %v515 = vrot.slane %v514, 1
            %v516 = vadd.f32 %v514, %v515
            %517 = vst [vmem:[%s499] sm:$0x1] %v516
            %s518 = smov [#allocation23]
            %s519 = smov [#allocation26]
            %v520 = vlaneseq
            %v521 = vand.u32 %v520, 127
            %v522 = vmov %v521
            %v523 = vlaneseq
            %v524 = vshrl.u32 %v523, 7
            %v525 = vmov %v524
            %v526 = vld [vmem:[%s518] sm:$0x3]
            %vm529 = vcmp.eq.s32.totalorder %v525, %v522
            %v530 = vsel %vm529, %v526, 0.0
            %v531 = vrot.slane %v530, 4
            %v532 = vadd.f32 %v530, %v531
            %v533 = vrot.slane %v532, 2
            %v534 = vadd.f32 %v532, %v533
            %v535 = vrot.slane %v534, 1
            %v536 = vadd.f32 %v534, %v535
            %537 = vst [vmem:[%s519] sm:$0x1] %v536
            %s538 = smov [#allocation29]
            %s539 = smov [#allocation30]
            %s540 = smov [#allocation24]
            %v541 = vld [vmem:[%s540] sm:$0xff]
            %s542 = smov [#allocation25]
            %v543 = vld [vmem:[%s542] sm:$0xff]
            %s544 = smov [#allocation26]
            %v545 = vld [vmem:[%s544] sm:$0xff]
            %v546 = vsub.f32 %v545, %v541
            %v547 = vmul.f32 2.0, %v543
            %v548 = vrcp.pop %v547
            %v549 = vmul.f32 %v546, %v548
            %vm550 = vcmp.ge.f32.partialorder %v549, 0.0
            %v551 = vmul.f32 %v549, %v549
            %v552 = vadd.f32 1.0, %v551
            %v553 = vrsqrt.pop %v552
            %v554 = vmul.f32 %v552, %v553
            %vm555 = vcmp.eq.f32.partialorder %v552, inf
            %v556 = vsel %vm555, %v552, %v554
            %vm557 = vcmp.eq.f32.partialorder %v552, 0.0
            %v558 = vand.u32 %v552, 2147483648
            %v559 = vsel %vm557, %v558, %v556
            %v560 = vxor.u32 %v559, 2147483648
            %v561 = vsel %vm550, %v559, %v560
            %v562 = vadd.f32 %v549, %v561
            %v563 = vrcp.pop %v562
            %v564 = vand.u32 2147483647, %v541
            %v565 = vand.u32 2147483647, %v543
            %v566 = vand.u32 2147483647, %v545
            %v567 = vmin.f32 %v564, %v566
            %v568 = vmul.f32 1.1920929e-08, %v567
            %vm569 = vcmp.le.f32.partialorder %v565, %v568
            %v570 = vsel %vm569, 0.0, %v563
            %v571 = vmul.f32 %v570, %v570
            %v572 = vadd.f32 1.0, %v571
            %v573 = vrsqrt.pop %v572
            %v574 = vmul.f32 %v570, %v573
            %v575 = vmul.f32 %v570, %v543
            %v576 = vsub.f32 %v541, %v575
            %v577 = vmul.f32 %v570, %v543
            %v578 = vadd.f32 %v545, %v577
            %s579 = smov [#allocation27]
            %580 = vst [vmem:[%s579] sm:$0xff] %v576
            %s581 = smov [#allocation28]
            %582 = vst [vmem:[%s581] sm:$0xff] %v578
            %s583 = smov %s538
            %584 = vst [vmem:[%s583] sm:$0xff] %v573
            %s585 = smov %s539
            %586 = vst [vmem:[%s585] sm:$0xff] %v574
            %s587 = smov [#allocation29]
            %v588 = vld [vmem:[%s587] ss:$0 sm:$0xff]
            %v589 = vlaneseq
            %v590 = vand.u32 %v589, 127
            %v591 = vmov %v590
            %v592 = vlaneseq
            %v593 = vshrl.u32 %v592, 7
            %v594 = vmov %v593
            %vm596 = vcmp.eq.s32.totalorder %v594, %v591
            %v597 = vsel %vm596, %v588, 0.0
            %598 = vadd.xlane.f32.xlu0 %v597
            %v599 = vpop.xlane.xlu0 %598
            %s600 = smov [#allocation31]
            %601 = vst [vmem:[%s600] sm:$0xff] %v599
            %s602 = smov [#allocation30]
            %v603 = vld [vmem:[%s602] ss:$0 sm:$0xff]
            %v604 = vlaneseq
            %v605 = vand.u32 %v604, 127
            %v606 = vmov %v605
            %v607 = vlaneseq
            %v608 = vshrl.u32 %v607, 7
            %v609 = vmov %v608
            %vm611 = vcmp.eq.s32.totalorder %v609, %v606
            %v612 = vsel %vm611, %v603, 0.0
            %613 = vadd.xlane.f32.xlu0 %v612
            %v614 = vpop.xlane.xlu0 %613
            %s615 = smov [#allocation32]
            %616 = vst [vmem:[%s615] sm:$0xff] %v614
            %s617 = smov [#allocation31]
            %v618 = vld [vmem:[%s617] sm:$0xff]
            %s619 = smov [#allocation32]
            %v620 = vld [vmem:[%s619] sm:$0xff]
            %s621 = smov [#allocation20]
            %s622 = smov [#allocation21]
            %s623 = smov [#allocation22]
            %s624 = smov [#allocation23]
            %v625 = vld [vmem:[%s621] sm:$0x3]
            %v626 = vld [vmem:[%s622] sm:$0x3]
            %v627 = vld [vmem:[%s623] sm:$0x3]
            %v628 = vld [vmem:[%s624] sm:$0x3]
            %v629 = vmul.f32 %v618, %v625
            %v630 = vmul.f32 %v620, %v627
            %v631 = vsub.f32 %v629, %v630
            %v632 = vmul.f32 %v618, %v626
            %v633 = vmul.f32 %v620, %v628
            %v634 = vsub.f32 %v632, %v633
            %v635 = vmul.f32 %v620, %v625
            %v636 = vmul.f32 %v618, %v627
            %v637 = vadd.f32 %v635, %v636
            %v638 = vmul.f32 %v620, %v626
            %v639 = vmul.f32 %v618, %v628
            %v640 = vadd.f32 %v638, %v639
            %641 = vst [vmem:[%s621] sm:$0x3] %v631
            %642 = vst [vmem:[%s622] sm:$0x3] %v634
            %643 = vst [vmem:[%s623] sm:$0x3] %v637
            %644 = vst [vmem:[%s624] sm:$0x3] %v640
            %s645 = smov [#allocation29]
            %v646 = vld [vmem:[%s645] ss:$0 sm:$0xff]
            %s647 = smov [#allocation30]
            %v648 = vld [vmem:[%s647] ss:$0 sm:$0xff]
            %s649 = smov [#allocation20]
            %s650 = smov [#allocation21]
            %s651 = smov [#allocation22]
            %s652 = smov [#allocation23]
            %v653 = vld [vmem:[%s649] sm:$0x3]
            %v654 = vld [vmem:[%s650] sm:$0x3]
            %v655 = vld [vmem:[%s651] sm:$0x3]
            %v656 = vld [vmem:[%s652] sm:$0x3]
            %v657 = vmul.f32 %v646, %v653
            %v658 = vmul.f32 %v648, %v654
            %v659 = vsub.f32 %v657, %v658
            %v660 = vmul.f32 %v648, %v653
            %v661 = vmul.f32 %v646, %v654
            %v662 = vadd.f32 %v660, %v661
            %v663 = vmul.f32 %v646, %v655
            %v664 = vmul.f32 %v648, %v656
            %v665 = vsub.f32 %v663, %v664
            %v666 = vmul.f32 %v648, %v655
            %v667 = vmul.f32 %v646, %v656
            %v668 = vadd.f32 %v666, %v667
            %669 = vst [vmem:[%s649] sm:$0x3] %v659
            %670 = vst [vmem:[%s650] sm:$0x3] %v662
            %671 = vst [vmem:[%s651] sm:$0x3] %v665
            %672 = vst [vmem:[%s652] sm:$0x3] %v668
            %s673 = smov [#allocation20]
            %s674 = smov [#allocation27]
            %v675 = vlaneseq
            %v676 = vand.u32 %v675, 127
            %v677 = vmov %v676
            %v678 = vlaneseq
            %v679 = vshrl.u32 %v678, 7
            %v680 = vmov %v679
            %v681 = vld [vmem:[%s674] ss:$0 sm:$0xff]
            %v682 = vld [vmem:[%s673] sm:$0x3]
            %vm685 = vcmp.eq.s32.totalorder %v680, %v677
            %v686 = vsel %vm685, %v681, %v682
            %687 = vst [vmem:[%s673] sm:$0x3] %v686
            %s688 = smov [#allocation21]
            %v689 = vlaneseq
            %v690 = vand.u32 %v689, 127
            %v691 = vmov %v690
            %v692 = vlaneseq
            %v693 = vshrl.u32 %v692, 7
            %v694 = vmov %v693
            %v695 = vld [vmem:[%s688] sm:$0x3]
            %vm698 = vcmp.eq.s32.totalorder %v694, %v691
            %v699 = vsel %vm698, 0.0, %v695
            %700 = vst [vmem:[%s688] sm:$0x3] %v699
            %s701 = smov [#allocation22]
            %v702 = vlaneseq
            %v703 = vand.u32 %v702, 127
            %v704 = vmov %v703
            %v705 = vlaneseq
            %v706 = vshrl.u32 %v705, 7
            %v707 = vmov %v706
            %v708 = vld [vmem:[%s701] sm:$0x3]
            %vm711 = vcmp.eq.s32.totalorder %v707, %v704
            %v712 = vsel %vm711, 0.0, %v708
            %713 = vst [vmem:[%s701] sm:$0x3] %v712
            %s714 = smov [#allocation23]
            %s715 = smov [#allocation28]
            %v716 = vlaneseq
            %v717 = vand.u32 %v716, 127
            %v718 = vmov %v717
            %v719 = vlaneseq
            %v720 = vshrl.u32 %v719, 7
            %v721 = vmov %v720
            %v722 = vld [vmem:[%s715] ss:$0 sm:$0xff]
            %v723 = vld [vmem:[%s714] sm:$0x3]
            %vm726 = vcmp.eq.s32.totalorder %v721, %v718
            %v727 = vsel %vm726, %v722, %v723
            %728 = vst [vmem:[%s714] sm:$0x3] %v727
            %s729 = smov [#allocation20]
            %s730 = smov [#allocation21]
            %v731 = vld [vmem:[%s730] sm:$0x3]
            %732 = vrot.lane.b32.xlu0 %v731, 1
            %v733 = vpop.permute.xlu0 %732
            %v734 = vld [vmem:[%s729] sm:$0x3]
            %v735 = vld [vmem:[%s729] sm:$0x3]
            %736 = vrot.lane.b32.xlu0 %v735, 1
            %v737 = vpop.permute.xlu0 %736
            %v738 = vlaneseq
            %v739 = vand.u32 %v738, 127
            %vm740 = vcmp.eq.s32.totalorder %v739, 0
            %v741 = vsel %vm740, %v735, %v737
            %v742 = vlaneseq
            %v743 = vand.u32 %v742, 127
            %vm744 = vcmp.eq.s32.totalorder %v743, 1
            %v745 = vsel %vm744, %v733, %v741
            %v746 = vlaneseq
            %v747 = vand.u32 %v746, 127
            %vm748 = vcmp.ge.s32.totalorder %v747, 0
            %vm749 = vcmp.lt.s32.totalorder %v747, 2
            %vm750 = vmand %vm748, %vm749
            %v751 = vsel %vm750, %v745, 0.0
            %v752 = vld [vmem:[%s730] sm:$0x3]
            %753 = vrot.lane.b32.xlu0 %v752, 127
            %v754 = vpop.permute.xlu0 %753
            %v755 = vlaneseq
            %v756 = vand.u32 %v755, 127
            %vm757 = vcmp.eq.s32.totalorder %v756, 1
            %v758 = vsel %vm757, %v734, %v754
            %759 = vst [vmem:[%s729] sm:$0x3] %v751
            %760 = vst [vmem:[%s730] sm:$0x3] %v758
            %s761 = smov [#allocation22]
            %s762 = smov [#allocation23]
            %v763 = vld [vmem:[%s762] sm:$0x3]
            %764 = vrot.lane.b32.xlu0 %v763, 1
            %v765 = vpop.permute.xlu0 %764
            %v766 = vld [vmem:[%s761] sm:$0x3]
            %v767 = vld [vmem:[%s761] sm:$0x3]
            %768 = vrot.lane.b32.xlu0 %v767, 1
            %v769 = vpop.permute.xlu0 %768
            %v770 = vlaneseq
            %v771 = vand.u32 %v770, 127
            %vm772 = vcmp.eq.s32.totalorder %v771, 0
            %v773 = vsel %vm772, %v767, %v769
            %v774 = vlaneseq
            %v775 = vand.u32 %v774, 127
            %vm776 = vcmp.eq.s32.totalorder %v775, 1
            %v777 = vsel %vm776, %v765, %v773
            %v778 = vlaneseq
            %v779 = vand.u32 %v778, 127
            %vm780 = vcmp.ge.s32.totalorder %v779, 0
            %vm781 = vcmp.lt.s32.totalorder %v779, 2
            %vm782 = vmand %vm780, %vm781
            %v783 = vsel %vm782, %v777, 0.0
            %v784 = vld [vmem:[%s762] sm:$0x3]
            %785 = vrot.lane.b32.xlu0 %v784, 127
            %v786 = vpop.permute.xlu0 %785
            %v787 = vlaneseq
            %v788 = vand.u32 %v787, 127
            %vm789 = vcmp.eq.s32.totalorder %v788, 1
            %v790 = vsel %vm789, %v766, %v786
            %791 = vst [vmem:[%s761] sm:$0x3] %v783
            %792 = vst [vmem:[%s762] sm:$0x3] %v790
            %s793 = smov [#allocation20]
            %s794 = smov [#allocation22]
            %v795 = vld [vmem:[%s793] ss:$0 sm:$0xff]
            %s797 = scalar_lea.vmem %s793, 4294967295
            %v798 = vld [vmem:[%s797] sm:$0x2]
            %v799 = vlaneseq
            %v800 = vshrl.u32 %v799, 7
            %vm801 = vcmp.eq.s32.totalorder %v800, 0
            %v802 = vsel %vm801, %v795, %v798
            %s803 = scalar_lea.vmem %s793, 1
            %v804 = vld [vmem:[%s803] ss:$0 sm:$0xff]
            %805 = vst [vmem:[%s793] sm:$0x3] %v802
            %v806 = vld [vmem:[%s794] ss:$0 sm:$0xff]
            %s807 = scalar_lea.vmem %s793, 1
            %808 = vst [vmem:[%s807] sm:$0x1] %v806
            %s809 = scalar_lea.vmem %s794, 1
            %v810 = vld [vmem:[%s809] sm:$0x1]
            %v811 = vlaneseq
            %v812 = vshrl.u32 %v811, 7
            %vm813 = vcmp.eq.s32.totalorder %v812, 1
            %v814 = vsel %vm813, %v804, %v810
            %v815 = vld [vmem:[%s794] ss:$0 sm:$0xff]
            %816 = vst [vmem:[%s794] sm:$0x3] %v814
            %s817 = smov [#allocation21]
            %s818 = smov [#allocation23]
            %v819 = vld [vmem:[%s817] ss:$0 sm:$0xff]
            %s821 = scalar_lea.vmem %s817, 4294967295
            %v822 = vld [vmem:[%s821] sm:$0x2]
            %v823 = vlaneseq
            %v824 = vshrl.u32 %v823, 7
            %vm825 = vcmp.eq.s32.totalorder %v824, 0
            %v826 = vsel %vm825, %v819, %v822
            %s827 = scalar_lea.vmem %s817, 1
            %v828 = vld [vmem:[%s827] ss:$0 sm:$0xff]
            %829 = vst [vmem:[%s817] sm:$0x3] %v826
            %v830 = vld [vmem:[%s818] ss:$0 sm:$0xff]
            %s831 = scalar_lea.vmem %s817, 1
            %832 = vst [vmem:[%s831] sm:$0x1] %v830
            %s833 = scalar_lea.vmem %s818, 1
            %v834 = vld [vmem:[%s833] sm:$0x1]
            %v835 = vlaneseq
            %v836 = vshrl.u32 %v835, 7
            %vm837 = vcmp.eq.s32.totalorder %v836, 1
            %v838 = vsel %vm837, %v828, %v834
            %v839 = vld [vmem:[%s818] ss:$0 sm:$0xff]
            %840 = vst [vmem:[%s818] sm:$0x3] %v838
            %s841 = smov [#allocation31]
            %v842 = vld [vmem:[%s841] sm:$0xff]
            %s843 = smov [#allocation32]
            %v844 = vld [vmem:[%s843] sm:$0xff]
            %s845 = smov [#allocation12]
            %s846 = smov [#allocation14]
            %s847 = smov [#allocation16]
            %s848 = smov [#allocation18]
            %v849 = vld [vmem:[%s845] sm:$0x3]
            %v850 = vld [vmem:[%s846] sm:$0x3]
            %v851 = vld [vmem:[%s847] sm:$0x3]
            %v852 = vld [vmem:[%s848] sm:$0x3]
            %v853 = vmul.f32 %v842, %v849
            %v854 = vmul.f32 %v844, %v851
            %v855 = vsub.f32 %v853, %v854
            %v856 = vmul.f32 %v842, %v850
            %v857 = vmul.f32 %v844, %v852
            %v858 = vsub.f32 %v856, %v857
            %v859 = vmul.f32 %v844, %v849
            %v860 = vmul.f32 %v842, %v851
            %v861 = vadd.f32 %v859, %v860
            %v862 = vmul.f32 %v844, %v850
            %v863 = vmul.f32 %v842, %v852
            %v864 = vadd.f32 %v862, %v863
            %865 = vst [vmem:[%s845] sm:$0x3] %v855
            %866 = vst [vmem:[%s846] sm:$0x3] %v858
            %867 = vst [vmem:[%s847] sm:$0x3] %v861
            %868 = vst [vmem:[%s848] sm:$0x3] %v864
            %s869 = smov [#allocation12]
            %s870 = smov [#allocation16]
            %v871 = vld [vmem:[%s869] ss:$0 sm:$0xff]
            %s873 = scalar_lea.vmem %s869, 4294967295
            %v874 = vld [vmem:[%s873] sm:$0x2]
            %v875 = vlaneseq
            %v876 = vshrl.u32 %v875, 7
            %vm877 = vcmp.eq.s32.totalorder %v876, 0
            %v878 = vsel %vm877, %v871, %v874
            %s879 = scalar_lea.vmem %s869, 1
            %v880 = vld [vmem:[%s879] ss:$0 sm:$0xff]
            %881 = vst [vmem:[%s869] sm:$0x3] %v878
            %v882 = vld [vmem:[%s870] ss:$0 sm:$0xff]
            %s883 = scalar_lea.vmem %s869, 1
            %884 = vst [vmem:[%s883] sm:$0x1] %v882
            %s885 = scalar_lea.vmem %s870, 1
            %v886 = vld [vmem:[%s885] sm:$0x1]
            %v887 = vlaneseq
            %v888 = vshrl.u32 %v887, 7
            %vm889 = vcmp.eq.s32.totalorder %v888, 1
            %v890 = vsel %vm889, %v880, %v886
            %v891 = vld [vmem:[%s870] ss:$0 sm:$0xff]
            %892 = vst [vmem:[%s870] sm:$0x3] %v890
            %s893 = smov [#allocation14]
            %s894 = smov [#allocation18]
            %v895 = vld [vmem:[%s893] ss:$0 sm:$0xff]
            %s897 = scalar_lea.vmem %s893, 4294967295
            %v898 = vld [vmem:[%s897] sm:$0x2]
            %v899 = vlaneseq
            %v900 = vshrl.u32 %v899, 7
            %vm901 = vcmp.eq.s32.totalorder %v900, 0
            %v902 = vsel %vm901, %v895, %v898
            %s903 = scalar_lea.vmem %s893, 1
            %v904 = vld [vmem:[%s903] ss:$0 sm:$0xff]
            %905 = vst [vmem:[%s893] sm:$0x3] %v902
            %v906 = vld [vmem:[%s894] ss:$0 sm:$0xff]
            %s907 = scalar_lea.vmem %s893, 1
            %908 = vst [vmem:[%s907] sm:$0x1] %v906
            %s909 = scalar_lea.vmem %s894, 1
            %v910 = vld [vmem:[%s909] sm:$0x1]
            %v911 = vlaneseq
            %v912 = vshrl.u32 %v911, 7
            %vm913 = vcmp.eq.s32.totalorder %v912, 1
            %v914 = vsel %vm913, %v904, %v910
            %v915 = vld [vmem:[%s894] ss:$0 sm:$0xff]
            %916 = vst [vmem:[%s894] sm:$0x3] %v914
          $region152: #{custom-call.23} parent=144 // loop_footer
            %s477 = sadd.s32 1, %s473
          $region153: #{custom-call.23} parent=144 // loop_footer_branch
            %472 = sbr.rel target = $region149
          $region154: #{custom-call.23} parent=144 // loop_exit
            _
          %s917 = sadd.s32 %s375, 1
        $region145: #{custom-call.23} parent=139 // loop_footer
          _
        $region146: #{custom-call.23} parent=139 // loop_footer_branch
          %374 = sbr.rel target = $region142
        $region147: #{custom-call.23} parent=139 // loop_exit
          _
        %s920 = sand.u32 %s17, 7
        %s921 = scalar_lea.vmem [#allocation8], %s920
        %s922 = sand.u32 %s17, 7
        %s923 = scalar_lea.vmem [#allocation10], %s922
        %s924 = smov [#allocation20]
        %s925 = smov %s921
        %v926 = vlaneseq
        %v927 = vand.u32 %v926, 127
        %v928 = vmov %v927
        %v929 = vlaneseq
        %v930 = vshrl.u32 %v929, 7
        %v931 = vmov %v930
        %v932 = vld [vmem:[%s924] sm:$0x3]
        %vm935 = vcmp.eq.s32.totalorder %v931, %v928
        %v936 = vsel %vm935, %v932, 0.0
        %v937 = vrot.slane %v936, 4
        %v938 = vadd.f32 %v936, %v937
        %v939 = vrot.slane %v938, 2
        %v940 = vadd.f32 %v938, %v939
        %v941 = vrot.slane %v940, 1
        %v942 = vadd.f32 %v940, %v941
        %943 = vst [vmem:[%s925] sm:$0x1] %v942
        %s944 = smov [#allocation23]
        %s945 = smov %s923
        %v946 = vlaneseq
        %v947 = vand.u32 %v946, 127
        %v948 = vmov %v947
        %v949 = vlaneseq
        %v950 = vshrl.u32 %v949, 7
        %v951 = vmov %v950
        %v952 = vld [vmem:[%s944] sm:$0x3]
        %vm955 = vcmp.eq.s32.totalorder %v951, %v948
        %v956 = vsel %vm955, %v952, 0.0
        %v957 = vrot.slane %v956, 4
        %v958 = vadd.f32 %v956, %v957
        %v959 = vrot.slane %v958, 2
        %v960 = vadd.f32 %v958, %v959
        %v961 = vrot.slane %v960, 1
        %v962 = vadd.f32 %v960, %v961
        %963 = vst [vmem:[%s945] sm:$0x1] %v962
        %s965 = sshll.u32 1, 2
        %s966 = ssub.s32 %s965, 1
        %v968 = vld [vmem:[#allocation8] sm:%s966]
        %s969 = sshll.u32 1, 2
        %s970 = ssub.s32 %s969, 1
        %971 = vst [vmem:[%s287] sm:%s970] %v968
        %s973 = sshll.u32 1, 2
        %s974 = ssub.s32 %s973, 1
        %v976 = vld [vmem:[#allocation10] sm:%s974]
        %s977 = sshll.u32 1, 2
        %s978 = ssub.s32 %s977, 1
        %979 = vst [vmem:[%s293] sm:%s978] %v976
        %s981 = sshll.u32 1, 2
        %s982 = ssub.s32 %s981, 1
        %v984 = vld [vmem:[#allocation12] sm:%s982]
        %s985 = sshll.u32 1, 2
        %s986 = ssub.s32 %s985, 1
        %987 = vst [vmem:[%s297] sm:%s986] %v984
        %s989 = sshll.u32 1, 2
        %s990 = ssub.s32 %s989, 1
        %v992 = vld [vmem:[#allocation14] sm:%s990]
        %s993 = sshll.u32 1, 2
        %s994 = ssub.s32 %s993, 1
        %995 = vst [vmem:[%s301] sm:%s994] %v992
        %s997 = sshll.u32 1, 2
        %s998 = ssub.s32 %s997, 1
        %v1000 = vld [vmem:[#allocation16] sm:%s998]
        %s1001 = sshll.u32 1, 2
        %s1002 = ssub.s32 %s1001, 1
        %1003 = vst [vmem:[%s305] sm:%s1002] %v1000
        %s1005 = sshll.u32 1, 2
        %s1006 = ssub.s32 %s1005, 1
        %v1008 = vld [vmem:[#allocation18] sm:%s1006]
        %s1009 = sshll.u32 1, 2
        %s1010 = ssub.s32 %s1009, 1
        %1011 = vst [vmem:[%s309] sm:%s1010] %v1008
        %s1012 = sand.u32 %s27, 1
        %s1013 = sand.u32 %s27, 1
        %s1014 = smul.addr %s1013, 2
        %s1015 = scalar_lea.vmem [#allocation9], %s1014
        %s1016 = sand.u32 %s55, 1
        %s1017 = sand.u32 %s55, 1
        %s1018 = smul.addr %s1017, 2
        %s1019 = scalar_lea.vmem [#allocation11], %s1018
        %s1020 = sand.u32 %s17, 1
        %s1021 = sand.u32 %s17, 1
        %s1022 = smul.addr %s1021, 2
        %s1023 = scalar_lea.vmem [#allocation13], %s1022
        %s1024 = sand.u32 %s17, 1
        %s1025 = sand.u32 %s17, 1
        %s1026 = smul.addr %s1025, 2
        %s1027 = scalar_lea.vmem [#allocation15], %s1026
        %s1028 = sand.u32 %s17, 1
        %s1029 = sand.u32 %s17, 1
        %s1030 = smul.addr %s1029, 2
        %s1031 = scalar_lea.vmem [#allocation17], %s1030
        %s1032 = sand.u32 %s17, 1
        %s1033 = sand.u32 %s17, 1
        %s1034 = smul.addr %s1033, 2
        %s1035 = scalar_lea.vmem [#allocation19], %s1034
        // Predicated region
        $region155: #{custom-call.23} parent=139 // pred_check
          %p1036 = pneg %p37
        $region156: #{custom-call.23} parent=139 // pred_check_branch
          %1038 = sbr.rel (%p1036) target = $region158
        $region157: #{custom-call.23} parent=139 // pred_region
          %s1039 = sshrl.u32 %s17, 3
          %s1040 = smul.addr %s1039, 2
          %s1041 = scalar_lea.vmem %s4, %s1040
          // Predicated region
          $region159: #{custom-call.23} parent=157 // pred_check
            _
          $region160: #{custom-call.23} parent=157 // pred_check_branch
            %1043 = sbr.rel (0) target = $region162
          $region161: #{custom-call.23} parent=157 // pred_region
            // Predicated region
            $region163: #{custom-call.23} parent=161 // pred_check
              _
            $region164: #{custom-call.23} parent=161 // pred_check_branch
              %1045 = sbr.rel target = $region166
            $region165: #{custom-call.23} parent=161 // pred_region
              // Predicated region
              $region178: #{custom-call.23} parent=165 // pred_check
                _
              $region179: #{custom-call.23} parent=165 // pred_check_branch
                %1061 = sbr.rel (0) target = $region181
              $region180: #{custom-call.23} parent=165 // pred_region
                %s1063 = ssub.s32 4, 1
                loop: start=0, step=1, limit=1
                $region182: #{custom-call.23} parent=180 // loop_pre_header
                  _
                $region183: #{custom-call.23} parent=180 // loop_header
                  %s1065 = sphi 0, %s1069
                  %p1066 = scmp.ge.s32.totalorder %s1065, 1
                  %s1070 = sphi %s1015, %s1015
                  %s1071 = sphi %s1041, %s1041
                $region184: #{custom-call.23} parent=180 // loop_header_branch
                  %1068 = sbr.rel (%p1066) target = $region188
                $region185: #{custom-call.23} parent=180 // loop_body
                  %v1072 = vld [vmem:[%s1070] sm:%s1063]
                  %1073 = vst [vmem:[%s1071] sm:%s1063] %v1072
                $region186: #{custom-call.23} parent=180 // loop_footer
                  %s1069 = sadd.s32 1, %s1065
                $region187: #{custom-call.23} parent=180 // loop_footer_branch
                  %1064 = sbr.rel target = $region183
                $region188: #{custom-call.23} parent=180 // loop_exit
                  _
              $region181: #{custom-call.23} parent=165 // pred_fallthru
                _
            $region166: #{custom-call.23} parent=161 // pred_fallthru
              _
            // Predicated region
            $region167: #{custom-call.23} parent=161 // pred_check
              _
            $region168: #{custom-call.23} parent=161 // pred_check_branch
              %1047 = sbr.rel (0) target = $region170
            $region169: #{custom-call.23} parent=161 // pred_region
              %s1049 = ssub.s32 4, 1
              loop: start=0, step=1, limit=1
              $region171: #{custom-call.23} parent=169 // loop_pre_header
                _
              $region172: #{custom-call.23} parent=169 // loop_header
                %s1051 = sphi 0, %s1055
                %p1052 = scmp.ge.s32.totalorder %s1051, 1
                %s1056 = sphi %s1015, %s1015
                %s1057 = sphi %s1041, %s1041
              $region173: #{custom-call.23} parent=169 // loop_header_branch
                %1054 = sbr.rel (%p1052) target = $region177
              $region174: #{custom-call.23} parent=169 // loop_body
                %v1058 = vld [vmem:[%s1056] sm:%s1049]
                %1059 = vst [vmem:[%s1057] sm:%s1049] %v1058
              $region175: #{custom-call.23} parent=169 // loop_footer
                %s1055 = sadd.s32 1, %s1051
              $region176: #{custom-call.23} parent=169 // loop_footer_branch
                %1050 = sbr.rel target = $region172
              $region177: #{custom-call.23} parent=169 // loop_exit
                _
            $region170: #{custom-call.23} parent=161 // pred_fallthru
              _
          $region162: #{custom-call.23} parent=157 // pred_fallthru
            _
          %1074 = vnop
        $region158: #{custom-call.23} parent=139 // pred_fallthru
          _
        // Predicated region
        $region189: #{custom-call.23} parent=139 // pred_check
          %p1075 = pneg %p65
        $region190: #{custom-call.23} parent=139 // pred_check_branch
          %1077 = sbr.rel (%p1075) target = $region192
        $region191: #{custom-call.23} parent=139 // pred_region
          %s1078 = sshrl.u32 %s17, 3
          %s1079 = smul.addr %s1078, 2
          %s1080 = scalar_lea.vmem %s5, %s1079
          // Predicated region
          $region193: #{custom-call.23} parent=191 // pred_check
            _
          $region194: #{custom-call.23} parent=191 // pred_check_branch
            %1082 = sbr.rel (0) target = $region196
          $region195: #{custom-call.23} parent=191 // pred_region
            // Predicated region
            $region197: #{custom-call.23} parent=195 // pred_check
              _
            $region198: #{custom-call.23} parent=195 // pred_check_branch
              %1084 = sbr.rel target = $region200
            $region199: #{custom-call.23} parent=195 // pred_region
              // Predicated region
              $region212: #{custom-call.23} parent=199 // pred_check
                _
              $region213: #{custom-call.23} parent=199 // pred_check_branch
                %1100 = sbr.rel (0) target = $region215
              $region214: #{custom-call.23} parent=199 // pred_region
                %s1102 = ssub.s32 4, 1
                loop: start=0, step=1, limit=1
                $region216: #{custom-call.23} parent=214 // loop_pre_header
                  _
                $region217: #{custom-call.23} parent=214 // loop_header
                  %s1104 = sphi 0, %s1108
                  %p1105 = scmp.ge.s32.totalorder %s1104, 1
                  %s1109 = sphi %s1019, %s1019
                  %s1110 = sphi %s1080, %s1080
                $region218: #{custom-call.23} parent=214 // loop_header_branch
                  %1107 = sbr.rel (%p1105) target = $region222
                $region219: #{custom-call.23} parent=214 // loop_body
                  %v1111 = vld [vmem:[%s1109] sm:%s1102]
                  %1112 = vst [vmem:[%s1110] sm:%s1102] %v1111
                $region220: #{custom-call.23} parent=214 // loop_footer
                  %s1108 = sadd.s32 1, %s1104
                $region221: #{custom-call.23} parent=214 // loop_footer_branch
                  %1103 = sbr.rel target = $region217
                $region222: #{custom-call.23} parent=214 // loop_exit
                  _
              $region215: #{custom-call.23} parent=199 // pred_fallthru
                _
            $region200: #{custom-call.23} parent=195 // pred_fallthru
              _
            // Predicated region
            $region201: #{custom-call.23} parent=195 // pred_check
              _
            $region202: #{custom-call.23} parent=195 // pred_check_branch
              %1086 = sbr.rel (0) target = $region204
            $region203: #{custom-call.23} parent=195 // pred_region
              %s1088 = ssub.s32 4, 1
              loop: start=0, step=1, limit=1
              $region205: #{custom-call.23} parent=203 // loop_pre_header
                _
              $region206: #{custom-call.23} parent=203 // loop_header
                %s1090 = sphi 0, %s1094
                %p1091 = scmp.ge.s32.totalorder %s1090, 1
                %s1095 = sphi %s1019, %s1019
                %s1096 = sphi %s1080, %s1080
              $region207: #{custom-call.23} parent=203 // loop_header_branch
                %1093 = sbr.rel (%p1091) target = $region211
              $region208: #{custom-call.23} parent=203 // loop_body
                %v1097 = vld [vmem:[%s1095] sm:%s1088]
                %1098 = vst [vmem:[%s1096] sm:%s1088] %v1097
              $region209: #{custom-call.23} parent=203 // loop_footer
                %s1094 = sadd.s32 1, %s1090
              $region210: #{custom-call.23} parent=203 // loop_footer_branch
                %1089 = sbr.rel target = $region206
              $region211: #{custom-call.23} parent=203 // loop_exit
                _
            $region204: #{custom-call.23} parent=195 // pred_fallthru
              _
          $region196: #{custom-call.23} parent=191 // pred_fallthru
            _
          %1113 = vnop
        $region192: #{custom-call.23} parent=139 // pred_fallthru
          _
        %s1114 = smul.addr %s17, 2
        %s1115 = scalar_lea.vmem %s6, %s1114
        // Predicated region
        $region223: #{custom-call.23} parent=139 // pred_check
          _
        $region224: #{custom-call.23} parent=139 // pred_check_branch
          %1117 = sbr.rel (0) target = $region226
        $region225: #{custom-call.23} parent=139 // pred_region
          // Predicated region
          $region227: #{custom-call.23} parent=225 // pred_check
            _
          $region228: #{custom-call.23} parent=225 // pred_check_branch
            %1119 = sbr.rel target = $region230
          $region229: #{custom-call.23} parent=225 // pred_region
            // Predicated region
            $region242: #{custom-call.23} parent=229 // pred_check
              _
            $region243: #{custom-call.23} parent=229 // pred_check_branch
              %1135 = sbr.rel (0) target = $region245
            $region244: #{custom-call.23} parent=229 // pred_region
              %s1137 = ssub.s32 4, 1
              loop: start=0, step=1, limit=1
              $region246: #{custom-call.23} parent=244 // loop_pre_header
                _
              $region247: #{custom-call.23} parent=244 // loop_header
                %s1139 = sphi 0, %s1143
                %p1140 = scmp.ge.s32.totalorder %s1139, 1
                %s1144 = sphi %s1023, %s1023
                %s1145 = sphi %s1115, %s1115
              $region248: #{custom-call.23} parent=244 // loop_header_branch
                %1142 = sbr.rel (%p1140) target = $region252
              $region249: #{custom-call.23} parent=244 // loop_body
                %v1146 = vld [vmem:[%s1144] sm:%s1137]
                %1147 = vst [vmem:[%s1145] sm:%s1137] %v1146
              $region250: #{custom-call.23} parent=244 // loop_footer
                %s1143 = sadd.s32 1, %s1139
              $region251: #{custom-call.23} parent=244 // loop_footer_branch
                %1138 = sbr.rel target = $region247
              $region252: #{custom-call.23} parent=244 // loop_exit
                _
            $region245: #{custom-call.23} parent=229 // pred_fallthru
              _
          $region230: #{custom-call.23} parent=225 // pred_fallthru
            _
          // Predicated region
          $region231: #{custom-call.23} parent=225 // pred_check
            _
          $region232: #{custom-call.23} parent=225 // pred_check_branch
            %1121 = sbr.rel (0) target = $region234
          $region233: #{custom-call.23} parent=225 // pred_region
            %s1123 = ssub.s32 4, 1
            loop: start=0, step=1, limit=1
            $region235: #{custom-call.23} parent=233 // loop_pre_header
              _
            $region236: #{custom-call.23} parent=233 // loop_header
              %s1125 = sphi 0, %s1129
              %p1126 = scmp.ge.s32.totalorder %s1125, 1
              %s1130 = sphi %s1023, %s1023
              %s1131 = sphi %s1115, %s1115
            $region237: #{custom-call.23} parent=233 // loop_header_branch
              %1128 = sbr.rel (%p1126) target = $region241
            $region238: #{custom-call.23} parent=233 // loop_body
              %v1132 = vld [vmem:[%s1130] sm:%s1123]
              %1133 = vst [vmem:[%s1131] sm:%s1123] %v1132
            $region239: #{custom-call.23} parent=233 // loop_footer
              %s1129 = sadd.s32 1, %s1125
            $region240: #{custom-call.23} parent=233 // loop_footer_branch
              %1124 = sbr.rel target = $region236
            $region241: #{custom-call.23} parent=233 // loop_exit
              _
          $region234: #{custom-call.23} parent=225 // pred_fallthru
            _
        $region226: #{custom-call.23} parent=139 // pred_fallthru
          _
        %1148 = vnop
        %s1149 = smul.addr %s17, 2
        %s1150 = scalar_lea.vmem %s7, %s1149
        // Predicated region
        $region253: #{custom-call.23} parent=139 // pred_check
          _
        $region254: #{custom-call.23} parent=139 // pred_check_branch
          %1152 = sbr.rel (0) target = $region256
        $region255: #{custom-call.23} parent=139 // pred_region
          // Predicated region
          $region257: #{custom-call.23} parent=255 // pred_check
            _
          $region258: #{custom-call.23} parent=255 // pred_check_branch
            %1154 = sbr.rel target = $region260
          $region259: #{custom-call.23} parent=255 // pred_region
            // Predicated region
            $region272: #{custom-call.23} parent=259 // pred_check
              _
            $region273: #{custom-call.23} parent=259 // pred_check_branch
              %1170 = sbr.rel (0) target = $region275
            $region274: #{custom-call.23} parent=259 // pred_region
              %s1172 = ssub.s32 4, 1
              loop: start=0, step=1, limit=1
              $region276: #{custom-call.23} parent=274 // loop_pre_header
                _
              $region277: #{custom-call.23} parent=274 // loop_header
                %s1174 = sphi 0, %s1178
                %p1175 = scmp.ge.s32.totalorder %s1174, 1
                %s1179 = sphi %s1027, %s1027
                %s1180 = sphi %s1150, %s1150
              $region278: #{custom-call.23} parent=274 // loop_header_branch
                %1177 = sbr.rel (%p1175) target = $region282
              $region279: #{custom-call.23} parent=274 // loop_body
                %v1181 = vld [vmem:[%s1179] sm:%s1172]
                %1182 = vst [vmem:[%s1180] sm:%s1172] %v1181
              $region280: #{custom-call.23} parent=274 // loop_footer
                %s1178 = sadd.s32 1, %s1174
              $region281: #{custom-call.23} parent=274 // loop_footer_branch
                %1173 = sbr.rel target = $region277
              $region282: #{custom-call.23} parent=274 // loop_exit
                _
            $region275: #{custom-call.23} parent=259 // pred_fallthru
              _
          $region260: #{custom-call.23} parent=255 // pred_fallthru
            _
          // Predicated region
          $region261: #{custom-call.23} parent=255 // pred_check
            _
          $region262: #{custom-call.23} parent=255 // pred_check_branch
            %1156 = sbr.rel (0) target = $region264
          $region263: #{custom-call.23} parent=255 // pred_region
            %s1158 = ssub.s32 4, 1
            loop: start=0, step=1, limit=1
            $region265: #{custom-call.23} parent=263 // loop_pre_header
              _
            $region266: #{custom-call.23} parent=263 // loop_header
              %s1160 = sphi 0, %s1164
              %p1161 = scmp.ge.s32.totalorder %s1160, 1
              %s1165 = sphi %s1027, %s1027
              %s1166 = sphi %s1150, %s1150
            $region267: #{custom-call.23} parent=263 // loop_header_branch
              %1163 = sbr.rel (%p1161) target = $region271
            $region268: #{custom-call.23} parent=263 // loop_body
              %v1167 = vld [vmem:[%s1165] sm:%s1158]
              %1168 = vst [vmem:[%s1166] sm:%s1158] %v1167
            $region269: #{custom-call.23} parent=263 // loop_footer
              %s1164 = sadd.s32 1, %s1160
            $region270: #{custom-call.23} parent=263 // loop_footer_branch
              %1159 = sbr.rel target = $region266
            $region271: #{custom-call.23} parent=263 // loop_exit
              _
          $region264: #{custom-call.23} parent=255 // pred_fallthru
            _
        $region256: #{custom-call.23} parent=139 // pred_fallthru
          _
        %1183 = vnop
        %s1184 = smul.addr %s17, 2
        %s1185 = scalar_lea.vmem %s8, %s1184
        // Predicated region
        $region283: #{custom-call.23} parent=139 // pred_check
          _
        $region284: #{custom-call.23} parent=139 // pred_check_branch
          %1187 = sbr.rel (0) target = $region286
        $region285: #{custom-call.23} parent=139 // pred_region
          // Predicated region
          $region287: #{custom-call.23} parent=285 // pred_check
            _
          $region288: #{custom-call.23} parent=285 // pred_check_branch
            %1189 = sbr.rel target = $region290
          $region289: #{custom-call.23} parent=285 // pred_region
            // Predicated region
            $region302: #{custom-call.23} parent=289 // pred_check
              _
            $region303: #{custom-call.23} parent=289 // pred_check_branch
              %1205 = sbr.rel (0) target = $region305
            $region304: #{custom-call.23} parent=289 // pred_region
              %s1207 = ssub.s32 4, 1
              loop: start=0, step=1, limit=1
              $region306: #{custom-call.23} parent=304 // loop_pre_header
                _
              $region307: #{custom-call.23} parent=304 // loop_header
                %s1209 = sphi 0, %s1213
                %p1210 = scmp.ge.s32.totalorder %s1209, 1
                %s1214 = sphi %s1031, %s1031
                %s1215 = sphi %s1185, %s1185
              $region308: #{custom-call.23} parent=304 // loop_header_branch
                %1212 = sbr.rel (%p1210) target = $region312
              $region309: #{custom-call.23} parent=304 // loop_body
                %v1216 = vld [vmem:[%s1214] sm:%s1207]
                %1217 = vst [vmem:[%s1215] sm:%s1207] %v1216
              $region310: #{custom-call.23} parent=304 // loop_footer
                %s1213 = sadd.s32 1, %s1209
              $region311: #{custom-call.23} parent=304 // loop_footer_branch
                %1208 = sbr.rel target = $region307
              $region312: #{custom-call.23} parent=304 // loop_exit
                _
            $region305: #{custom-call.23} parent=289 // pred_fallthru
              _
          $region290: #{custom-call.23} parent=285 // pred_fallthru
            _
          // Predicated region
          $region291: #{custom-call.23} parent=285 // pred_check
            _
          $region292: #{custom-call.23} parent=285 // pred_check_branch
            %1191 = sbr.rel (0) target = $region294
          $region293: #{custom-call.23} parent=285 // pred_region
            %s1193 = ssub.s32 4, 1
            loop: start=0, step=1, limit=1
            $region295: #{custom-call.23} parent=293 // loop_pre_header
              _
            $region296: #{custom-call.23} parent=293 // loop_header
              %s1195 = sphi 0, %s1199
              %p1196 = scmp.ge.s32.totalorder %s1195, 1
              %s1200 = sphi %s1031, %s1031
              %s1201 = sphi %s1185, %s1185
            $region297: #{custom-call.23} parent=293 // loop_header_branch
              %1198 = sbr.rel (%p1196) target = $region301
            $region298: #{custom-call.23} parent=293 // loop_body
              %v1202 = vld [vmem:[%s1200] sm:%s1193]
              %1203 = vst [vmem:[%s1201] sm:%s1193] %v1202
            $region299: #{custom-call.23} parent=293 // loop_footer
              %s1199 = sadd.s32 1, %s1195
            $region300: #{custom-call.23} parent=293 // loop_footer_branch
              %1194 = sbr.rel target = $region296
            $region301: #{custom-call.23} parent=293 // loop_exit
              _
          $region294: #{custom-call.23} parent=285 // pred_fallthru
            _
        $region286: #{custom-call.23} parent=139 // pred_fallthru
          _
        %1218 = vnop
        %s1219 = smul.addr %s17, 2
        %s1220 = scalar_lea.vmem %s9, %s1219
        // Predicated region
        $region313: #{custom-call.23} parent=139 // pred_check
          _
        $region314: #{custom-call.23} parent=139 // pred_check_branch
          %1222 = sbr.rel (0) target = $region316
        $region315: #{custom-call.23} parent=139 // pred_region
          // Predicated region
          $region317: #{custom-call.23} parent=315 // pred_check
            _
          $region318: #{custom-call.23} parent=315 // pred_check_branch
            %1224 = sbr.rel target = $region320
          $region319: #{custom-call.23} parent=315 // pred_region
            // Predicated region
            $region332: #{custom-call.23} parent=319 // pred_check
              _
            $region333: #{custom-call.23} parent=319 // pred_check_branch
              %1240 = sbr.rel (0) target = $region335
            $region334: #{custom-call.23} parent=319 // pred_region
              %s1242 = ssub.s32 4, 1
              loop: start=0, step=1, limit=1
              $region336: #{custom-call.23} parent=334 // loop_pre_header
                _
              $region337: #{custom-call.23} parent=334 // loop_header
                %s1244 = sphi 0, %s1248
                %p1245 = scmp.ge.s32.totalorder %s1244, 1
                %s1249 = sphi %s1035, %s1035
                %s1250 = sphi %s1220, %s1220
              $region338: #{custom-call.23} parent=334 // loop_header_branch
                %1247 = sbr.rel (%p1245) target = $region342
              $region339: #{custom-call.23} parent=334 // loop_body
                %v1251 = vld [vmem:[%s1249] sm:%s1242]
                %1252 = vst [vmem:[%s1250] sm:%s1242] %v1251
              $region340: #{custom-call.23} parent=334 // loop_footer
                %s1248 = sadd.s32 1, %s1244
              $region341: #{custom-call.23} parent=334 // loop_footer_branch
                %1243 = sbr.rel target = $region337
              $region342: #{custom-call.23} parent=334 // loop_exit
                _
            $region335: #{custom-call.23} parent=319 // pred_fallthru
              _
          $region320: #{custom-call.23} parent=315 // pred_fallthru
            _
          // Predicated region
          $region321: #{custom-call.23} parent=315 // pred_check
            _
          $region322: #{custom-call.23} parent=315 // pred_check_branch
            %1226 = sbr.rel (0) target = $region324
          $region323: #{custom-call.23} parent=315 // pred_region
            %s1228 = ssub.s32 4, 1
            loop: start=0, step=1, limit=1
            $region325: #{custom-call.23} parent=323 // loop_pre_header
              _
            $region326: #{custom-call.23} parent=323 // loop_header
              %s1230 = sphi 0, %s1234
              %p1231 = scmp.ge.s32.totalorder %s1230, 1
              %s1235 = sphi %s1035, %s1035
              %s1236 = sphi %s1220, %s1220
            $region327: #{custom-call.23} parent=323 // loop_header_branch
              %1233 = sbr.rel (%p1231) target = $region331
            $region328: #{custom-call.23} parent=323 // loop_body
              %v1237 = vld [vmem:[%s1235] sm:%s1228]
              %1238 = vst [vmem:[%s1236] sm:%s1228] %v1237
            $region329: #{custom-call.23} parent=323 // loop_footer
              %s1234 = sadd.s32 1, %s1230
            $region330: #{custom-call.23} parent=323 // loop_footer_branch
              %1229 = sbr.rel target = $region326
            $region331: #{custom-call.23} parent=323 // loop_exit
              _
          $region324: #{custom-call.23} parent=315 // pred_fallthru
            _
        $region316: #{custom-call.23} parent=139 // pred_fallthru
          _
        %1253 = vnop
      $region140: #{custom-call.23} parent=5 // pred_fallthru
        _
      %p1254 = scmp.le.s32.totalorder 2, %s12
      // Predicated region
      $region343: #{custom-call.23} parent=5 // pred_check
        %p1255 = pneg %p1254
      $region344: #{custom-call.23} parent=5 // pred_check_branch
        %1257 = sbr.rel (%p1255) target = $region346
      $region345: #{custom-call.23} parent=5 // pred_region
        %s1258 = ssub.s32 %s12, 2
        // Predicated region
        $region347: #{custom-call.23} parent=345 // pred_check
          %p1259 = pneg %p43
        $region348: #{custom-call.23} parent=345 // pred_check_branch
          %1261 = sbr.rel (%p1259) target = $region350
        $region349: #{custom-call.23} parent=345 // pred_region
          %s1262 = sand.u32 %s28, 1
          %s1263 = sand.u32 %s28, 1
          %s1264 = smul.addr %s1263, 2
          %s1265 = scalar_lea.vmem [#allocation9], %s1264
        $region350: #{custom-call.23} parent=345 // pred_fallthru
          _
        // Predicated region
        $region351: #{custom-call.23} parent=345 // pred_check
          %p1266 = pneg %p71
        $region352: #{custom-call.23} parent=345 // pred_check_branch
          %1268 = sbr.rel (%p1266) target = $region354
        $region353: #{custom-call.23} parent=345 // pred_region
          %s1269 = sand.u32 %s56, 1
          %s1270 = sand.u32 %s56, 1
          %s1271 = smul.addr %s1270, 2
          %s1272 = scalar_lea.vmem [#allocation11], %s1271
        $region354: #{custom-call.23} parent=345 // pred_fallthru
          _
        %s1273 = sand.u32 %s18, 1
        %s1274 = sand.u32 %s18, 1
        %s1275 = smul.addr %s1274, 2
        %s1276 = scalar_lea.vmem [#allocation13], %s1275
        %s1277 = sand.u32 %s18, 1
        %s1278 = sand.u32 %s18, 1
        %s1279 = smul.addr %s1278, 2
        %s1280 = scalar_lea.vmem [#allocation15], %s1279
        %s1281 = sand.u32 %s18, 1
        %s1282 = sand.u32 %s18, 1
        %s1283 = smul.addr %s1282, 2
        %s1284 = scalar_lea.vmem [#allocation17], %s1283
        %s1285 = sand.u32 %s18, 1
        %s1286 = sand.u32 %s18, 1
        %s1287 = smul.addr %s1286, 2
        %s1288 = scalar_lea.vmem [#allocation19], %s1287
      $region346: #{custom-call.23} parent=5 // pred_fallthru
        _
    $region6: #{custom-call.23} parent=1 // loop_footer
      %s16 = sadd.s32 1, %s12
    $region7: #{custom-call.23} parent=1 // loop_footer_branch
      %11 = sbr.rel target = $region3
    $region8: #{custom-call.23} parent=1 // loop_exit
      _

// kernel: reverse
$region0: #{reverse}
  %s0 = inlined_call_operand.vmem [shape: f32[2,4], index: 0, kind: input, shape index: {}]
  %s1 = inlined_call_operand.vmem [shape: f32[2,4], index: 1, kind: output, shape index: {}]
  %v2 = vlaneseq
  %v3 = vsub.s32 3, %v2
  %4 = vset.pattern.permute.xlu0 %v3
  $region1: #{reverse} parent=0
    #allocation0 [shape = 'u8[4096]{0}', space=vmem, size = 0x1000, scoped, tag = 'operand span for operand 0']
    #allocation1 [shape = 'u8[1024]{0}', space=vmem, size = 0x400, scoped, tag = 'packed  for operand 0']
    #allocation2 [shape = 'u8[4096]{0}', space=vmem, size = 0x1000, scoped, tag = 'operand span for operand 1']
    #allocation3 [shape = 'u8[1024]{0}', space=vmem, size = 0x400, scoped, tag = 'packed  for operand 1']
    // Predicated region
    $region2: #{reverse} parent=1 // pred_check
      _
    $region3: #{reverse} parent=1 // pred_check_branch
      %6 = sbr.rel (0) target = $region5
    $region4: #{reverse} parent=1 // pred_region
      // Predicated region
      $region6: #{reverse} parent=4 // pred_check
        _
      $region7: #{reverse} parent=4 // pred_check_branch
        %8 = sbr.rel target = $region9
      $region8: #{reverse} parent=4 // pred_region
        // Predicated region
        $region21: #{reverse} parent=8 // pred_check
          _
        $region22: #{reverse} parent=8 // pred_check_branch
          %24 = sbr.rel (0) target = $region24
        $region23: #{reverse} parent=8 // pred_region
          %s26 = ssub.s32 4, 1
          loop: start=0, step=1, limit=1
          $region25: #{reverse} parent=23 // loop_pre_header
            _
          $region26: #{reverse} parent=23 // loop_header
            %s28 = sphi 0, %s32
            %p29 = scmp.ge.s32.totalorder %s28, 1
            %s33 = sphi %s0, %s0
            %s34 = sphi [#allocation1], [#allocation1]
          $region27: #{reverse} parent=23 // loop_header_branch
            %31 = sbr.rel (%p29) target = $region31
          $region28: #{reverse} parent=23 // loop_body
            %v35 = vld [vmem:[%s33] sm:%s26]
            %36 = vst [vmem:[%s34] sm:%s26] %v35
          $region29: #{reverse} parent=23 // loop_footer
            %s32 = sadd.s32 1, %s28
          $region30: #{reverse} parent=23 // loop_footer_branch
            %27 = sbr.rel target = $region26
          $region31: #{reverse} parent=23 // loop_exit
            _
        $region24: #{reverse} parent=8 // pred_fallthru
          _
      $region9: #{reverse} parent=4 // pred_fallthru
        _
      // Predicated region
      $region10: #{reverse} parent=4 // pred_check
        _
      $region11: #{reverse} parent=4 // pred_check_branch
        %10 = sbr.rel (0) target = $region13
      $region12: #{reverse} parent=4 // pred_region
        %s12 = ssub.s32 4, 1
        loop: start=0, step=1, limit=1
        $region14: #{reverse} parent=12 // loop_pre_header
          _
        $region15: #{reverse} parent=12 // loop_header
          %s14 = sphi 0, %s18
          %p15 = scmp.ge.s32.totalorder %s14, 1
          %s19 = sphi %s0, %s0
          %s20 = sphi [#allocation1], [#allocation1]
        $region16: #{reverse} parent=12 // loop_header_branch
          %17 = sbr.rel (%p15) target = $region20
        $region17: #{reverse} parent=12 // loop_body
          %v21 = vld [vmem:[%s19] sm:%s12]
          %22 = vst [vmem:[%s20] sm:%s12] %v21
        $region18: #{reverse} parent=12 // loop_footer
          %s18 = sadd.s32 1, %s14
        $region19: #{reverse} parent=12 // loop_footer_branch
          %13 = sbr.rel target = $region15
        $region20: #{reverse} parent=12 // loop_exit
          _
      $region13: #{reverse} parent=4 // pred_fallthru
        _
    $region5: #{reverse} parent=1 // pred_fallthru
      _
    %37 = vnop
    %s39 = sshll.u32 1, 2
    %s40 = ssub.s32 %s39, 1
    %v41 = vld [vmem:[#allocation1] sm:%s40]
    %42 = vst [vmem:[#allocation0] sm:%s40] %v41
    %v43 = vld [vmem:[#allocation0] sm:$0xff]
    %44 = vperm.xlu0 %4, %v43
    %v45 = vpop.permute.xlu0 %44
    %46 = vst [vmem:[#allocation2] sm:$0xff] %v45
    %s48 = sshll.u32 1, 2
    %s49 = ssub.s32 %s48, 1
    %v51 = vld [vmem:[#allocation2] sm:%s49]
    %s52 = sshll.u32 1, 2
    %s53 = ssub.s32 %s52, 1
    %54 = vst [vmem:[#allocation3] sm:%s53] %v51
    // Predicated region
    $region32: #{reverse} parent=1 // pred_check
      _
    $region33: #{reverse} parent=1 // pred_check_branch
      %56 = sbr.rel (0) target = $region35
    $region34: #{reverse} parent=1 // pred_region
      // Predicated region
      $region36: #{reverse} parent=34 // pred_check
        _
      $region37: #{reverse} parent=34 // pred_check_branch
        %58 = sbr.rel target = $region39
      $region38: #{reverse} parent=34 // pred_region
        // Predicated region
        $region51: #{reverse} parent=38 // pred_check
          _
        $region52: #{reverse} parent=38 // pred_check_branch
          %74 = sbr.rel (0) target = $region54
        $region53: #{reverse} parent=38 // pred_region
          %s76 = ssub.s32 4, 1
          loop: start=0, step=1, limit=1
          $region55: #{reverse} parent=53 // loop_pre_header
            _
          $region56: #{reverse} parent=53 // loop_header
            %s78 = sphi 0, %s82
            %p79 = scmp.ge.s32.totalorder %s78, 1
            %s83 = sphi [#allocation3], [#allocation3]
            %s84 = sphi %s1, %s1
          $region57: #{reverse} parent=53 // loop_header_branch
            %81 = sbr.rel (%p79) target = $region61
          $region58: #{reverse} parent=53 // loop_body
            %v85 = vld [vmem:[%s83] sm:%s76]
            %86 = vst [vmem:[%s84] sm:%s76] %v85
          $region59: #{reverse} parent=53 // loop_footer
            %s82 = sadd.s32 1, %s78
          $region60: #{reverse} parent=53 // loop_footer_branch
            %77 = sbr.rel target = $region56
          $region61: #{reverse} parent=53 // loop_exit
            _
        $region54: #{reverse} parent=38 // pred_fallthru
          _
      $region39: #{reverse} parent=34 // pred_fallthru
        _
      // Predicated region
      $region40: #{reverse} parent=34 // pred_check
        _
      $region41: #{reverse} parent=34 // pred_check_branch
        %60 = sbr.rel (0) target = $region43
      $region42: #{reverse} parent=34 // pred_region
        %s62 = ssub.s32 4, 1
        loop: start=0, step=1, limit=1
        $region44: #{reverse} parent=42 // loop_pre_header
          _
        $region45: #{reverse} parent=42 // loop_header
          %s64 = sphi 0, %s68
          %p65 = scmp.ge.s32.totalorder %s64, 1
          %s69 = sphi [#allocation3], [#allocation3]
          %s70 = sphi %s1, %s1
        $region46: #{reverse} parent=42 // loop_header_branch
          %67 = sbr.rel (%p65) target = $region50
        $region47: #{reverse} parent=42 // loop_body
          %v71 = vld [vmem:[%s69] sm:%s62]
          %72 = vst [vmem:[%s70] sm:%s62] %v71
        $region48: #{reverse} parent=42 // loop_footer
          %s68 = sadd.s32 1, %s64
        $region49: #{reverse} parent=42 // loop_footer_branch
          %63 = sbr.rel target = $region45
        $region50: #{reverse} parent=42 // loop_exit
          _
      $region43: #{reverse} parent=34 // pred_fallthru
        _
    $region35: #{reverse} parent=1 // pred_fallthru
      _
    %87 = vnop

// kernel: custom-call.16
$region0: #{custom-call.16}
  %s0 = inlined_call_operand.vmem [shape: f32[2,4,4], index: 0, kind: input, shape index: {}]
  %s1 = inlined_call_operand.vmem [shape: f32[2,4,4], index: 1, kind: output, shape index: {0}]
  %s2 = inlined_call_operand.vmem [shape: f32[2,4], index: 2, kind: output, shape index: {1}]
  %3 = xla_tuple %s1, %s2
  $region1: #{custom-call.16} parent=0
    #allocation0 [shape = 'u8[4096]{0}', space=vmem, size = 0x1000, scoped, tag = 'operand span for operand 0']
    #allocation1 [shape = 'u8[4096]{0}', space=vmem, size = 0x1000, scoped, tag = 'packed  for operand 0']
    #allocation2 [shape = 'u8[4096]{0}', space=vmem, size = 0x1000, scoped, tag = 'operand span for operand 1']
    #allocation3 [shape = 'u8[4096]{0}', space=vmem, size = 0x1000, scoped, tag = 'packed  for operand 1']
    #allocation4 [shape = 'u8[4096]{0}', space=vmem, size = 0x1000, scoped, tag = 'operand span for operand 2']
    #allocation5 [shape = 'u8[2048]{0}', space=vmem, size = 0x800, scoped, tag = 'packed  for operand 2']
    loop: start=0, step=1, limit=4
    $region2: #{custom-call.16} parent=1 // loop_pre_header
      _
    $region3: #{custom-call.16} parent=1 // loop_header
      %s5 = sphi 0, %s9
      %p6 = scmp.ge.s32.totalorder %s5, 4
      %s12 = sphi 0, %s31
      %s13 = sphi 0, %s27
      %s14 = sphi 0, %s23
      %s15 = sphi 0, %s12
      %s16 = sphi 0, %s13
      %s17 = sphi 0, %s14
      %s18 = sphi 0, %s15
      %s19 = sphi 0, %s16
      %s20 = sphi 0, %s17
      %s46 = sphi 0, %s48
      %s49 = sphi 0, %s46
      %s50 = sphi 0, %s49
      %s66 = sphi 0, %s50
    $region4: #{custom-call.16} parent=1 // loop_header_branch
      %8 = sbr.rel (%p6) target = $region8
    $region5: #{custom-call.16} parent=1 // loop_body
      %s10 = ssub.s32 %s5, 1
      %s11 = ssub.s32 %s5, 2
      %s21 = sadd.s32 1, %s14
      %p22 = scmp.ge.s32.totalorder %s21, 1
      %s23 = scalar_select %p22, 0, %s21
      %s24 = sadd.s32 1, %s13
      %s25 = scalar_select %p22, %s24, %s13
      %p26 = scmp.ge.s32.totalorder %s25, 1
      %s27 = scalar_select %p26, 0, %s25
      %s28 = sadd.s32 1, %s12
      %s29 = scalar_select %p26, %s28, %s12
      %p30 = scmp.ge.s32.totalorder %s29, 2
      %s31 = scalar_select %p30, 0, %s29
      %p32 = scmp.lt.s32.totalorder %s12, 0
      %s33 = ssub.s32 0, %s12
      %s34 = scalar_select %p32, %s33, %s12
      %s35 = sshrl.u32 %s34, 3
      %s36 = ssub.s32 0, %s35
      %s37 = scalar_select %p32, %s36, %s35
      %p38 = scmp.lt.s32.totalorder %s31, 0
      %s39 = ssub.s32 0, %s31
      %s40 = scalar_select %p38, %s39, %s31
      %s41 = sshrl.u32 %s40, 3
      %s42 = ssub.s32 0, %s41
      %s43 = scalar_select %p38, %s42, %s41
      %s44 = ssub.s32 %s37, %s43
      %p45 = scmp.eq.s32.totalorder %s44, 0
      %s47 = sadd.s32 %s46, 1
      %s48 = scalar_select %p45, %s46, %s47
      %p51 = pneg %p45
      %p52 = scmp.eq.s32.totalorder %s5, 1
      %p53 = por %p51, %p52
      %p54 = scmp.ne.s32.totalorder %s46, %s49
      %p55 = scmp.eq.s32.totalorder %s5, 0
      %p56 = por %p54, %p55
      %p57 = scmp.ne.s32.totalorder %s46, %s49
      %p58 = scmp.eq.s32.totalorder %s10, 1
      %p59 = por %p57, %p58
      %p60 = scmp.ne.s32.totalorder %s49, %s50
      %p61 = scmp.eq.s32.totalorder %s10, 0
      %p62 = por %p60, %p61
      %p63 = scmp.ne.s32.totalorder %s49, %s50
      %p64 = scmp.eq.s32.totalorder %s11, 1
      %p65 = por %p63, %p64
      %p67 = scmp.ne.s32.totalorder %s50, %s66
      %p68 = scmp.eq.s32.totalorder %s11, 0
      %p69 = por %p67, %p68
      %p70 = scmp.le.s32.totalorder 1, %s5
      %p71 = scmp.lt.s32.totalorder %s5, 3
      %p72 = pnand %p70, %p71
      %p73 = pneg %p72
      // Predicated region
      $region9: #{custom-call.16} parent=5 // pred_check
        _
      $region10: #{custom-call.16} parent=5 // pred_check_branch
        %75 = sbr.rel (%p72) target = $region12
      $region11: #{custom-call.16} parent=5 // pred_region
        %s76 = ssub.s32 %s5, 1
      $region12: #{custom-call.16} parent=5 // pred_fallthru
        _
      %p77 = scmp.lt.s32.totalorder %s5, 2
      // Predicated region
      $region13: #{custom-call.16} parent=5 // pred_check
        %p78 = pneg %p77
      $region14: #{custom-call.16} parent=5 // pred_check_branch
        %80 = sbr.rel (%p78) target = $region16
      $region15: #{custom-call.16} parent=5 // pred_region
        %s81 = sand.u32 %s5, 1
        %s82 = sand.u32 %s5, 1
        %s83 = smul.addr %s82, 4
        %s84 = scalar_lea.vmem [#allocation1], %s83
        %s85 = sadd.s32 %s14, %s13
        %s86 = sadd.s32 %s85, %s12
        %s87 = smul.addr %s86, 4
        %s88 = scalar_lea.vmem %s0, %s87
        // Predicated region
        $region17: #{custom-call.16} parent=15 // pred_check
          _
        $region18: #{custom-call.16} parent=15 // pred_check_branch
          %90 = sbr.rel (0) target = $region20
        $region19: #{custom-call.16} parent=15 // pred_region
          // Predicated region
          $region21: #{custom-call.16} parent=19 // pred_check
            _
          $region22: #{custom-call.16} parent=19 // pred_check_branch
            %92 = sbr.rel target = $region24
          $region23: #{custom-call.16} parent=19 // pred_region
            // Predicated region
            $region36: #{custom-call.16} parent=23 // pred_check
              _
            $region37: #{custom-call.16} parent=23 // pred_check_branch
              %108 = sbr.rel (0) target = $region39
            $region38: #{custom-call.16} parent=23 // pred_region
              %s110 = ssub.s32 16, 1
              loop: start=0, step=1, limit=1
              $region40: #{custom-call.16} parent=38 // loop_pre_header
                _
              $region41: #{custom-call.16} parent=38 // loop_header
                %s112 = sphi 0, %s116
                %p113 = scmp.ge.s32.totalorder %s112, 1
                %s117 = sphi %s88, %s88
                %s118 = sphi %s84, %s84
              $region42: #{custom-call.16} parent=38 // loop_header_branch
                %115 = sbr.rel (%p113) target = $region46
              $region43: #{custom-call.16} parent=38 // loop_body
                %v119 = vld [vmem:[%s117] sm:%s110]
                %120 = vst [vmem:[%s118] sm:%s110] %v119
              $region44: #{custom-call.16} parent=38 // loop_footer
                %s116 = sadd.s32 1, %s112
              $region45: #{custom-call.16} parent=38 // loop_footer_branch
                %111 = sbr.rel target = $region41
              $region46: #{custom-call.16} parent=38 // loop_exit
                _
            $region39: #{custom-call.16} parent=23 // pred_fallthru
              _
          $region24: #{custom-call.16} parent=19 // pred_fallthru
            _
          // Predicated region
          $region25: #{custom-call.16} parent=19 // pred_check
            _
          $region26: #{custom-call.16} parent=19 // pred_check_branch
            %94 = sbr.rel (0) target = $region28
          $region27: #{custom-call.16} parent=19 // pred_region
            %s96 = ssub.s32 16, 1
            loop: start=0, step=1, limit=1
            $region29: #{custom-call.16} parent=27 // loop_pre_header
              _
            $region30: #{custom-call.16} parent=27 // loop_header
              %s98 = sphi 0, %s102
              %p99 = scmp.ge.s32.totalorder %s98, 1
              %s103 = sphi %s88, %s88
              %s104 = sphi %s84, %s84
            $region31: #{custom-call.16} parent=27 // loop_header_branch
              %101 = sbr.rel (%p99) target = $region35
            $region32: #{custom-call.16} parent=27 // loop_body
              %v105 = vld [vmem:[%s103] sm:%s96]
              %106 = vst [vmem:[%s104] sm:%s96] %v105
            $region33: #{custom-call.16} parent=27 // loop_footer
              %s102 = sadd.s32 1, %s98
            $region34: #{custom-call.16} parent=27 // loop_footer_branch
              %97 = sbr.rel target = $region30
            $region35: #{custom-call.16} parent=27 // loop_exit
              _
          $region28: #{custom-call.16} parent=19 // pred_fallthru
            _
        $region20: #{custom-call.16} parent=15 // pred_fallthru
          _
        %121 = vnop
      $region16: #{custom-call.16} parent=5 // pred_fallthru
        _
      %p122 = scmp.le.s32.totalorder 1, %s5
      %p123 = scmp.lt.s32.totalorder %s5, 3
      %p124 = pnand %p122, %p123
      %p125 = pneg %p124
      // Predicated region
      $region47: #{custom-call.16} parent=5 // pred_check
        _
      $region48: #{custom-call.16} parent=5 // pred_check_branch
        %127 = sbr.rel (%p124) target = $region50
      $region49: #{custom-call.16} parent=5 // pred_region
        #allocation6 [shape = 'f32[4,128]{1,0}', space=vmem, size = 0x1000, scoped, tag = 'scratch for Householder reflectors']
        %s128 = ssub.s32 %s5, 1
        %s129 = sand.u32 %s10, 1
        %s130 = sand.u32 %s10, 1
        %s131 = smul.addr %s130, 4
        %s132 = scalar_lea.vmem [#allocation1], %s131
        %s133 = sand.u32 %s10, 1
        %s134 = sand.u32 %s10, 1
        %s135 = smul.addr %s134, 4
        %s136 = scalar_lea.vmem [#allocation1], %s135
        %s137 = sand.u32 %s10, 1
        %s138 = sand.u32 %s10, 1
        %s139 = smul.addr %s138, 4
        %s140 = scalar_lea.vmem [#allocation3], %s139
        %p141 = pneg %p62
        %p142 = pneg %p59
        %s143 = sand.u32 %s49, 1
        %s144 = sand.u32 %s49, 1
        %s145 = smul.addr %s144, 2
        %s146 = scalar_lea.vmem [#allocation5], %s145
        %s148 = sshll.u32 1, 4
        %s149 = ssub.s32 %s148, 1
        %v150 = vld [vmem:[%s136] sm:%s149]
        %151 = vst [vmem:[#allocation0] sm:%s149] %v150
        %p152 = scmp.lt.s32.totalorder %s15, 0
        %s153 = ssub.s32 0, %s15
        %s154 = scalar_select %p152, %s153, %s15
        %s155 = sshrl.u32 %s154, 3
        %s156 = ssub.s32 0, %s155
        %s157 = scalar_select %p152, %s156, %s155
        %s158 = sand.u32 %s15, 7
        %s159 = scalar_lea.vmem [#allocation4], %s158
        %v160 = vld [vmem:[#allocation0] sm:$0xff]
        %161 = vst [vmem:[#allocation2] sm:$0xff] %v160
        %162 = vst [vmem:[%s159] sm:$0x1] 0.0
        loop: start=0, step=1, limit=4
        $region51: #{custom-call.16} parent=49 // loop_pre_header
          _
        $region52: #{custom-call.16} parent=49 // loop_header
          %s164 = sphi 0, %s168
          %p165 = scmp.ge.s32.totalorder %s164, 4
        $region53: #{custom-call.16} parent=49 // loop_header_branch
          %167 = sbr.rel (%p165) target = $region57
        $region54: #{custom-call.16} parent=49 // loop_body
          %v169 = vld [vmem:[#allocation2] sm:$0xff]
          %v170 = vlaneseq
          %v171 = vshrl.u32 %v170, 7
          %v173 = vstv %s164
          %vm174 = vcmp.gt.s32.totalorder %v171, %v173
          %vm175 = vcmp.lt.s32.totalorder %v171, 4
          %vm176 = vmand %vm174, %vm175
          %v177 = vsel %vm176, %v169, 0.0
          %v178 = vmul.f32 %v177, %v177
          %v179 = vrot.slane %v178, 4
          %v180 = vadd.f32 %v178, %v179
          %v181 = vrot.slane %v180, 2
          %v182 = vadd.f32 %v180, %v181
          %v183 = vrot.slane %v182, 1
          %v184 = vadd.f32 %v182, %v183
          %v185 = vrsqrt.pop %v184
          %v186 = vmul.f32 %v184, %v185
          %vm187 = vcmp.eq.f32.partialorder %v184, inf
          %v188 = vsel %vm187, %v184, %v186
          %vm189 = vcmp.eq.f32.partialorder %v184, 0.0
          %v190 = vand.u32 %v184, 2147483648
          %v191 = vsel %vm189, %v190, %v188
          %vm192 = vcmp.eq.f32.partialorder %v184, 0.0
          %s193 = sshrl.u32 %s164, 3
          %s194 = sand.u32 %s164, 7
          %s195 = smul.addr %s193, 8
          %s196 = sadd.s32 %s194, %s195
          %s197 = scalar_lea.vmem [#allocation2], %s196
          %v198 = vld [vmem:[%s197] ss:$0 sm:$0xff]
          %v199 = vand.u32 2147483647, %v198
          %v200 = vmax.f32 %v199, 0.0
          %v201 = vand.u32 2147483647, %v191
          %v202 = vmax.f32 %v200, %v201
          %v203 = vrcp.pop %v202
          %v204 = vmul.f32 %v199, %v203
          %v205 = vmul.f32 %v204, %v204
          %v206 = vrcp.pop %v202
          %v207 = vmul.f32 0.0, %v206
          %v208 = vmul.f32 %v207, %v207
          %v209 = vadd.f32 %v205, %v208
          %v210 = vrcp.pop %v202
          %v211 = vmul.f32 %v201, %v210
          %v212 = vmul.f32 %v211, %v211
          %v213 = vadd.f32 %v209, %v212
          %vm214 = vcmp.eq.f32.partialorder %v202, 0.0
          %v215 = vrsqrt.pop %v213
          %v216 = vmul.f32 %v213, %v215
          %vm217 = vcmp.eq.f32.partialorder %v213, inf
          %v218 = vsel %vm217, %v213, %v216
          %vm219 = vcmp.eq.f32.partialorder %v213, 0.0
          %v220 = vand.u32 %v213, 2147483648
          %v221 = vsel %vm219, %v220, %v218
          %v222 = vmul.f32 %v202, %v221
          %v223 = vsel %vm214, 0.0, %v222
          %vm224 = vcmp.lt.f32.partialorder %v198, 0.0
          %v225 = vxor.u32 %v223, 2147483648
          %v226 = vsel %vm224, %v223, %v225
          %v227 = vsub.f32 %v226, %v198
          %v228 = vrcp.pop %v226
          %v229 = vmul.f32 %v227, %v228
          %v230 = vsel %vm192, %v198, %v226
          %v231 = vsel %vm192, 0.0, %v229
          %v232 = vsub.f32 %v198, %v230
          %s233 = smov [#allocation2]
          %v234 = vlaneseq
          %v235 = vshrl.u32 %v234, 7
          %v236 = vmov %v235
          %v237 = vld [vmem:[%s233] sm:$0xff]
          %v239 = vstv %s164
          %vm240 = vcmp.gt.s32.totalorder %v236, %v239
          %vm241 = vcmp.lt.s32.totalorder %v236, 4
          %vm242 = vmand %vm240, %vm241
          %v243 = vsel %vm242, %v237, 0.0
          %v244 = vrcp.pop %v232
          %v245 = vmul.f32 %v243, %v244
          %v246 = vsel %vm192, 0.0, %v245
          %v247 = vstv %s164
          %v248 = vlaneseq
          %v249 = vand.u32 %v248, 127
          %vm250 = vcmp.eq.s32.totalorder %v249, %v247
          %v251 = vsel %vm250, %v246, 0.0
          %252 = vadd.xlane.f32.xlu0 %v251
          %v253 = vpop.xlane.xlu0 %252
          %254 = vst [vmem:[#allocation6] sm:$0xff] %v253
          %s255 = scalar_lea.vmem [#allocation6], %s164
          %256 = vst [vmem:[%s255] sm:$0x1] 1.0
          %v257 = vstv %s164
          %v258 = vlaneseq
          %v259 = vand.u32 %v258, 127
          %vm260 = vcmp.eq.s32.totalorder %v259, %v257
          %v261 = vsel %vm260, %v231, 0.0
          %262 = vadd.xlane.f32.xlu0 %v261
          %v263 = vpop.xlane.xlu0 %262
          %v264 = vstv %s164
          %v265 = vlaneseq
          %v266 = vand.u32 %v265, 127
          %vm267 = vcmp.eq.s32.totalorder %v266, %v264
          %v268 = vld [vmem:[%s159] ss:$0 sm:$0xff]
          %v269 = vsel %vm267, %v263, %v268
          %270 = vst [vmem:[%s159] sm:$0x1] %v269
          %s271 = smov [#allocation2]
          %s272 = smov [#allocation6]
          %v273 = vlaneseq
          %v274 = vshrl.u32 %v273, 7
          %v275 = vmov %v274
          %v277 = vld [vmem:[%s272] sm:$0xff]
          %v278 = vld [vmem:[%s271] sm:$0xff]
          %v279 = vmul.f32 %v277, %v278
          %vm280 = vcmp.lt.s32.totalorder %v275, 4
          %v281 = vsel %vm280, %v279, 0.0
          %v282 = vrot.slane %v281, 4
          %v283 = vadd.f32 %v281, %v282
          %v284 = vrot.slane %v283, 2
          %v285 = vadd.f32 %v283, %v284
          %v286 = vrot.slane %v285, 1
          %v287 = vadd.f32 %v285, %v286
          %s288 = smov %s271
          %s289 = smov %s272
          %v290 = vlaneseq
          %v291 = vshrl.u32 %v290, 7
          %v292 = vmov %v291
          %v293 = vmul.f32 %v287, %v263
          %v295 = vlaneseq
          %v296 = vand.u32 %v295, 127
          %v297 = vld [vmem:[%s289] sm:$0xff]
          %v298 = vmul.f32 %v297, %v293
          %v299 = vld [vmem:[%s288] sm:$0xff]
          %v300 = vstv %s164
          %vm301 = vcmp.gt.s32.totalorder %v296, %v300
          %v302 = vsub.f32 %v299, %v298
          %v303 = vsel %vm301, %v302, %v299
          %v304 = vstv %s164
          %v305 = vlaneseq
          %v306 = vand.u32 %v305, 127
          %vm307 = vcmp.eq.s32.totalorder %v306, %v304
          %v308 = vstv %s164
          %vm309 = vcmp.ge.s32.totalorder %v292, %v308
          %vm310 = vmand %vm307, %vm309
          %v311 = vsel %vm310, %v297, %v303
          %312 = vst [vmem:[%s288] sm:$0xff] %v311
          %s313 = scalar_lea.vmem %s288, %s164
          %v314 = vld [vmem:[%s313] ss:$0 sm:$0xff]
          %v315 = vstv %s164
          %v316 = vlaneseq
          %v317 = vand.u32 %v316, 127
          %vm318 = vcmp.eq.s32.totalorder %v317, %v315
          %v319 = vsel %vm318, %v230, %v314
          %320 = vst [vmem:[%s313] sm:$0x1] %v319
        $region55: #{custom-call.16} parent=49 // loop_footer
          %s168 = sadd.s32 1, %s164
        $region56: #{custom-call.16} parent=49 // loop_footer_branch
          %163 = sbr.rel target = $region52
        $region57: #{custom-call.16} parent=49 // loop_exit
          _
        %s322 = sshll.u32 1, 4
        %s323 = ssub.s32 %s322, 1
        %v325 = vld [vmem:[#allocation2] sm:%s323]
        %s326 = sshll.u32 1, 4
        %s327 = ssub.s32 %s326, 1
        %328 = vst [vmem:[%s140] sm:%s327] %v325
        %s330 = sshll.u32 1, 2
        %s331 = ssub.s32 %s330, 1
        %v333 = vld [vmem:[#allocation4] sm:%s331]
        %s334 = sshll.u32 1, 2
        %s335 = ssub.s32 %s334, 1
        %336 = vst [vmem:[%s146] sm:%s335] %v333
        %s337 = sand.u32 %s10, 1
        %s338 = sand.u32 %s10, 1
        %s339 = smul.addr %s338, 4
        %s340 = scalar_lea.vmem [#allocation3], %s339
        %s341 = sand.u32 %s49, 1
        %s342 = sand.u32 %s49, 1
        %s343 = smul.addr %s342, 2
        %s344 = scalar_lea.vmem [#allocation5], %s343
        %s345 = sadd.s32 %s17, %s16
        %s346 = sadd.s32 %s345, %s15
        %s347 = smul.addr %s346, 4
        %s348 = scalar_lea.vmem %s1, %s347
        // Predicated region
        $region58: #{custom-call.16} parent=49 // pred_check
          _
        $region59: #{custom-call.16} parent=49 // pred_check_branch
          %350 = sbr.rel (0) target = $region61
        $region60: #{custom-call.16} parent=49 // pred_region
          // Predicated region
          $region62: #{custom-call.16} parent=60 // pred_check
            _
          $region63: #{custom-call.16} parent=60 // pred_check_branch
            %352 = sbr.rel target = $region65
          $region64: #{custom-call.16} parent=60 // pred_region
            // Predicated region
            $region77: #{custom-call.16} parent=64 // pred_check
              _
            $region78: #{custom-call.16} parent=64 // pred_check_branch
              %368 = sbr.rel (0) target = $region80
            $region79: #{custom-call.16} parent=64 // pred_region
              %s370 = ssub.s32 16, 1
              loop: start=0, step=1, limit=1
              $region81: #{custom-call.16} parent=79 // loop_pre_header
                _
              $region82: #{custom-call.16} parent=79 // loop_header
                %s372 = sphi 0, %s376
                %p373 = scmp.ge.s32.totalorder %s372, 1
                %s377 = sphi %s340, %s340
                %s378 = sphi %s348, %s348
              $region83: #{custom-call.16} parent=79 // loop_header_branch
                %375 = sbr.rel (%p373) target = $region87
              $region84: #{custom-call.16} parent=79 // loop_body
                %v379 = vld [vmem:[%s377] sm:%s370]
                %380 = vst [vmem:[%s378] sm:%s370] %v379
              $region85: #{custom-call.16} parent=79 // loop_footer
                %s376 = sadd.s32 1, %s372
              $region86: #{custom-call.16} parent=79 // loop_footer_branch
                %371 = sbr.rel target = $region82
              $region87: #{custom-call.16} parent=79 // loop_exit
                _
            $region80: #{custom-call.16} parent=64 // pred_fallthru
              _
          $region65: #{custom-call.16} parent=60 // pred_fallthru
            _
          // Predicated region
          $region66: #{custom-call.16} parent=60 // pred_check
            _
          $region67: #{custom-call.16} parent=60 // pred_check_branch
            %354 = sbr.rel (0) target = $region69
          $region68: #{custom-call.16} parent=60 // pred_region
            %s356 = ssub.s32 16, 1
            loop: start=0, step=1, limit=1
            $region70: #{custom-call.16} parent=68 // loop_pre_header
              _
            $region71: #{custom-call.16} parent=68 // loop_header
              %s358 = sphi 0, %s362
              %p359 = scmp.ge.s32.totalorder %s358, 1
              %s363 = sphi %s340, %s340
              %s364 = sphi %s348, %s348
            $region72: #{custom-call.16} parent=68 // loop_header_branch
              %361 = sbr.rel (%p359) target = $region76
            $region73: #{custom-call.16} parent=68 // loop_body
              %v365 = vld [vmem:[%s363] sm:%s356]
              %366 = vst [vmem:[%s364] sm:%s356] %v365
            $region74: #{custom-call.16} parent=68 // loop_footer
              %s362 = sadd.s32 1, %s358
            $region75: #{custom-call.16} parent=68 // loop_footer_branch
              %357 = sbr.rel target = $region71
            $region76: #{custom-call.16} parent=68 // loop_exit
              _
          $region69: #{custom-call.16} parent=60 // pred_fallthru
            _
        $region61: #{custom-call.16} parent=49 // pred_fallthru
          _
        %381 = vnop
        // Predicated region
        $region88: #{custom-call.16} parent=49 // pred_check
          %p382 = pneg %p59
        $region89: #{custom-call.16} parent=49 // pred_check_branch
          %384 = sbr.rel (%p382) target = $region91
        $region90: #{custom-call.16} parent=49 // pred_region
          %p385 = scmp.lt.s32.totalorder %s15, 0
          %s386 = ssub.s32 0, %s15
          %s387 = scalar_select %p385, %s386, %s15
          %s388 = sshrl.u32 %s387, 3
          %s389 = ssub.s32 0, %s388
          %s390 = scalar_select %p385, %s389, %s388
          %s391 = smul.addr %s390, 2
          %s392 = scalar_lea.vmem %s2, %s391
          // Predicated region
          $region92: #{custom-call.16} parent=90 // pred_check
            _
          $region93: #{custom-call.16} parent=90 // pred_check_branch
            %394 = sbr.rel (0) target = $region95
          $region94: #{custom-call.16} parent=90 // pred_region
            // Predicated region
            $region96: #{custom-call.16} parent=94 // pred_check
              _
            $region97: #{custom-call.16} parent=94 // pred_check_branch
              %396 = sbr.rel target = $region99
            $region98: #{custom-call.16} parent=94 // pred_region
              // Predicated region
              $region111: #{custom-call.16} parent=98 // pred_check
                _
              $region112: #{custom-call.16} parent=98 // pred_check_branch
                %412 = sbr.rel (0) target = $region114
              $region113: #{custom-call.16} parent=98 // pred_region
                %s414 = ssub.s32 4, 1
                loop: start=0, step=1, limit=1
                $region115: #{custom-call.16} parent=113 // loop_pre_header
                  _
                $region116: #{custom-call.16} parent=113 // loop_header
                  %s416 = sphi 0, %s420
                  %p417 = scmp.ge.s32.totalorder %s416, 1
                  %s421 = sphi %s344, %s344
                  %s422 = sphi %s392, %s392
                $region117: #{custom-call.16} parent=113 // loop_header_branch
                  %419 = sbr.rel (%p417) target = $region121
                $region118: #{custom-call.16} parent=113 // loop_body
                  %v423 = vld [vmem:[%s421] sm:%s414]
                  %424 = vst [vmem:[%s422] sm:%s414] %v423
                $region119: #{custom-call.16} parent=113 // loop_footer
                  %s420 = sadd.s32 1, %s416
                $region120: #{custom-call.16} parent=113 // loop_footer_branch
                  %415 = sbr.rel target = $region116
                $region121: #{custom-call.16} parent=113 // loop_exit
                  _
              $region114: #{custom-call.16} parent=98 // pred_fallthru
                _
            $region99: #{custom-call.16} parent=94 // pred_fallthru
              _
            // Predicated region
            $region100: #{custom-call.16} parent=94 // pred_check
              _
            $region101: #{custom-call.16} parent=94 // pred_check_branch
              %398 = sbr.rel (0) target = $region103
            $region102: #{custom-call.16} parent=94 // pred_region
              %s400 = ssub.s32 4, 1
              loop: start=0, step=1, limit=1
              $region104: #{custom-call.16} parent=102 // loop_pre_header
                _
              $region105: #{custom-call.16} parent=102 // loop_header
                %s402 = sphi 0, %s406
                %p403 = scmp.ge.s32.totalorder %s402, 1
                %s407 = sphi %s344, %s344
                %s408 = sphi %s392, %s392
              $region106: #{custom-call.16} parent=102 // loop_header_branch
                %405 = sbr.rel (%p403) target = $region110
              $region107: #{custom-call.16} parent=102 // loop_body
                %v409 = vld [vmem:[%s407] sm:%s400]
                %410 = vst [vmem:[%s408] sm:%s400] %v409
              $region108: #{custom-call.16} parent=102 // loop_footer
                %s406 = sadd.s32 1, %s402
              $region109: #{custom-call.16} parent=102 // loop_footer_branch
                %401 = sbr.rel target = $region105
              $region110: #{custom-call.16} parent=102 // loop_exit
                _
            $region103: #{custom-call.16} parent=94 // pred_fallthru
              _
          $region95: #{custom-call.16} parent=90 // pred_fallthru
            _
          %425 = vnop
        $region91: #{custom-call.16} parent=49 // pred_fallthru
          _
      $region50: #{custom-call.16} parent=5 // pred_fallthru
        _
      %p426 = scmp.le.s32.totalorder 2, %s5
      // Predicated region
      $region122: #{custom-call.16} parent=5 // pred_check
        %p427 = pneg %p426
      $region123: #{custom-call.16} parent=5 // pred_check_branch
        %429 = sbr.rel (%p427) target = $region125
      $region124: #{custom-call.16} parent=5 // pred_region
        %s430 = ssub.s32 %s5, 2
        %s431 = sand.u32 %s11, 1
        %s432 = sand.u32 %s11, 1
        %s433 = smul.addr %s432, 4
        %s434 = scalar_lea.vmem [#allocation3], %s433
        // Predicated region
        $region126: #{custom-call.16} parent=124 // pred_check
          %p435 = pneg %p65
        $region127: #{custom-call.16} parent=124 // pred_check_branch
          %437 = sbr.rel (%p435) target = $region129
        $region128: #{custom-call.16} parent=124 // pred_region
          %s438 = sand.u32 %s50, 1
          %s439 = sand.u32 %s50, 1
          %s440 = smul.addr %s439, 2
          %s441 = scalar_lea.vmem [#allocation5], %s440
        $region129: #{custom-call.16} parent=124 // pred_fallthru
          _
      $region125: #{custom-call.16} parent=5 // pred_fallthru
        _
    $region6: #{custom-call.16} parent=1 // loop_footer
      %s9 = sadd.s32 1, %s5
    $region7: #{custom-call.16} parent=1 // loop_footer_branch
      %4 = sbr.rel target = $region3
    $region8: #{custom-call.16} parent=1 // loop_exit
      _

</llo_original>
